<compile_context>
chip_gen: v5e
topology: v5e:2x2
jax: 0.10.0
libtpu: 0.0.40
codegen_flags: <defaults>
</compile_context>

<pallas_src>
import functools

import jax
import jax.numpy as jnp
from jax.experimental import pallas as pl
from jax.experimental.pallas import tpu as pltpu

# Small, deterministic hyperparameters consistent with the module signature.
IN_CHANNELS = 3        # xyz per point
H_DIM = 32
C_DIM = 32
NUM_LAYERS = 4
NUM_POINTS = 128       # N, lane-aligned
BATCH = 4


# ----------------------------------------------------------------------------
# Pallas kernel: full forward pass, all batches folded into the lane axis.
# ----------------------------------------------------------------------------
def _pointnet_kernel(x_ref, w_in_ref, b_in_ref, wl_ref, bl_ref,
                     wg1_ref, wg2_ref, bg_ref, w_out_ref, b_out_ref,
                     w_fin_t_ref, b_fin_ref, glob_ref, pp_ref,
                     *, num_layers, bps, n):
    relu = lambda v: jnp.maximum(v, 0.0)          # act = LeakyReLU(0.0) == ReLU
    bf16 = jnp.bfloat16
    f32 = jnp.float32

    def mm(w_bf, v_bf):                            # MXU: bf16 in, f32 accumulate
        return jnp.dot(w_bf, v_bf, preferred_element_type=f32)

    # conv_in: lane-concat the per-batch (cin, n) slabs at 128-lane boundaries
    # (free relayout) and do one f32 matmul (K=3 is negligible MXU work).
    x = jnp.concatenate([x_ref[b] for b in range(bps)], axis=-1)      # (cin, bps*n)
    y = relu(jnp.dot(w_in_ref[...], x, preferred_element_type=f32)
             + b_in_ref[...])                                         # (h, bps*n)
    y_bf = y.astype(bf16)

    acc = None
    for i in range(num_layers):                                       # static unroll
        # layers[i]
        y = relu(mm(wl_ref[i], y_bf) + bl_ref[i])                     # (h, bps*n)
        y_bf = y.astype(bf16)

        # per-batch max over points, stacked as columns -> (h, bps)
        yg = jnp.concatenate(
            [jnp.max(y[:, b * n:(b + 1) * n], axis=-1, keepdims=True)
             for b in range(bps)], axis=-1)

        # global_layers[i]([y ; bcast(yg)]) without the (2h, N) concat:
        #   wg1 @ y + per-batch lane-broadcast of (wg2 @ yg + bg)
        corr = mm(wg2_ref[i], yg.astype(bf16)) + bg_ref[i]            # (h, bps)
        corr_full = jnp.concatenate(
            [jnp.broadcast_to(corr[:, b:b + 1], (corr.shape[0], n))
             for b in range(bps)], axis=-1)                           # (h, bps*n)
        y = relu(mm(wg1_ref[i], y_bf) + corr_full)                    # feats[i]
        y_bf = y.astype(bf16)

        # conv_out accumulated per layer chunk (no feats concat).
        contrib = mm(w_out_ref[i], y_bf)                              # (c, bps*n)
        acc = contrib if acc is None else acc + contrib

    xo = acc + b_out_ref[...]                                         # (c, bps*n)
    c = xo.shape[0]

    # global descriptor: build the full (bps, c) block in-register, one store.
    glob_cols = jnp.concatenate(
        [jnp.max(xo[:, b * n:(b + 1) * n], axis=-1, keepdims=True)
         for b in range(bps)], axis=-1)                               # (c, bps)
    glob_ref[...] = glob_cols.T                                       # (bps, c)

    # final_conv, batched over the bps batch elements: sublane-concat the
    # (c, n) slabs and do ONE (bps*c, n) @ (n, n) matmul against w_final^T.
    xo_stack = jnp.concatenate(
        [xo[:, b * n:(b + 1) * n] for b in range(bps)], axis=0)       # (bps*c, n)
    pp_all = (jnp.dot(xo_stack.astype(bf16), w_fin_t_ref[...],
                      preferred_element_type=f32) + b_fin_ref[...])   # (bps*c, n)
    for b in range(bps):                                              # aligned (c, n) stores
        pp_ref[b] = pp_all[b * c:(b + 1) * c, :]


# ----------------------------------------------------------------------------
# Wrapper — outputs already in final layout, no pre/post layout ops on x / pp.
# ----------------------------------------------------------------------------
def pointnet_encoder_pallas(x, params):
    B, cin, n = x.shape
    h, c, L = H_DIM, C_DIM, NUM_LAYERS
    bps = B                      # all batches in one grid step (see header note)
    steps = B // bps             # == 1
    bf16 = jnp.bfloat16

    w_in = params["w_in"]                                    # (h, cin)  f32
    b_in = params["b_in"].reshape(h, 1)
    wl = params["wl"].astype(bf16)                           # (L, h, h)
    bl = params["bl"].reshape(L, h, 1)
    wg1 = params["wg"][:, :, :h].astype(bf16)                # (L, h, h)
    wg2 = params["wg"][:, :, h:].astype(bf16)                # (L, h, h)
    bg = params["bg"].reshape(L, h, 1)
    w_out_r = (params["w_out"].reshape(c, L, h)
               .transpose(1, 0, 2).astype(bf16))             # (L, c, h)
    b_out = params["b_out"].reshape(c, 1)
    w_fin_t = params["w_final"].T.astype(bf16)               # (n, n) right-mult
    b_fin = params["b_final"].reshape(1, n)

    weights = (w_in, b_in, wl, bl, wg1, wg2, bg, w_out_r, b_out, w_fin_t, b_fin)

    def full_spec(arr):
        nd = arr.ndim
        return pl.BlockSpec(arr.shape, lambda g, _nd=nd: (0,) * _nd)

    in_specs = [pl.BlockSpec((bps, cin, n), lambda g: (g, 0, 0))] + [
        full_spec(a) for a in weights]
    out_specs = (
        pl.BlockSpec((bps, c), lambda g: (g, 0)),            # global, lane-dense
        pl.BlockSpec((bps, c, n), lambda g: (g, 0, 0)),      # per-point, final layout
    )
    out_shape = (
        jax.ShapeDtypeStruct((B, c), jnp.float32),
        jax.ShapeDtypeStruct((B, c, n), jnp.float32),
    )

    # Advisory cost hint: ~17 MFLOP, ~140 KB I/O — helps XLA overlap the call.
    flops = (2 * B * n * (cin * h + L * (2 * h * h + c * h) + c * n)
             + 2 * B * L * h * h)
    bytes_accessed = (int(x.size) * x.dtype.itemsize
                      + B * c * 4 + B * c * n * 4
                      + sum(int(a.size) * a.dtype.itemsize for a in weights))

    kernel = functools.partial(_pointnet_kernel, num_layers=L, bps=bps, n=n)
    glob, pp = pl.pallas_call(
        kernel,
        grid=(steps,),
        in_specs=in_specs,
        out_specs=out_specs,
        out_shape=out_shape,
        compiler_params=pltpu.CompilerParams(
            dimension_semantics=("arbitrary",)),
        cost_estimate=pl.CostEstimate(flops=int(flops), transcendentals=0,
                                      bytes_accessed=int(bytes_accessed)),
    )(x, *weights)

    return {"global": glob, "per_point": pp}


# ----------------------------------------------------------------------------
# Pure-JAX reference (f32 end-to-end, original concat formulation)
# ----------------------------------------------------------------------------
def pointnet_encoder_ref(x, params):
    def conv1x1(w, b, v):  # w (Co, Ci), b (Co,), v (B, Ci, N)
        return jnp.einsum("oi,bin->bon", w, v) + b[None, :, None]

    relu = lambda v: jnp.maximum(v, 0.0)
    y = relu(conv1x1(params["w_in"], params["b_in"], x))
    feats = []
    for i in range(NUM_LAYERS):
        y = relu(conv1x1(params["wl"][i], params["bl"][i], y))
        yg = jnp.max(y, axis=-1, keepdims=True)
        y = relu(conv1x1(params["wg"][i], params["bg"][i],
                         jnp.concatenate([y, jnp.broadcast_to(yg, y.shape)], 1)))
        feats.append(y)
    xcat = jnp.concatenate(feats, axis=1)
    xo = conv1x1(params["w_out"], params["b_out"], xcat)          # (B, c, N)
    x_global = jnp.max(xo, axis=-1)                               # (B, c)
    pp = jnp.einsum("mn,bcn->bcm", params["w_final"], xo) \
        + params["b_final"][None, None, :]
    return {"global": x_global, "per_point": pp}


# ----------------------------------------------------------------------------
# Deterministic parameter init (synthetic; PyTorch-style uniform bounds)
# ----------------------------------------------------------------------------
def init_params(key):
    ks = jax.random.split(key, 10)

    def u(k, shape, fan_in):
        lim = 1.0 / jnp.sqrt(jnp.float32(fan_in))
        return jax.random.uniform(k, shape, jnp.float32, -lim, lim)

    return {
        "w_in": u(ks[0], (H_DIM, IN_CHANNELS), IN_CHANNELS),
        "b_in": u(ks[1], (H_DIM,), IN_CHANNELS),
        "wl": u(ks[2], (NUM_LAYERS, H_DIM, H_DIM), H_DIM),
        "bl": u(ks[3], (NUM_LAYERS, H_DIM), H_DIM),
        "wg": u(ks[4], (NUM_LAYERS, H_DIM, 2 * H_DIM), 2 * H_DIM),
        "bg": u(ks[5], (NUM_LAYERS, H_DIM), 2 * H_DIM),
        "w_out": u(ks[6], (C_DIM, NUM_LAYERS * H_DIM), NUM_LAYERS * H_DIM),
        "b_out": u(ks[7], (C_DIM,), NUM_LAYERS * H_DIM),
        "w_final": u(ks[8], (NUM_POINTS, NUM_POINTS), NUM_POINTS),
        "b_final": u(ks[9], (NUM_POINTS,), NUM_POINTS),
    }


if __name__ == "__main__":
    root = jax.random.PRNGKey(0)
    k_params, k_x = jax.random.split(root)
    params = init_params(k_params)
    # input point cloud: (B, 3, N) — NCW, matching nn.Conv1d
    x = jax.random.normal(k_x, (BATCH, IN_CHANNELS, NUM_POINTS), jnp.float32)

    out = pointnet_encoder_pallas(x, params)
    jax.block_until_ready(out)

    ref = pointnet_encoder_ref(x, params)
    assert out["global"].shape == (BATCH, C_DIM)
    assert out["per_point"].shape == (BATCH, C_DIM, NUM_POINTS)
    # MXU inputs are bf16 (f32 accumulate) -> looser tolerance than pure f32.
    assert jnp.allclose(out["global"], ref["global"], rtol=3e-2, atol=3e-2)
    assert jnp.allclose(out["per_point"], ref["per_point"], rtol=3e-2, atol=3e-2)

    print("KERNEL_OK")
</pallas_src>

<mosaic_0001>
module attributes {stable_mosaic.version = 11 : i64} {
  func.func @_pointnet_kernel(%arg0: i32, %arg1: memref<4x3x128xf32, #tpu.memory_space<vmem>>, %arg2: memref<32x3xf32, #tpu.memory_space<vmem>>, %arg3: memref<32x1xf32, #tpu.memory_space<vmem>>, %arg4: memref<4x32x32xbf16, #tpu.memory_space<vmem>>, %arg5: memref<4x32x1xf32, #tpu.memory_space<vmem>>, %arg6: memref<4x32x32xbf16, #tpu.memory_space<vmem>>, %arg7: memref<4x32x32xbf16, #tpu.memory_space<vmem>>, %arg8: memref<4x32x1xf32, #tpu.memory_space<vmem>>, %arg9: memref<4x32x32xbf16, #tpu.memory_space<vmem>>, %arg10: memref<32x1xf32, #tpu.memory_space<vmem>>, %arg11: memref<128x128xbf16, #tpu.memory_space<vmem>>, %arg12: memref<1x128xf32, #tpu.memory_space<vmem>>, %arg13: memref<4x32xf32, #tpu.memory_space<vmem>>, %arg14: memref<4x32x128xf32, #tpu.memory_space<vmem>>) attributes {dimension_semantics = [#tpu.dimension_semantics<arbitrary>], iteration_bounds = array<i64: 1>, scalar_prefetch = 0 : i64, scratch_operands = 0 : i64, tpu.core_type = #tpu.core_type<tc>, window_params = [{transform_indices = @transform_0, window_bounds = array<i64: 4, 3, 128>}, {pipeline_mode = #tpu.pipeline_mode<synchronous>, transform_indices = @transform_1, window_bounds = array<i64: 32, 3>}, {pipeline_mode = #tpu.pipeline_mode<synchronous>, transform_indices = @transform_2, window_bounds = array<i64: 32, 1>}, {pipeline_mode = #tpu.pipeline_mode<synchronous>, transform_indices = @transform_3, window_bounds = array<i64: 4, 32, 32>}, {pipeline_mode = #tpu.pipeline_mode<synchronous>, transform_indices = @transform_4, window_bounds = array<i64: 4, 32, 1>}, {pipeline_mode = #tpu.pipeline_mode<synchronous>, transform_indices = @transform_5, window_bounds = array<i64: 4, 32, 32>}, {pipeline_mode = #tpu.pipeline_mode<synchronous>, transform_indices = @transform_6, window_bounds = array<i64: 4, 32, 32>}, {pipeline_mode = #tpu.pipeline_mode<synchronous>, transform_indices = @transform_7, window_bounds = array<i64: 4, 32, 1>}, {pipeline_mode = #tpu.pipeline_mode<synchronous>, transform_indices = @transform_8, window_bounds = array<i64: 4, 32, 32>}, {pipeline_mode = #tpu.pipeline_mode<synchronous>, transform_indices = @transform_9, window_bounds = array<i64: 32, 1>}, {pipeline_mode = #tpu.pipeline_mode<synchronous>, transform_indices = @transform_10, window_bounds = array<i64: 128, 128>}, {pipeline_mode = #tpu.pipeline_mode<synchronous>, transform_indices = @transform_11, window_bounds = array<i64: 1, 128>}, {transform_indices = @transform_12, window_bounds = array<i64: 4, 32>}, {transform_indices = @transform_13, window_bounds = array<i64: 4, 32, 128>}]} {
    %c0 = arith.constant 0 : index
    %c0_0 = arith.constant 0 : index
    %c0_1 = arith.constant 0 : index
    %0 = vector.load %arg1[%c0, %c0_0, %c0_1] : memref<4x3x128xf32, #tpu.memory_space<vmem>>, vector<1x3x128xf32>
    %1 = vector.shape_cast %0 : vector<1x3x128xf32> to vector<3x128xf32>
    %c1 = arith.constant 1 : index
    %c0_2 = arith.constant 0 : index
    %c0_3 = arith.constant 0 : index
    %2 = vector.load %arg1[%c1, %c0_2, %c0_3] : memref<4x3x128xf32, #tpu.memory_space<vmem>>, vector<1x3x128xf32>
    %3 = vector.shape_cast %2 : vector<1x3x128xf32> to vector<3x128xf32>
    %c2 = arith.constant 2 : index
    %c0_4 = arith.constant 0 : index
    %c0_5 = arith.constant 0 : index
    %4 = vector.load %arg1[%c2, %c0_4, %c0_5] : memref<4x3x128xf32, #tpu.memory_space<vmem>>, vector<1x3x128xf32>
    %5 = vector.shape_cast %4 : vector<1x3x128xf32> to vector<3x128xf32>
    %c3 = arith.constant 3 : index
    %c0_6 = arith.constant 0 : index
    %c0_7 = arith.constant 0 : index
    %6 = vector.load %arg1[%c3, %c0_6, %c0_7] : memref<4x3x128xf32, #tpu.memory_space<vmem>>, vector<1x3x128xf32>
    %7 = vector.shape_cast %6 : vector<1x3x128xf32> to vector<3x128xf32>
    %8 = tpu.concatenate %1, %3, %5, %7 in 1 : vector<3x128xf32>, vector<3x128xf32>, vector<3x128xf32>, vector<3x128xf32> -> vector<3x512xf32>
    %c0_8 = arith.constant 0 : index
    %c0_9 = arith.constant 0 : index
    %9 = vector.load %arg2[%c0_8, %c0_9] : memref<32x3xf32, #tpu.memory_space<vmem>>, vector<32x3xf32>
    %cst = arith.constant dense<0.000000e+00> : vector<32x512xf32>
    %10 = tpu.matmul %9, %8, %cst {dimension_numbers = #tpu.dot_dimension_numbers<[1], [0], [0], [1], [0, 0, 1, 1], [], []>} : vector<32x3xf32>, vector<3x512xf32>, vector<32x512xf32> -> vector<32x512xf32>
    %c0_10 = arith.constant 0 : index
    %c0_11 = arith.constant 0 : index
    %11 = vector.load %arg3[%c0_10, %c0_11] : memref<32x1xf32, #tpu.memory_space<vmem>>, vector<32x1xf32>
    %12 = vector.broadcast %11 : vector<32x1xf32> to vector<32x512xf32>
    %13 = arith.addf %10, %12 : vector<32x512xf32>
    %cst_12 = arith.constant 0.000000e+00 : f32
    %14 = vector.broadcast %cst_12 : f32 to vector<32x512xf32>
    %15 = arith.maximumf %13, %14 : vector<32x512xf32>
    %16 = arith.truncf %15 : vector<32x512xf32> to vector<32x512xbf16>
    %c0_13 = arith.constant 0 : index
    %c0_14 = arith.constant 0 : index
    %c0_15 = arith.constant 0 : index
    %17 = vector.load %arg4[%c0_13, %c0_14, %c0_15] : memref<4x32x32xbf16, #tpu.memory_space<vmem>>, vector<1x32x32xbf16>
    %18 = vector.shape_cast %17 : vector<1x32x32xbf16> to vector<32x32xbf16>
    %cst_16 = arith.constant dense<0.000000e+00> : vector<32x512xf32>
    %19 = tpu.matmul %18, %16, %cst_16 {dimension_numbers = #tpu.dot_dimension_numbers<[1], [0], [0], [1], [0, 0, 1, 1], [], []>} : vector<32x32xbf16>, vector<32x512xbf16>, vector<32x512xf32> -> vector<32x512xf32>
    %c0_17 = arith.constant 0 : index
    %c0_18 = arith.constant 0 : index
    %c0_19 = arith.constant 0 : index
    %20 = vector.load %arg5[%c0_17, %c0_18, %c0_19] : memref<4x32x1xf32, #tpu.memory_space<vmem>>, vector<1x32x1xf32>
    %21 = vector.shape_cast %20 : vector<1x32x1xf32> to vector<32x1xf32>
    %22 = vector.broadcast %21 : vector<32x1xf32> to vector<32x512xf32>
    %23 = arith.addf %19, %22 : vector<32x512xf32>
    %cst_20 = arith.constant 0.000000e+00 : f32
    %24 = vector.broadcast %cst_20 : f32 to vector<32x512xf32>
    %25 = arith.maximumf %23, %24 : vector<32x512xf32>
    %26 = arith.truncf %25 : vector<32x512xf32> to vector<32x512xbf16>
    %27 = vector.extract_strided_slice %25 {offsets = [0, 0], sizes = [32, 128], strides = [1, 1]} : vector<32x512xf32> to vector<32x128xf32>
    %cst_21 = arith.constant dense<0xFF800000> : vector<32xf32>
    %28 = vector.multi_reduction <maximumf>, %27, %cst_21 [1] : vector<32x128xf32> to vector<32xf32>
    %29 = vector.shape_cast %28 : vector<32xf32> to vector<32x1xf32>
    %30 = vector.extract_strided_slice %25 {offsets = [0, 128], sizes = [32, 128], strides = [1, 1]} : vector<32x512xf32> to vector<32x128xf32>
    %cst_22 = arith.constant dense<0xFF800000> : vector<32xf32>
    %31 = vector.multi_reduction <maximumf>, %30, %cst_22 [1] : vector<32x128xf32> to vector<32xf32>
    %32 = vector.shape_cast %31 : vector<32xf32> to vector<32x1xf32>
    %33 = vector.extract_strided_slice %25 {offsets = [0, 256], sizes = [32, 128], strides = [1, 1]} : vector<32x512xf32> to vector<32x128xf32>
    %cst_23 = arith.constant dense<0xFF800000> : vector<32xf32>
    %34 = vector.multi_reduction <maximumf>, %33, %cst_23 [1] : vector<32x128xf32> to vector<32xf32>
    %35 = vector.shape_cast %34 : vector<32xf32> to vector<32x1xf32>
    %36 = vector.extract_strided_slice %25 {offsets = [0, 384], sizes = [32, 128], strides = [1, 1]} : vector<32x512xf32> to vector<32x128xf32>
    %cst_24 = arith.constant dense<0xFF800000> : vector<32xf32>
    %37 = vector.multi_reduction <maximumf>, %36, %cst_24 [1] : vector<32x128xf32> to vector<32xf32>
    %38 = vector.shape_cast %37 : vector<32xf32> to vector<32x1xf32>
    %39 = tpu.concatenate %29, %32, %35, %38 in 1 : vector<32x1xf32>, vector<32x1xf32>, vector<32x1xf32>, vector<32x1xf32> -> vector<32x4xf32>
    %c0_25 = arith.constant 0 : index
    %c0_26 = arith.constant 0 : index
    %c0_27 = arith.constant 0 : index
    %40 = vector.load %arg7[%c0_25, %c0_26, %c0_27] : memref<4x32x32xbf16, #tpu.memory_space<vmem>>, vector<1x32x32xbf16>
    %41 = vector.shape_cast %40 : vector<1x32x32xbf16> to vector<32x32xbf16>
    %42 = arith.truncf %39 : vector<32x4xf32> to vector<32x4xbf16>
    %cst_28 = arith.constant dense<0.000000e+00> : vector<32x4xf32>
    %43 = tpu.matmul %41, %42, %cst_28 {dimension_numbers = #tpu.dot_dimension_numbers<[1], [0], [0], [1], [0, 0, 1, 1], [], []>} : vector<32x32xbf16>, vector<32x4xbf16>, vector<32x4xf32> -> vector<32x4xf32>
    %c0_29 = arith.constant 0 : index
    %c0_30 = arith.constant 0 : index
    %c0_31 = arith.constant 0 : index
    %44 = vector.load %arg8[%c0_29, %c0_30, %c0_31] : memref<4x32x1xf32, #tpu.memory_space<vmem>>, vector<1x32x1xf32>
    %45 = vector.shape_cast %44 : vector<1x32x1xf32> to vector<32x1xf32>
    %46 = vector.broadcast %45 : vector<32x1xf32> to vector<32x4xf32>
    %47 = arith.addf %43, %46 : vector<32x4xf32>
    %48 = vector.extract_strided_slice %47 {offsets = [0, 0], sizes = [32, 1], strides = [1, 1]} : vector<32x4xf32> to vector<32x1xf32>
    %49 = vector.shape_cast %48 : vector<32x1xf32> to vector<32x1xf32>
    %50 = vector.broadcast %49 : vector<32x1xf32> to vector<32x128xf32>
    %51 = vector.extract_strided_slice %47 {offsets = [0, 1], sizes = [32, 1], strides = [1, 1]} : vector<32x4xf32> to vector<32x1xf32>
    %52 = vector.shape_cast %51 : vector<32x1xf32> to vector<32x1xf32>
    %53 = vector.broadcast %52 : vector<32x1xf32> to vector<32x128xf32>
    %54 = vector.extract_strided_slice %47 {offsets = [0, 2], sizes = [32, 1], strides = [1, 1]} : vector<32x4xf32> to vector<32x1xf32>
    %55 = vector.shape_cast %54 : vector<32x1xf32> to vector<32x1xf32>
    %56 = vector.broadcast %55 : vector<32x1xf32> to vector<32x128xf32>
    %57 = vector.extract_strided_slice %47 {offsets = [0, 3], sizes = [32, 1], strides = [1, 1]} : vector<32x4xf32> to vector<32x1xf32>
    %58 = vector.shape_cast %57 : vector<32x1xf32> to vector<32x1xf32>
    %59 = vector.broadcast %58 : vector<32x1xf32> to vector<32x128xf32>
    %60 = tpu.concatenate %50, %53, %56, %59 in 1 : vector<32x128xf32>, vector<32x128xf32>, vector<32x128xf32>, vector<32x128xf32> -> vector<32x512xf32>
    %c0_32 = arith.constant 0 : index
    %c0_33 = arith.constant 0 : index
    %c0_34 = arith.constant 0 : index
    %61 = vector.load %arg6[%c0_32, %c0_33, %c0_34] : memref<4x32x32xbf16, #tpu.memory_space<vmem>>, vector<1x32x32xbf16>
    %62 = vector.shape_cast %61 : vector<1x32x32xbf16> to vector<32x32xbf16>
    %cst_35 = arith.constant dense<0.000000e+00> : vector<32x512xf32>
    %63 = tpu.matmul %62, %26, %cst_35 {dimension_numbers = #tpu.dot_dimension_numbers<[1], [0], [0], [1], [0, 0, 1, 1], [], []>} : vector<32x32xbf16>, vector<32x512xbf16>, vector<32x512xf32> -> vector<32x512xf32>
    %64 = arith.addf %63, %60 : vector<32x512xf32>
    %cst_36 = arith.constant 0.000000e+00 : f32
    %65 = vector.broadcast %cst_36 : f32 to vector<32x512xf32>
    %66 = arith.maximumf %64, %65 : vector<32x512xf32>
    %67 = arith.truncf %66 : vector<32x512xf32> to vector<32x512xbf16>
    %c0_37 = arith.constant 0 : index
    %c0_38 = arith.constant 0 : index
    %c0_39 = arith.constant 0 : index
    %68 = vector.load %arg9[%c0_37, %c0_38, %c0_39] : memref<4x32x32xbf16, #tpu.memory_space<vmem>>, vector<1x32x32xbf16>
    %69 = vector.shape_cast %68 : vector<1x32x32xbf16> to vector<32x32xbf16>
    %cst_40 = arith.constant dense<0.000000e+00> : vector<32x512xf32>
    %70 = tpu.matmul %69, %67, %cst_40 {dimension_numbers = #tpu.dot_dimension_numbers<[1], [0], [0], [1], [0, 0, 1, 1], [], []>} : vector<32x32xbf16>, vector<32x512xbf16>, vector<32x512xf32> -> vector<32x512xf32>
    %c1_41 = arith.constant 1 : index
    %c0_42 = arith.constant 0 : index
    %c0_43 = arith.constant 0 : index
    %71 = vector.load %arg4[%c1_41, %c0_42, %c0_43] : memref<4x32x32xbf16, #tpu.memory_space<vmem>>, vector<1x32x32xbf16>
    %72 = vector.shape_cast %71 : vector<1x32x32xbf16> to vector<32x32xbf16>
    %cst_44 = arith.constant dense<0.000000e+00> : vector<32x512xf32>
    %73 = tpu.matmul %72, %67, %cst_44 {dimension_numbers = #tpu.dot_dimension_numbers<[1], [0], [0], [1], [0, 0, 1, 1], [], []>} : vector<32x32xbf16>, vector<32x512xbf16>, vector<32x512xf32> -> vector<32x512xf32>
    %c1_45 = arith.constant 1 : index
    %c0_46 = arith.constant 0 : index
    %c0_47 = arith.constant 0 : index
    %74 = vector.load %arg5[%c1_45, %c0_46, %c0_47] : memref<4x32x1xf32, #tpu.memory_space<vmem>>, vector<1x32x1xf32>
    %75 = vector.shape_cast %74 : vector<1x32x1xf32> to vector<32x1xf32>
    %76 = vector.broadcast %75 : vector<32x1xf32> to vector<32x512xf32>
    %77 = arith.addf %73, %76 : vector<32x512xf32>
    %cst_48 = arith.constant 0.000000e+00 : f32
    %78 = vector.broadcast %cst_48 : f32 to vector<32x512xf32>
    %79 = arith.maximumf %77, %78 : vector<32x512xf32>
    %80 = arith.truncf %79 : vector<32x512xf32> to vector<32x512xbf16>
    %81 = vector.extract_strided_slice %79 {offsets = [0, 0], sizes = [32, 128], strides = [1, 1]} : vector<32x512xf32> to vector<32x128xf32>
    %cst_49 = arith.constant dense<0xFF800000> : vector<32xf32>
    %82 = vector.multi_reduction <maximumf>, %81, %cst_49 [1] : vector<32x128xf32> to vector<32xf32>
    %83 = vector.shape_cast %82 : vector<32xf32> to vector<32x1xf32>
    %84 = vector.extract_strided_slice %79 {offsets = [0, 128], sizes = [32, 128], strides = [1, 1]} : vector<32x512xf32> to vector<32x128xf32>
    %cst_50 = arith.constant dense<0xFF800000> : vector<32xf32>
    %85 = vector.multi_reduction <maximumf>, %84, %cst_50 [1] : vector<32x128xf32> to vector<32xf32>
    %86 = vector.shape_cast %85 : vector<32xf32> to vector<32x1xf32>
    %87 = vector.extract_strided_slice %79 {offsets = [0, 256], sizes = [32, 128], strides = [1, 1]} : vector<32x512xf32> to vector<32x128xf32>
    %cst_51 = arith.constant dense<0xFF800000> : vector<32xf32>
    %88 = vector.multi_reduction <maximumf>, %87, %cst_51 [1] : vector<32x128xf32> to vector<32xf32>
    %89 = vector.shape_cast %88 : vector<32xf32> to vector<32x1xf32>
    %90 = vector.extract_strided_slice %79 {offsets = [0, 384], sizes = [32, 128], strides = [1, 1]} : vector<32x512xf32> to vector<32x128xf32>
    %cst_52 = arith.constant dense<0xFF800000> : vector<32xf32>
    %91 = vector.multi_reduction <maximumf>, %90, %cst_52 [1] : vector<32x128xf32> to vector<32xf32>
    %92 = vector.shape_cast %91 : vector<32xf32> to vector<32x1xf32>
    %93 = tpu.concatenate %83, %86, %89, %92 in 1 : vector<32x1xf32>, vector<32x1xf32>, vector<32x1xf32>, vector<32x1xf32> -> vector<32x4xf32>
    %c1_53 = arith.constant 1 : index
    %c0_54 = arith.constant 0 : index
    %c0_55 = arith.constant 0 : index
    %94 = vector.load %arg7[%c1_53, %c0_54, %c0_55] : memref<4x32x32xbf16, #tpu.memory_space<vmem>>, vector<1x32x32xbf16>
    %95 = vector.shape_cast %94 : vector<1x32x32xbf16> to vector<32x32xbf16>
    %96 = arith.truncf %93 : vector<32x4xf32> to vector<32x4xbf16>
    %cst_56 = arith.constant dense<0.000000e+00> : vector<32x4xf32>
    %97 = tpu.matmul %95, %96, %cst_56 {dimension_numbers = #tpu.dot_dimension_numbers<[1], [0], [0], [1], [0, 0, 1, 1], [], []>} : vector<32x32xbf16>, vector<32x4xbf16>, vector<32x4xf32> -> vector<32x4xf32>
    %c1_57 = arith.constant 1 : index
    %c0_58 = arith.constant 0 : index
    %c0_59 = arith.constant 0 : index
    %98 = vector.load %arg8[%c1_57, %c0_58, %c0_59] : memref<4x32x1xf32, #tpu.memory_space<vmem>>, vector<1x32x1xf32>
    %99 = vector.shape_cast %98 : vector<1x32x1xf32> to vector<32x1xf32>
    %100 = vector.broadcast %99 : vector<32x1xf32> to vector<32x4xf32>
    %101 = arith.addf %97, %100 : vector<32x4xf32>
    %102 = vector.extract_strided_slice %101 {offsets = [0, 0], sizes = [32, 1], strides = [1, 1]} : vector<32x4xf32> to vector<32x1xf32>
    %103 = vector.shape_cast %102 : vector<32x1xf32> to vector<32x1xf32>
    %104 = vector.broadcast %103 : vector<32x1xf32> to vector<32x128xf32>
    %105 = vector.extract_strided_slice %101 {offsets = [0, 1], sizes = [32, 1], strides = [1, 1]} : vector<32x4xf32> to vector<32x1xf32>
    %106 = vector.shape_cast %105 : vector<32x1xf32> to vector<32x1xf32>
    %107 = vector.broadcast %106 : vector<32x1xf32> to vector<32x128xf32>
    %108 = vector.extract_strided_slice %101 {offsets = [0, 2], sizes = [32, 1], strides = [1, 1]} : vector<32x4xf32> to vector<32x1xf32>
    %109 = vector.shape_cast %108 : vector<32x1xf32> to vector<32x1xf32>
    %110 = vector.broadcast %109 : vector<32x1xf32> to vector<32x128xf32>
    %111 = vector.extract_strided_slice %101 {offsets = [0, 3], sizes = [32, 1], strides = [1, 1]} : vector<32x4xf32> to vector<32x1xf32>
    %112 = vector.shape_cast %111 : vector<32x1xf32> to vector<32x1xf32>
    %113 = vector.broadcast %112 : vector<32x1xf32> to vector<32x128xf32>
    %114 = tpu.concatenate %104, %107, %110, %113 in 1 : vector<32x128xf32>, vector<32x128xf32>, vector<32x128xf32>, vector<32x128xf32> -> vector<32x512xf32>
    %c1_60 = arith.constant 1 : index
    %c0_61 = arith.constant 0 : index
    %c0_62 = arith.constant 0 : index
    %115 = vector.load %arg6[%c1_60, %c0_61, %c0_62] : memref<4x32x32xbf16, #tpu.memory_space<vmem>>, vector<1x32x32xbf16>
    %116 = vector.shape_cast %115 : vector<1x32x32xbf16> to vector<32x32xbf16>
    %cst_63 = arith.constant dense<0.000000e+00> : vector<32x512xf32>
    %117 = tpu.matmul %116, %80, %cst_63 {dimension_numbers = #tpu.dot_dimension_numbers<[1], [0], [0], [1], [0, 0, 1, 1], [], []>} : vector<32x32xbf16>, vector<32x512xbf16>, vector<32x512xf32> -> vector<32x512xf32>
    %118 = arith.addf %117, %114 : vector<32x512xf32>
    %cst_64 = arith.constant 0.000000e+00 : f32
    %119 = vector.broadcast %cst_64 : f32 to vector<32x512xf32>
    %120 = arith.maximumf %118, %119 : vector<32x512xf32>
    %121 = arith.truncf %120 : vector<32x512xf32> to vector<32x512xbf16>
    %c1_65 = arith.constant 1 : index
    %c0_66 = arith.constant 0 : index
    %c0_67 = arith.constant 0 : index
    %122 = vector.load %arg9[%c1_65, %c0_66, %c0_67] : memref<4x32x32xbf16, #tpu.memory_space<vmem>>, vector<1x32x32xbf16>
    %123 = vector.shape_cast %122 : vector<1x32x32xbf16> to vector<32x32xbf16>
    %cst_68 = arith.constant dense<0.000000e+00> : vector<32x512xf32>
    %124 = tpu.matmul %123, %121, %cst_68 {dimension_numbers = #tpu.dot_dimension_numbers<[1], [0], [0], [1], [0, 0, 1, 1], [], []>} : vector<32x32xbf16>, vector<32x512xbf16>, vector<32x512xf32> -> vector<32x512xf32>
    %125 = arith.addf %70, %124 : vector<32x512xf32>
    %c2_69 = arith.constant 2 : index
    %c0_70 = arith.constant 0 : index
    %c0_71 = arith.constant 0 : index
    %126 = vector.load %arg4[%c2_69, %c0_70, %c0_71] : memref<4x32x32xbf16, #tpu.memory_space<vmem>>, vector<1x32x32xbf16>
    %127 = vector.shape_cast %126 : vector<1x32x32xbf16> to vector<32x32xbf16>
    %cst_72 = arith.constant dense<0.000000e+00> : vector<32x512xf32>
    %128 = tpu.matmul %127, %121, %cst_72 {dimension_numbers = #tpu.dot_dimension_numbers<[1], [0], [0], [1], [0, 0, 1, 1], [], []>} : vector<32x32xbf16>, vector<32x512xbf16>, vector<32x512xf32> -> vector<32x512xf32>
    %c2_73 = arith.constant 2 : index
    %c0_74 = arith.constant 0 : index
    %c0_75 = arith.constant 0 : index
    %129 = vector.load %arg5[%c2_73, %c0_74, %c0_75] : memref<4x32x1xf32, #tpu.memory_space<vmem>>, vector<1x32x1xf32>
    %130 = vector.shape_cast %129 : vector<1x32x1xf32> to vector<32x1xf32>
    %131 = vector.broadcast %130 : vector<32x1xf32> to vector<32x512xf32>
    %132 = arith.addf %128, %131 : vector<32x512xf32>
    %cst_76 = arith.constant 0.000000e+00 : f32
    %133 = vector.broadcast %cst_76 : f32 to vector<32x512xf32>
    %134 = arith.maximumf %132, %133 : vector<32x512xf32>
    %135 = arith.truncf %134 : vector<32x512xf32> to vector<32x512xbf16>
    %136 = vector.extract_strided_slice %134 {offsets = [0, 0], sizes = [32, 128], strides = [1, 1]} : vector<32x512xf32> to vector<32x128xf32>
    %cst_77 = arith.constant dense<0xFF800000> : vector<32xf32>
    %137 = vector.multi_reduction <maximumf>, %136, %cst_77 [1] : vector<32x128xf32> to vector<32xf32>
    %138 = vector.shape_cast %137 : vector<32xf32> to vector<32x1xf32>
    %139 = vector.extract_strided_slice %134 {offsets = [0, 128], sizes = [32, 128], strides = [1, 1]} : vector<32x512xf32> to vector<32x128xf32>
    %cst_78 = arith.constant dense<0xFF800000> : vector<32xf32>
    %140 = vector.multi_reduction <maximumf>, %139, %cst_78 [1] : vector<32x128xf32> to vector<32xf32>
    %141 = vector.shape_cast %140 : vector<32xf32> to vector<32x1xf32>
    %142 = vector.extract_strided_slice %134 {offsets = [0, 256], sizes = [32, 128], strides = [1, 1]} : vector<32x512xf32> to vector<32x128xf32>
    %cst_79 = arith.constant dense<0xFF800000> : vector<32xf32>
    %143 = vector.multi_reduction <maximumf>, %142, %cst_79 [1] : vector<32x128xf32> to vector<32xf32>
    %144 = vector.shape_cast %143 : vector<32xf32> to vector<32x1xf32>
    %145 = vector.extract_strided_slice %134 {offsets = [0, 384], sizes = [32, 128], strides = [1, 1]} : vector<32x512xf32> to vector<32x128xf32>
    %cst_80 = arith.constant dense<0xFF800000> : vector<32xf32>
    %146 = vector.multi_reduction <maximumf>, %145, %cst_80 [1] : vector<32x128xf32> to vector<32xf32>
    %147 = vector.shape_cast %146 : vector<32xf32> to vector<32x1xf32>
    %148 = tpu.concatenate %138, %141, %144, %147 in 1 : vector<32x1xf32>, vector<32x1xf32>, vector<32x1xf32>, vector<32x1xf32> -> vector<32x4xf32>
    %c2_81 = arith.constant 2 : index
    %c0_82 = arith.constant 0 : index
    %c0_83 = arith.constant 0 : index
    %149 = vector.load %arg7[%c2_81, %c0_82, %c0_83] : memref<4x32x32xbf16, #tpu.memory_space<vmem>>, vector<1x32x32xbf16>
    %150 = vector.shape_cast %149 : vector<1x32x32xbf16> to vector<32x32xbf16>
    %151 = arith.truncf %148 : vector<32x4xf32> to vector<32x4xbf16>
    %cst_84 = arith.constant dense<0.000000e+00> : vector<32x4xf32>
    %152 = tpu.matmul %150, %151, %cst_84 {dimension_numbers = #tpu.dot_dimension_numbers<[1], [0], [0], [1], [0, 0, 1, 1], [], []>} : vector<32x32xbf16>, vector<32x4xbf16>, vector<32x4xf32> -> vector<32x4xf32>
    %c2_85 = arith.constant 2 : index
    %c0_86 = arith.constant 0 : index
    %c0_87 = arith.constant 0 : index
    %153 = vector.load %arg8[%c2_85, %c0_86, %c0_87] : memref<4x32x1xf32, #tpu.memory_space<vmem>>, vector<1x32x1xf32>
    %154 = vector.shape_cast %153 : vector<1x32x1xf32> to vector<32x1xf32>
    %155 = vector.broadcast %154 : vector<32x1xf32> to vector<32x4xf32>
    %156 = arith.addf %152, %155 : vector<32x4xf32>
    %157 = vector.extract_strided_slice %156 {offsets = [0, 0], sizes = [32, 1], strides = [1, 1]} : vector<32x4xf32> to vector<32x1xf32>
    %158 = vector.shape_cast %157 : vector<32x1xf32> to vector<32x1xf32>
    %159 = vector.broadcast %158 : vector<32x1xf32> to vector<32x128xf32>
    %160 = vector.extract_strided_slice %156 {offsets = [0, 1], sizes = [32, 1], strides = [1, 1]} : vector<32x4xf32> to vector<32x1xf32>
    %161 = vector.shape_cast %160 : vector<32x1xf32> to vector<32x1xf32>
    %162 = vector.broadcast %161 : vector<32x1xf32> to vector<32x128xf32>
    %163 = vector.extract_strided_slice %156 {offsets = [0, 2], sizes = [32, 1], strides = [1, 1]} : vector<32x4xf32> to vector<32x1xf32>
    %164 = vector.shape_cast %163 : vector<32x1xf32> to vector<32x1xf32>
    %165 = vector.broadcast %164 : vector<32x1xf32> to vector<32x128xf32>
    %166 = vector.extract_strided_slice %156 {offsets = [0, 3], sizes = [32, 1], strides = [1, 1]} : vector<32x4xf32> to vector<32x1xf32>
    %167 = vector.shape_cast %166 : vector<32x1xf32> to vector<32x1xf32>
    %168 = vector.broadcast %167 : vector<32x1xf32> to vector<32x128xf32>
    %169 = tpu.concatenate %159, %162, %165, %168 in 1 : vector<32x128xf32>, vector<32x128xf32>, vector<32x128xf32>, vector<32x128xf32> -> vector<32x512xf32>
    %c2_88 = arith.constant 2 : index
    %c0_89 = arith.constant 0 : index
    %c0_90 = arith.constant 0 : index
    %170 = vector.load %arg6[%c2_88, %c0_89, %c0_90] : memref<4x32x32xbf16, #tpu.memory_space<vmem>>, vector<1x32x32xbf16>
    %171 = vector.shape_cast %170 : vector<1x32x32xbf16> to vector<32x32xbf16>
    %cst_91 = arith.constant dense<0.000000e+00> : vector<32x512xf32>
    %172 = tpu.matmul %171, %135, %cst_91 {dimension_numbers = #tpu.dot_dimension_numbers<[1], [0], [0], [1], [0, 0, 1, 1], [], []>} : vector<32x32xbf16>, vector<32x512xbf16>, vector<32x512xf32> -> vector<32x512xf32>
    %173 = arith.addf %172, %169 : vector<32x512xf32>
    %cst_92 = arith.constant 0.000000e+00 : f32
    %174 = vector.broadcast %cst_92 : f32 to vector<32x512xf32>
    %175 = arith.maximumf %173, %174 : vector<32x512xf32>
    %176 = arith.truncf %175 : vector<32x512xf32> to vector<32x512xbf16>
    %c2_93 = arith.constant 2 : index
    %c0_94 = arith.constant 0 : index
    %c0_95 = arith.constant 0 : index
    %177 = vector.load %arg9[%c2_93, %c0_94, %c0_95] : memref<4x32x32xbf16, #tpu.memory_space<vmem>>, vector<1x32x32xbf16>
    %178 = vector.shape_cast %177 : vector<1x32x32xbf16> to vector<32x32xbf16>
    %cst_96 = arith.constant dense<0.000000e+00> : vector<32x512xf32>
    %179 = tpu.matmul %178, %176, %cst_96 {dimension_numbers = #tpu.dot_dimension_numbers<[1], [0], [0], [1], [0, 0, 1, 1], [], []>} : vector<32x32xbf16>, vector<32x512xbf16>, vector<32x512xf32> -> vector<32x512xf32>
    %180 = arith.addf %125, %179 : vector<32x512xf32>
    %c3_97 = arith.constant 3 : index
    %c0_98 = arith.constant 0 : index
    %c0_99 = arith.constant 0 : index
    %181 = vector.load %arg4[%c3_97, %c0_98, %c0_99] : memref<4x32x32xbf16, #tpu.memory_space<vmem>>, vector<1x32x32xbf16>
    %182 = vector.shape_cast %181 : vector<1x32x32xbf16> to vector<32x32xbf16>
    %cst_100 = arith.constant dense<0.000000e+00> : vector<32x512xf32>
    %183 = tpu.matmul %182, %176, %cst_100 {dimension_numbers = #tpu.dot_dimension_numbers<[1], [0], [0], [1], [0, 0, 1, 1], [], []>} : vector<32x32xbf16>, vector<32x512xbf16>, vector<32x512xf32> -> vector<32x512xf32>
    %c3_101 = arith.constant 3 : index
    %c0_102 = arith.constant 0 : index
    %c0_103 = arith.constant 0 : index
    %184 = vector.load %arg5[%c3_101, %c0_102, %c0_103] : memref<4x32x1xf32, #tpu.memory_space<vmem>>, vector<1x32x1xf32>
    %185 = vector.shape_cast %184 : vector<1x32x1xf32> to vector<32x1xf32>
    %186 = vector.broadcast %185 : vector<32x1xf32> to vector<32x512xf32>
    %187 = arith.addf %183, %186 : vector<32x512xf32>
    %cst_104 = arith.constant 0.000000e+00 : f32
    %188 = vector.broadcast %cst_104 : f32 to vector<32x512xf32>
    %189 = arith.maximumf %187, %188 : vector<32x512xf32>
    %190 = arith.truncf %189 : vector<32x512xf32> to vector<32x512xbf16>
    %191 = vector.extract_strided_slice %189 {offsets = [0, 0], sizes = [32, 128], strides = [1, 1]} : vector<32x512xf32> to vector<32x128xf32>
    %cst_105 = arith.constant dense<0xFF800000> : vector<32xf32>
    %192 = vector.multi_reduction <maximumf>, %191, %cst_105 [1] : vector<32x128xf32> to vector<32xf32>
    %193 = vector.shape_cast %192 : vector<32xf32> to vector<32x1xf32>
    %194 = vector.extract_strided_slice %189 {offsets = [0, 128], sizes = [32, 128], strides = [1, 1]} : vector<32x512xf32> to vector<32x128xf32>
    %cst_106 = arith.constant dense<0xFF800000> : vector<32xf32>
    %195 = vector.multi_reduction <maximumf>, %194, %cst_106 [1] : vector<32x128xf32> to vector<32xf32>
    %196 = vector.shape_cast %195 : vector<32xf32> to vector<32x1xf32>
    %197 = vector.extract_strided_slice %189 {offsets = [0, 256], sizes = [32, 128], strides = [1, 1]} : vector<32x512xf32> to vector<32x128xf32>
    %cst_107 = arith.constant dense<0xFF800000> : vector<32xf32>
    %198 = vector.multi_reduction <maximumf>, %197, %cst_107 [1] : vector<32x128xf32> to vector<32xf32>
    %199 = vector.shape_cast %198 : vector<32xf32> to vector<32x1xf32>
    %200 = vector.extract_strided_slice %189 {offsets = [0, 384], sizes = [32, 128], strides = [1, 1]} : vector<32x512xf32> to vector<32x128xf32>
    %cst_108 = arith.constant dense<0xFF800000> : vector<32xf32>
    %201 = vector.multi_reduction <maximumf>, %200, %cst_108 [1] : vector<32x128xf32> to vector<32xf32>
    %202 = vector.shape_cast %201 : vector<32xf32> to vector<32x1xf32>
    %203 = tpu.concatenate %193, %196, %199, %202 in 1 : vector<32x1xf32>, vector<32x1xf32>, vector<32x1xf32>, vector<32x1xf32> -> vector<32x4xf32>
    %c3_109 = arith.constant 3 : index
    %c0_110 = arith.constant 0 : index
    %c0_111 = arith.constant 0 : index
    %204 = vector.load %arg7[%c3_109, %c0_110, %c0_111] : memref<4x32x32xbf16, #tpu.memory_space<vmem>>, vector<1x32x32xbf16>
    %205 = vector.shape_cast %204 : vector<1x32x32xbf16> to vector<32x32xbf16>
    %206 = arith.truncf %203 : vector<32x4xf32> to vector<32x4xbf16>
    %cst_112 = arith.constant dense<0.000000e+00> : vector<32x4xf32>
    %207 = tpu.matmul %205, %206, %cst_112 {dimension_numbers = #tpu.dot_dimension_numbers<[1], [0], [0], [1], [0, 0, 1, 1], [], []>} : vector<32x32xbf16>, vector<32x4xbf16>, vector<32x4xf32> -> vector<32x4xf32>
    %c3_113 = arith.constant 3 : index
    %c0_114 = arith.constant 0 : index
    %c0_115 = arith.constant 0 : index
    %208 = vector.load %arg8[%c3_113, %c0_114, %c0_115] : memref<4x32x1xf32, #tpu.memory_space<vmem>>, vector<1x32x1xf32>
    %209 = vector.shape_cast %208 : vector<1x32x1xf32> to vector<32x1xf32>
    %210 = vector.broadcast %209 : vector<32x1xf32> to vector<32x4xf32>
    %211 = arith.addf %207, %210 : vector<32x4xf32>
    %212 = vector.extract_strided_slice %211 {offsets = [0, 0], sizes = [32, 1], strides = [1, 1]} : vector<32x4xf32> to vector<32x1xf32>
    %213 = vector.shape_cast %212 : vector<32x1xf32> to vector<32x1xf32>
    %214 = vector.broadcast %213 : vector<32x1xf32> to vector<32x128xf32>
    %215 = vector.extract_strided_slice %211 {offsets = [0, 1], sizes = [32, 1], strides = [1, 1]} : vector<32x4xf32> to vector<32x1xf32>
    %216 = vector.shape_cast %215 : vector<32x1xf32> to vector<32x1xf32>
    %217 = vector.broadcast %216 : vector<32x1xf32> to vector<32x128xf32>
    %218 = vector.extract_strided_slice %211 {offsets = [0, 2], sizes = [32, 1], strides = [1, 1]} : vector<32x4xf32> to vector<32x1xf32>
    %219 = vector.shape_cast %218 : vector<32x1xf32> to vector<32x1xf32>
    %220 = vector.broadcast %219 : vector<32x1xf32> to vector<32x128xf32>
    %221 = vector.extract_strided_slice %211 {offsets = [0, 3], sizes = [32, 1], strides = [1, 1]} : vector<32x4xf32> to vector<32x1xf32>
    %222 = vector.shape_cast %221 : vector<32x1xf32> to vector<32x1xf32>
    %223 = vector.broadcast %222 : vector<32x1xf32> to vector<32x128xf32>
    %224 = tpu.concatenate %214, %217, %220, %223 in 1 : vector<32x128xf32>, vector<32x128xf32>, vector<32x128xf32>, vector<32x128xf32> -> vector<32x512xf32>
    %c3_116 = arith.constant 3 : index
    %c0_117 = arith.constant 0 : index
    %c0_118 = arith.constant 0 : index
    %225 = vector.load %arg6[%c3_116, %c0_117, %c0_118] : memref<4x32x32xbf16, #tpu.memory_space<vmem>>, vector<1x32x32xbf16>
    %226 = vector.shape_cast %225 : vector<1x32x32xbf16> to vector<32x32xbf16>
    %cst_119 = arith.constant dense<0.000000e+00> : vector<32x512xf32>
    %227 = tpu.matmul %226, %190, %cst_119 {dimension_numbers = #tpu.dot_dimension_numbers<[1], [0], [0], [1], [0, 0, 1, 1], [], []>} : vector<32x32xbf16>, vector<32x512xbf16>, vector<32x512xf32> -> vector<32x512xf32>
    %228 = arith.addf %227, %224 : vector<32x512xf32>
    %cst_120 = arith.constant 0.000000e+00 : f32
    %229 = vector.broadcast %cst_120 : f32 to vector<32x512xf32>
    %230 = arith.maximumf %228, %229 : vector<32x512xf32>
    %231 = arith.truncf %230 : vector<32x512xf32> to vector<32x512xbf16>
    %c3_121 = arith.constant 3 : index
    %c0_122 = arith.constant 0 : index
    %c0_123 = arith.constant 0 : index
    %232 = vector.load %arg9[%c3_121, %c0_122, %c0_123] : memref<4x32x32xbf16, #tpu.memory_space<vmem>>, vector<1x32x32xbf16>
    %233 = vector.shape_cast %232 : vector<1x32x32xbf16> to vector<32x32xbf16>
    %cst_124 = arith.constant dense<0.000000e+00> : vector<32x512xf32>
    %234 = tpu.matmul %233, %231, %cst_124 {dimension_numbers = #tpu.dot_dimension_numbers<[1], [0], [0], [1], [0, 0, 1, 1], [], []>} : vector<32x32xbf16>, vector<32x512xbf16>, vector<32x512xf32> -> vector<32x512xf32>
    %235 = arith.addf %180, %234 : vector<32x512xf32>
    %c0_125 = arith.constant 0 : index
    %c0_126 = arith.constant 0 : index
    %236 = vector.load %arg10[%c0_125, %c0_126] : memref<32x1xf32, #tpu.memory_space<vmem>>, vector<32x1xf32>
    %237 = vector.broadcast %236 : vector<32x1xf32> to vector<32x512xf32>
    %238 = arith.addf %235, %237 : vector<32x512xf32>
    %239 = vector.extract_strided_slice %238 {offsets = [0, 0], sizes = [32, 128], strides = [1, 1]} : vector<32x512xf32> to vector<32x128xf32>
    %cst_127 = arith.constant dense<0xFF800000> : vector<32xf32>
    %240 = vector.multi_reduction <maximumf>, %239, %cst_127 [1] : vector<32x128xf32> to vector<32xf32>
    %241 = vector.shape_cast %240 : vector<32xf32> to vector<32x1xf32>
    %242 = vector.extract_strided_slice %238 {offsets = [0, 128], sizes = [32, 128], strides = [1, 1]} : vector<32x512xf32> to vector<32x128xf32>
    %cst_128 = arith.constant dense<0xFF800000> : vector<32xf32>
    %243 = vector.multi_reduction <maximumf>, %242, %cst_128 [1] : vector<32x128xf32> to vector<32xf32>
    %244 = vector.shape_cast %243 : vector<32xf32> to vector<32x1xf32>
    %245 = vector.extract_strided_slice %238 {offsets = [0, 256], sizes = [32, 128], strides = [1, 1]} : vector<32x512xf32> to vector<32x128xf32>
    %cst_129 = arith.constant dense<0xFF800000> : vector<32xf32>
    %246 = vector.multi_reduction <maximumf>, %245, %cst_129 [1] : vector<32x128xf32> to vector<32xf32>
    %247 = vector.shape_cast %246 : vector<32xf32> to vector<32x1xf32>
    %248 = vector.extract_strided_slice %238 {offsets = [0, 384], sizes = [32, 128], strides = [1, 1]} : vector<32x512xf32> to vector<32x128xf32>
    %cst_130 = arith.constant dense<0xFF800000> : vector<32xf32>
    %249 = vector.multi_reduction <maximumf>, %248, %cst_130 [1] : vector<32x128xf32> to vector<32xf32>
    %250 = vector.shape_cast %249 : vector<32xf32> to vector<32x1xf32>
    %251 = tpu.concatenate %241, %244, %247, %250 in 1 : vector<32x1xf32>, vector<32x1xf32>, vector<32x1xf32>, vector<32x1xf32> -> vector<32x4xf32>
    %252 = tpu.transpose %251, [1, 0] : vector<32x4xf32> -> vector<4x32xf32>
    %c0_131 = arith.constant 0 : index
    %c0_132 = arith.constant 0 : index
    %253 = vector.load %arg13[%c0_131, %c0_132] : memref<4x32xf32, #tpu.memory_space<vmem>>, vector<4x32xf32>
    tpu.vector_store %arg13[%c0_131, %c0_132], %252 {strides = array<i32>} : memref<4x32xf32, #tpu.memory_space<vmem>>, vector<4x32xf32>,
    %254 = vector.extract_strided_slice %238 {offsets = [0, 0], sizes = [32, 128], strides = [1, 1]} : vector<32x512xf32> to vector<32x128xf32>
    %255 = vector.extract_strided_slice %238 {offsets = [0, 128], sizes = [32, 128], strides = [1, 1]} : vector<32x512xf32> to vector<32x128xf32>
    %256 = vector.extract_strided_slice %238 {offsets = [0, 256], sizes = [32, 128], strides = [1, 1]} : vector<32x512xf32> to vector<32x128xf32>
    %257 = vector.extract_strided_slice %238 {offsets = [0, 384], sizes = [32, 128], strides = [1, 1]} : vector<32x512xf32> to vector<32x128xf32>
    %258 = tpu.concatenate %254, %255, %256, %257 in 0 : vector<32x128xf32>, vector<32x128xf32>, vector<32x128xf32>, vector<32x128xf32> -> vector<128x128xf32>
    %259 = arith.truncf %258 : vector<128x128xf32> to vector<128x128xbf16>
    %c0_133 = arith.constant 0 : index
    %c0_134 = arith.constant 0 : index
    %260 = vector.load %arg11[%c0_133, %c0_134] : memref<128x128xbf16, #tpu.memory_space<vmem>>, vector<128x128xbf16>
    %cst_135 = arith.constant dense<0.000000e+00> : vector<128x128xf32>
    %261 = tpu.matmul %259, %260, %cst_135 {dimension_numbers = #tpu.dot_dimension_numbers<[1], [0], [0], [1], [0, 0, 1, 1], [], []>} : vector<128x128xbf16>, vector<128x128xbf16>, vector<128x128xf32> -> vector<128x128xf32>
    %c0_136 = arith.constant 0 : index
    %c0_137 = arith.constant 0 : index
    %262 = vector.load %arg12[%c0_136, %c0_137] : memref<1x128xf32, #tpu.memory_space<vmem>>, vector<1x128xf32>
    %263 = vector.broadcast %262 : vector<1x128xf32> to vector<128x128xf32>
    %264 = arith.addf %261, %263 : vector<128x128xf32>
    %265 = vector.extract_strided_slice %264 {offsets = [0, 0], sizes = [32, 128], strides = [1, 1]} : vector<128x128xf32> to vector<32x128xf32>
    %c0_138 = arith.constant 0 : index
    %c0_139 = arith.constant 0 : index
    %c0_140 = arith.constant 0 : index
    %266 = vector.load %arg14[%c0_138, %c0_139, %c0_140] : memref<4x32x128xf32, #tpu.memory_space<vmem>>, vector<1x32x128xf32>
    %267 = vector.shape_cast %266 : vector<1x32x128xf32> to vector<32x128xf32>
    %268 = vector.shape_cast %265 : vector<32x128xf32> to vector<1x32x128xf32>
    tpu.vector_store %arg14[%c0_138, %c0_139, %c0_140], %268 {strides = array<i32>} : memref<4x32x128xf32, #tpu.memory_space<vmem>>, vector<1x32x128xf32>,
    %269 = vector.extract_strided_slice %264 {offsets = [32, 0], sizes = [32, 128], strides = [1, 1]} : vector<128x128xf32> to vector<32x128xf32>
    %c1_141 = arith.constant 1 : index
    %c0_142 = arith.constant 0 : index
    %c0_143 = arith.constant 0 : index
    %270 = vector.load %arg14[%c1_141, %c0_142, %c0_143] : memref<4x32x128xf32, #tpu.memory_space<vmem>>, vector<1x32x128xf32>
    %271 = vector.shape_cast %270 : vector<1x32x128xf32> to vector<32x128xf32>
    %272 = vector.shape_cast %269 : vector<32x128xf32> to vector<1x32x128xf32>
    tpu.vector_store %arg14[%c1_141, %c0_142, %c0_143], %272 {strides = array<i32>} : memref<4x32x128xf32, #tpu.memory_space<vmem>>, vector<1x32x128xf32>,
    %273 = vector.extract_strided_slice %264 {offsets = [64, 0], sizes = [32, 128], strides = [1, 1]} : vector<128x128xf32> to vector<32x128xf32>
    %c2_144 = arith.constant 2 : index
    %c0_145 = arith.constant 0 : index
    %c0_146 = arith.constant 0 : index
    %274 = vector.load %arg14[%c2_144, %c0_145, %c0_146] : memref<4x32x128xf32, #tpu.memory_space<vmem>>, vector<1x32x128xf32>
    %275 = vector.shape_cast %274 : vector<1x32x128xf32> to vector<32x128xf32>
    %276 = vector.shape_cast %273 : vector<32x128xf32> to vector<1x32x128xf32>
    tpu.vector_store %arg14[%c2_144, %c0_145, %c0_146], %276 {strides = array<i32>} : memref<4x32x128xf32, #tpu.memory_space<vmem>>, vector<1x32x128xf32>,
    %277 = vector.extract_strided_slice %264 {offsets = [96, 0], sizes = [32, 128], strides = [1, 1]} : vector<128x128xf32> to vector<32x128xf32>
    %c3_147 = arith.constant 3 : index
    %c0_148 = arith.constant 0 : index
    %c0_149 = arith.constant 0 : index
    %278 = vector.load %arg14[%c3_147, %c0_148, %c0_149] : memref<4x32x128xf32, #tpu.memory_space<vmem>>, vector<1x32x128xf32>
    %279 = vector.shape_cast %278 : vector<1x32x128xf32> to vector<32x128xf32>
    %280 = vector.shape_cast %277 : vector<32x128xf32> to vector<1x32x128xf32>
    tpu.vector_store %arg14[%c3_147, %c0_148, %c0_149], %280 {strides = array<i32>} : memref<4x32x128xf32, #tpu.memory_space<vmem>>, vector<1x32x128xf32>,
    return
  }
  func.func @transform_0(%arg0: i32) -> (i32, i32, i32) {
    %c0_i32 = arith.constant 0 : i32
    %c0_i32_0 = arith.constant 0 : i32
    %c0_i32_1 = arith.constant 0 : i32
    return %arg0, %c0_i32, %c0_i32_0 : i32, i32, i32
  }
  func.func @transform_1(%arg0: i32) -> (i32, i32) {
    %c0_i32 = arith.constant 0 : i32
    %c0_i32_0 = arith.constant 0 : i32
    %c0_i32_1 = arith.constant 0 : i32
    return %c0_i32, %c0_i32_0 : i32, i32
  }
  func.func @transform_2(%arg0: i32) -> (i32, i32) {
    %c0_i32 = arith.constant 0 : i32
    %c0_i32_0 = arith.constant 0 : i32
    %c0_i32_1 = arith.constant 0 : i32
    return %c0_i32, %c0_i32_0 : i32, i32
  }
  func.func @transform_3(%arg0: i32) -> (i32, i32, i32) {
    %c0_i32 = arith.constant 0 : i32
    %c0_i32_0 = arith.constant 0 : i32
    %c0_i32_1 = arith.constant 0 : i32
    %c0_i32_2 = arith.constant 0 : i32
    return %c0_i32, %c0_i32_0, %c0_i32_1 : i32, i32, i32
  }
  func.func @transform_4(%arg0: i32) -> (i32, i32, i32) {
    %c0_i32 = arith.constant 0 : i32
    %c0_i32_0 = arith.constant 0 : i32
    %c0_i32_1 = arith.constant 0 : i32
    %c0_i32_2 = arith.constant 0 : i32
    return %c0_i32, %c0_i32_0, %c0_i32_1 : i32, i32, i32
  }
  func.func @transform_5(%arg0: i32) -> (i32, i32, i32) {
    %c0_i32 = arith.constant 0 : i32
    %c0_i32_0 = arith.constant 0 : i32
    %c0_i32_1 = arith.constant 0 : i32
    %c0_i32_2 = arith.constant 0 : i32
    return %c0_i32, %c0_i32_0, %c0_i32_1 : i32, i32, i32
  }
  func.func @transform_6(%arg0: i32) -> (i32, i32, i32) {
    %c0_i32 = arith.constant 0 : i32
    %c0_i32_0 = arith.constant 0 : i32
    %c0_i32_1 = arith.constant 0 : i32
    %c0_i32_2 = arith.constant 0 : i32
    return %c0_i32, %c0_i32_0, %c0_i32_1 : i32, i32, i32
  }
  func.func @transform_7(%arg0: i32) -> (i32, i32, i32) {
    %c0_i32 = arith.constant 0 : i32
    %c0_i32_0 = arith.constant 0 : i32
    %c0_i32_1 = arith.constant 0 : i32
    %c0_i32_2 = arith.constant 0 : i32
    return %c0_i32, %c0_i32_0, %c0_i32_1 : i32, i32, i32
  }
  func.func @transform_8(%arg0: i32) -> (i32, i32, i32) {
    %c0_i32 = arith.constant 0 : i32
    %c0_i32_0 = arith.constant 0 : i32
    %c0_i32_1 = arith.constant 0 : i32
    %c0_i32_2 = arith.constant 0 : i32
    return %c0_i32, %c0_i32_0, %c0_i32_1 : i32, i32, i32
  }
  func.func @transform_9(%arg0: i32) -> (i32, i32) {
    %c0_i32 = arith.constant 0 : i32
    %c0_i32_0 = arith.constant 0 : i32
    %c0_i32_1 = arith.constant 0 : i32
    return %c0_i32, %c0_i32_0 : i32, i32
  }
  func.func @transform_10(%arg0: i32) -> (i32, i32) {
    %c0_i32 = arith.constant 0 : i32
    %c0_i32_0 = arith.constant 0 : i32
    %c0_i32_1 = arith.constant 0 : i32
    return %c0_i32, %c0_i32_0 : i32, i32
  }
  func.func @transform_11(%arg0: i32) -> (i32, i32) {
    %c0_i32 = arith.constant 0 : i32
    %c0_i32_0 = arith.constant 0 : i32
    %c0_i32_1 = arith.constant 0 : i32
    return %c0_i32, %c0_i32_0 : i32, i32
  }
  func.func @transform_12(%arg0: i32) -> (i32, i32) {
    %c0_i32 = arith.constant 0 : i32
    %c0_i32_0 = arith.constant 0 : i32
    return %arg0, %c0_i32 : i32, i32
  }
  func.func @transform_13(%arg0: i32) -> (i32, i32, i32) {
    %c0_i32 = arith.constant 0 : i32
    %c0_i32_0 = arith.constant 0 : i32
    %c0_i32_1 = arith.constant 0 : i32
    return %arg0, %c0_i32, %c0_i32_0 : i32, i32, i32
  }
}

</mosaic_0001>

<llo_original>
// kernel: tpu_custom_call.1
$region0: #{tpu_custom_call.1}
  #allocation0 [shape = 'u32[]', space=smem, size = 0x4, offset = 0x4, fixed_abs, tag = 'smem constant byte address 0x4 - core index']
  #allocation1 [shape = 'u32[72,128]{1,0:T(1,128)}', space=vmem, size = 0x9000, scoped, tag = 'internal scratch']
  %s0 = inlined_call_operand.vmem [shape: f32[4,3,128], index: 0, kind: input, shape index: {}]
  %s1 = inlined_call_operand.vmem [shape: f32[32,3], index: 1, kind: input, shape index: {}]
  %s2 = inlined_call_operand.vmem [shape: f32[32,1], index: 2, kind: input, shape index: {}]
  %s3 = inlined_call_operand.vmem [shape: bf16[4,32,32], index: 3, kind: input, shape index: {}]
  %s4 = inlined_call_operand.vmem [shape: f32[4,32,1], index: 4, kind: input, shape index: {}]
  %s5 = inlined_call_operand.vmem [shape: bf16[4,32,32], index: 5, kind: input, shape index: {}]
  %s6 = inlined_call_operand.vmem [shape: bf16[4,32,32], index: 6, kind: input, shape index: {}]
  %s7 = inlined_call_operand.vmem [shape: f32[4,32,1], index: 7, kind: input, shape index: {}]
  %s8 = inlined_call_operand.vmem [shape: bf16[4,32,32], index: 8, kind: input, shape index: {}]
  %s9 = inlined_call_operand.vmem [shape: f32[32,1], index: 9, kind: input, shape index: {}]
  %s10 = inlined_call_operand.vmem [shape: bf16[128,128], index: 10, kind: input, shape index: {}]
  %s11 = inlined_call_operand.vmem [shape: f32[1,128], index: 11, kind: input, shape index: {}]
  %s12 = inlined_call_operand.hbm [shape: f32[4,32], index: 12, kind: output, shape index: {0}]
  %s13 = inlined_call_operand.hbm [shape: f32[4,32,128], index: 13, kind: output, shape index: {1}]
  %14 = xla_tuple %s12, %s13
  %s15 = sld [smem:[#allocation0]]
  $region66: #{tpu_custom_call.1} parent=0
    _
  %s17 = ssub.s32 1, %s15
  %s18 = scalar_select 0, %s17, %s15
  $region1: #{tpu_custom_call.1} parent=0
    #allocation2 [shape = 'u8[2048]{0}', space=vmem, size = 0x800, scoped, tag = 'output window, operand 0, single buffered']
    #allocation3 [shape = 's32[1]{0}', space=sflag, size = 0x4, scoped, tag = 'scoped memory for tpu_custom_call.1']
    #allocation4 [shape = 'u8[65536]{0}', space=vmem, size = 0x10000, scoped, tag = 'output window, operand 1, single buffered']
    #allocation5 [shape = 's32[1]{0}', space=sflag, size = 0x4, scoped, tag = 'scoped memory for tpu_custom_call.1']
    %19 = vsyncpa [#allocation3], 0
    %20 = vsyncpa [#allocation5], 0
    // Predicated region
    $region2: #{tpu_custom_call.1} parent=1 // pred_check
      _
    $region3: #{tpu_custom_call.1} parent=1 // pred_check_branch
      %22 = sbr.rel (0) target = $region5
    $region4: #{tpu_custom_call.1} parent=1 // pred_region
      _
    $region5: #{tpu_custom_call.1} parent=1 // pred_fallthru
      _
    // Predicated region
    $region6: #{tpu_custom_call.1} parent=1 // pred_check
      _
    $region7: #{tpu_custom_call.1} parent=1 // pred_check_branch
      %24 = sbr.rel (0) target = $region9
    $region8: #{tpu_custom_call.1} parent=1 // pred_region
      _
    $region9: #{tpu_custom_call.1} parent=1 // pred_fallthru
      _
    // Predicated region
    $region10: #{tpu_custom_call.1} parent=1 // pred_check
      _
    $region11: #{tpu_custom_call.1} parent=1 // pred_check_branch
      %26 = sbr.rel (0) target = $region13
    $region12: #{tpu_custom_call.1} parent=1 // pred_region
      _
    $region13: #{tpu_custom_call.1} parent=1 // pred_fallthru
      _
    // Predicated region
    $region14: #{tpu_custom_call.1} parent=1 // pred_check
      _
    $region15: #{tpu_custom_call.1} parent=1 // pred_check_branch
      %28 = sbr.rel (0) target = $region17
    $region16: #{tpu_custom_call.1} parent=1 // pred_region
      _
    $region17: #{tpu_custom_call.1} parent=1 // pred_fallthru
      _
    // Predicated region
    $region18: #{tpu_custom_call.1} parent=1 // pred_check
      _
    $region19: #{tpu_custom_call.1} parent=1 // pred_check_branch
      %30 = sbr.rel (0) target = $region21
    $region20: #{tpu_custom_call.1} parent=1 // pred_region
      _
    $region21: #{tpu_custom_call.1} parent=1 // pred_fallthru
      _
    // Predicated region
    $region22: #{tpu_custom_call.1} parent=1 // pred_check
      _
    $region23: #{tpu_custom_call.1} parent=1 // pred_check_branch
      %32 = sbr.rel (0) target = $region25
    $region24: #{tpu_custom_call.1} parent=1 // pred_region
      _
    $region25: #{tpu_custom_call.1} parent=1 // pred_fallthru
      _
    // Predicated region
    $region26: #{tpu_custom_call.1} parent=1 // pred_check
      _
    $region27: #{tpu_custom_call.1} parent=1 // pred_check_branch
      %34 = sbr.rel (0) target = $region29
    $region28: #{tpu_custom_call.1} parent=1 // pred_region
      _
    $region29: #{tpu_custom_call.1} parent=1 // pred_fallthru
      _
    // Predicated region
    $region30: #{tpu_custom_call.1} parent=1 // pred_check
      _
    $region31: #{tpu_custom_call.1} parent=1 // pred_check_branch
      %36 = sbr.rel (0) target = $region33
    $region32: #{tpu_custom_call.1} parent=1 // pred_region
      _
    $region33: #{tpu_custom_call.1} parent=1 // pred_fallthru
      _
    // Predicated region
    $region34: #{tpu_custom_call.1} parent=1 // pred_check
      _
    $region35: #{tpu_custom_call.1} parent=1 // pred_check_branch
      %38 = sbr.rel (0) target = $region37
    $region36: #{tpu_custom_call.1} parent=1 // pred_region
      _
    $region37: #{tpu_custom_call.1} parent=1 // pred_fallthru
      _
    // Predicated region
    $region38: #{tpu_custom_call.1} parent=1 // pred_check
      _
    $region39: #{tpu_custom_call.1} parent=1 // pred_check_branch
      %40 = sbr.rel (0) target = $region41
    $region40: #{tpu_custom_call.1} parent=1 // pred_region
      _
    $region41: #{tpu_custom_call.1} parent=1 // pred_fallthru
      _
    // Predicated region
    $region42: #{tpu_custom_call.1} parent=1 // pred_check
      _
    $region43: #{tpu_custom_call.1} parent=1 // pred_check_branch
      %42 = sbr.rel (0) target = $region45
    $region44: #{tpu_custom_call.1} parent=1 // pred_region
      _
    $region45: #{tpu_custom_call.1} parent=1 // pred_fallthru
      _
    // Predicated region
    $region46: #{tpu_custom_call.1} parent=1 // pred_check
      _
    $region47: #{tpu_custom_call.1} parent=1 // pred_check_branch
      %44 = sbr.rel (0) target = $region49
    $region48: #{tpu_custom_call.1} parent=1 // pred_region
      _
    $region49: #{tpu_custom_call.1} parent=1 // pred_fallthru
      _
    %v46 = vld [vmem:[%s0] sm:$0x7]
    %s47 = scalar_lea.vmem %s0, 4
    %v48 = vld [vmem:[%s47] sm:$0x7]
    %s49 = scalar_lea.vmem %s0, 8
    %v50 = vld [vmem:[%s49] sm:$0x7]
    %s51 = scalar_lea.vmem %s0, 12
    %v52 = vld [vmem:[%s51] sm:$0x7]
    %v53 = vld [vmem:[%s1] sm:$0xff]
    %v54 = vld [vmem:[%s1 + $0x8] sm:$0xff]
    %v55 = vld [vmem:[%s1 + $0x10] sm:$0xff]
    %v56 = vld [vmem:[%s1 + $0x18] sm:$0xff]
    %v57 = vld [vmem:[%s2] sm:$0xff]
    %v58 = vld [vmem:[%s2 + $0x8] sm:$0xff]
    %v59 = vld [vmem:[%s2 + $0x10] sm:$0xff]
    %v60 = vld [vmem:[%s2 + $0x18] sm:$0xff]
    %62 = vset.pattern.permute.xlu0 0
    %63 = vperm.xlu0 %62, %v57
    %v64 = vpop.permute.xlu0 %63
    %67 = vset.pattern.permute.xlu0 0
    %68 = vperm.xlu0 %67, %v58
    %v69 = vpop.permute.xlu0 %68
    %72 = vset.pattern.permute.xlu0 0
    %73 = vperm.xlu0 %72, %v59
    %v74 = vpop.permute.xlu0 %73
    %77 = vset.pattern.permute.xlu0 0
    %78 = vperm.xlu0 %77, %v60
    %v79 = vpop.permute.xlu0 %78
    %vm81 = vcmask 23552
    %v83 = vsel %vm81, %v53, 0
    %v86 = vsel %vm81, %v54, 0
    %v89 = vsel %vm81, %v55, 0
    %v92 = vsel %vm81, %v56, 0
    %vm94 = vcmask 1042432
    %v96 = vsel %vm94, %v46, 0
    %v99 = vsel %vm94, %v48, 0
    %v102 = vsel %vm94, %v50, 0
    %v105 = vsel %vm94, %v52, 0
    %107 = vmatpush.msra.mxu0 0.0
    %108 = vmatpush.msra.mxu0 0.0
    %109 = vmatpush.msra.mxu0 0.0
    %110 = vmatpush.msra.mxu0 0.0
    %111 = vmatpush.msra.mxu0 0.0
    %112 = vmatpush.msra.mxu0 0.0
    %113 = vmatpush.msra.mxu0 0.0
    %114 = vmatpush.msra.mxu0 0.0
    %115 = vmatpush.msra.mxu0 0.0
    %116 = vmatpush.msra.mxu0 0.0
    %117 = vmatpush.msra.mxu0 0.0
    %118 = vmatpush.msra.mxu0 0.0
    %119 = vmatpush.msra.mxu0 0.0
    %120 = vmatpush.msra.mxu0 0.0
    %121 = vmatpush.msra.mxu0 0.0
    %122 = vmatpush.msra.mxu0 %v96
    %123 = vmatmul.f32.gmra.mxu0 %v83
    %v124 = vpop.f32.mrf.mxu0
    %v125 = vadd.f32 %v64, %v124
    %126 = vmatmul.f32.gmra.mxu0 %v86
    %v127 = vpop.f32.mrf.mxu0
    %v128 = vadd.f32 %v69, %v127
    %129 = vmatmul.f32.gmra.mxu0 %v89
    %v130 = vpop.f32.mrf.mxu0
    %v131 = vadd.f32 %v74, %v130
    %132 = vmatmul.f32.gmra.mxu0 %v92
    %v133 = vpop.f32.mrf.mxu0
    %v134 = vadd.f32 %v79, %v133
    %135 = vdwg.mxu0
    %136 = vmatpush.msra.mxu0 0.0
    %137 = vmatpush.msra.mxu0 0.0
    %138 = vmatpush.msra.mxu0 0.0
    %139 = vmatpush.msra.mxu0 0.0
    %140 = vmatpush.msra.mxu0 0.0
    %141 = vmatpush.msra.mxu0 0.0
    %142 = vmatpush.msra.mxu0 0.0
    %143 = vmatpush.msra.mxu0 0.0
    %144 = vmatpush.msra.mxu0 0.0
    %145 = vmatpush.msra.mxu0 0.0
    %146 = vmatpush.msra.mxu0 0.0
    %147 = vmatpush.msra.mxu0 0.0
    %148 = vmatpush.msra.mxu0 0.0
    %149 = vmatpush.msra.mxu0 0.0
    %150 = vmatpush.msra.mxu0 0.0
    %151 = vmatpush.msra.mxu0 %v99
    %152 = vmatmul.f32.gmra.mxu0 %v83
    %v153 = vpop.f32.mrf.mxu0
    %v154 = vadd.f32 %v64, %v153
    %155 = vmatmul.f32.gmra.mxu0 %v86
    %v156 = vpop.f32.mrf.mxu0
    %v157 = vadd.f32 %v69, %v156
    %158 = vmatmul.f32.gmra.mxu0 %v89
    %v159 = vpop.f32.mrf.mxu0
    %v160 = vadd.f32 %v74, %v159
    %161 = vmatmul.f32.gmra.mxu0 %v92
    %v162 = vpop.f32.mrf.mxu0
    %v163 = vadd.f32 %v79, %v162
    %164 = vdwg.mxu0
    %165 = vmatpush.msra.mxu0 0.0
    %166 = vmatpush.msra.mxu0 0.0
    %167 = vmatpush.msra.mxu0 0.0
    %168 = vmatpush.msra.mxu0 0.0
    %169 = vmatpush.msra.mxu0 0.0
    %170 = vmatpush.msra.mxu0 0.0
    %171 = vmatpush.msra.mxu0 0.0
    %172 = vmatpush.msra.mxu0 0.0
    %173 = vmatpush.msra.mxu0 0.0
    %174 = vmatpush.msra.mxu0 0.0
    %175 = vmatpush.msra.mxu0 0.0
    %176 = vmatpush.msra.mxu0 0.0
    %177 = vmatpush.msra.mxu0 0.0
    %178 = vmatpush.msra.mxu0 0.0
    %179 = vmatpush.msra.mxu0 0.0
    %180 = vmatpush.msra.mxu0 %v102
    %181 = vmatmul.f32.gmra.mxu0 %v83
    %v182 = vpop.f32.mrf.mxu0
    %v183 = vadd.f32 %v64, %v182
    %184 = vmatmul.f32.gmra.mxu0 %v86
    %v185 = vpop.f32.mrf.mxu0
    %v186 = vadd.f32 %v69, %v185
    %187 = vmatmul.f32.gmra.mxu0 %v89
    %v188 = vpop.f32.mrf.mxu0
    %v189 = vadd.f32 %v74, %v188
    %190 = vmatmul.f32.gmra.mxu0 %v92
    %v191 = vpop.f32.mrf.mxu0
    %v192 = vadd.f32 %v79, %v191
    %193 = vdwg.mxu0
    %194 = vmatpush.msra.mxu0 0.0
    %195 = vmatpush.msra.mxu0 0.0
    %196 = vmatpush.msra.mxu0 0.0
    %197 = vmatpush.msra.mxu0 0.0
    %198 = vmatpush.msra.mxu0 0.0
    %199 = vmatpush.msra.mxu0 0.0
    %200 = vmatpush.msra.mxu0 0.0
    %201 = vmatpush.msra.mxu0 0.0
    %202 = vmatpush.msra.mxu0 0.0
    %203 = vmatpush.msra.mxu0 0.0
    %204 = vmatpush.msra.mxu0 0.0
    %205 = vmatpush.msra.mxu0 0.0
    %206 = vmatpush.msra.mxu0 0.0
    %207 = vmatpush.msra.mxu0 0.0
    %208 = vmatpush.msra.mxu0 0.0
    %209 = vmatpush.msra.mxu0 %v105
    %210 = vmatmul.f32.gmra.mxu0 %v83
    %v211 = vpop.f32.mrf.mxu0
    %v212 = vadd.f32 %v64, %v211
    %213 = vmatmul.f32.gmra.mxu0 %v86
    %v214 = vpop.f32.mrf.mxu0
    %v215 = vadd.f32 %v69, %v214
    %216 = vmatmul.f32.gmra.mxu0 %v89
    %v217 = vpop.f32.mrf.mxu0
    %v218 = vadd.f32 %v74, %v217
    %219 = vmatmul.f32.gmra.mxu0 %v92
    %v220 = vpop.f32.mrf.mxu0
    %v221 = vadd.f32 %v79, %v220
    %222 = vdwg.mxu0
    %v223 = vmax.f32 %v125, 0.0
    %v224 = vmax.f32 %v154, 0.0
    %v225 = vmax.f32 %v183, 0.0
    %v226 = vmax.f32 %v212, 0.0
    %v227 = vmax.f32 %v128, 0.0
    %v228 = vmax.f32 %v157, 0.0
    %v229 = vmax.f32 %v186, 0.0
    %v230 = vmax.f32 %v215, 0.0
    %v231 = vmax.f32 %v131, 0.0
    %v232 = vmax.f32 %v160, 0.0
    %v233 = vmax.f32 %v189, 0.0
    %v234 = vmax.f32 %v218, 0.0
    %v235 = vmax.f32 %v134, 0.0
    %v236 = vmax.f32 %v163, 0.0
    %v237 = vmax.f32 %v192, 0.0
    %v238 = vmax.f32 %v221, 0.0
    %v239 = vpack.c.bf16 %v227, %v223
    %v240 = vpack.c.bf16 %v228, %v224
    %v241 = vpack.c.bf16 %v229, %v225
    %v242 = vpack.c.bf16 %v230, %v226
    %v243 = vpack.c.bf16 %v235, %v231
    %v244 = vpack.c.bf16 %v236, %v232
    %v245 = vpack.c.bf16 %v237, %v233
    %v246 = vpack.c.bf16 %v238, %v234
    %v247 = vld [vmem:[%s3] sm:$0xf]
    %v248 = vld [vmem:[%s3 + $0x4] sm:$0xf]
    %v249 = vld [vmem:[%s3 + $0x8] sm:$0xf]
    %v250 = vld [vmem:[%s3 + $0xc] sm:$0xf]
    %v251 = vld [vmem:[%s4] sm:$0xff]
    %v252 = vld [vmem:[%s4 + $0x8] sm:$0xff]
    %v253 = vld [vmem:[%s4 + $0x10] sm:$0xff]
    %v254 = vld [vmem:[%s4 + $0x18] sm:$0xff]
    %256 = vset.pattern.permute.xlu0 0
    %257 = vperm.xlu0 %256, %v251
    %v258 = vpop.permute.xlu0 %257
    %261 = vset.pattern.permute.xlu0 0
    %262 = vperm.xlu0 %261, %v252
    %v263 = vpop.permute.xlu0 %262
    %266 = vset.pattern.permute.xlu0 0
    %267 = vperm.xlu0 %266, %v253
    %v268 = vpop.permute.xlu0 %267
    %271 = vset.pattern.permute.xlu0 0
    %272 = vperm.xlu0 %271, %v254
    %v273 = vpop.permute.xlu0 %272
    %v279 = vunpack.c.l.b16 %v247
    %v280 = vunpack.c.l.b16 %v248
    %v281 = vunpack.c.l.b16 %v249
    %v282 = vunpack.c.l.b16 %v250
    %v283 = vpack.c.b16 %v280, %v279
    %v284 = vpack.c.b16 %v282, %v281
    %vm285 = vcmask 261120
    %v287 = vsel %vm285, %v283, 0
    %v290 = vsel %vm285, %v284, 0
    %292 = vmatpush.bf16.msra.mxu0 0
    %293 = vmatpush.bf16.msra.mxu0 0
    %294 = vmatpush.bf16.msra.mxu0 0
    %295 = vmatpush.bf16.msra.mxu0 0
    %296 = vmatpush.bf16.msra.mxu0 0
    %297 = vmatpush.bf16.msra.mxu0 0
    %298 = vmatpush.bf16.msra.mxu0 %v243
    %299 = vmatpush.bf16.msra.mxu0 %v239
    %300 = vmatmul.bf16.gmra.mxu0 %v287
    %v301 = vpop.f32.mrf.mxu0
    %v302 = vadd.f32 %v258, %v301
    %v303 = vpop.f32.mrf.mxu0
    %v304 = vadd.f32 %v263, %v303
    %305 = vmatmul.bf16.gmra.mxu0 %v290
    %v306 = vpop.f32.mrf.mxu0
    %v307 = vadd.f32 %v268, %v306
    %v308 = vpop.f32.mrf.mxu0
    %v309 = vadd.f32 %v273, %v308
    %310 = vdwg.mxu0
    %311 = vmatpush.bf16.msra.mxu0 0
    %312 = vmatpush.bf16.msra.mxu0 0
    %313 = vmatpush.bf16.msra.mxu0 0
    %314 = vmatpush.bf16.msra.mxu0 0
    %315 = vmatpush.bf16.msra.mxu0 0
    %316 = vmatpush.bf16.msra.mxu0 0
    %317 = vmatpush.bf16.msra.mxu0 %v244
    %318 = vmatpush.bf16.msra.mxu0 %v240
    %319 = vmatmul.bf16.gmra.mxu0 %v287
    %v320 = vpop.f32.mrf.mxu0
    %v321 = vadd.f32 %v258, %v320
    %v322 = vpop.f32.mrf.mxu0
    %v323 = vadd.f32 %v263, %v322
    %324 = vmatmul.bf16.gmra.mxu0 %v290
    %v325 = vpop.f32.mrf.mxu0
    %v326 = vadd.f32 %v268, %v325
    %v327 = vpop.f32.mrf.mxu0
    %v328 = vadd.f32 %v273, %v327
    %329 = vdwg.mxu0
    %330 = vmatpush.bf16.msra.mxu0 0
    %331 = vmatpush.bf16.msra.mxu0 0
    %332 = vmatpush.bf16.msra.mxu0 0
    %333 = vmatpush.bf16.msra.mxu0 0
    %334 = vmatpush.bf16.msra.mxu0 0
    %335 = vmatpush.bf16.msra.mxu0 0
    %336 = vmatpush.bf16.msra.mxu0 %v245
    %337 = vmatpush.bf16.msra.mxu0 %v241
    %338 = vmatmul.bf16.gmra.mxu0 %v287
    %v339 = vpop.f32.mrf.mxu0
    %v340 = vadd.f32 %v258, %v339
    %v341 = vpop.f32.mrf.mxu0
    %v342 = vadd.f32 %v263, %v341
    %343 = vmatmul.bf16.gmra.mxu0 %v290
    %v344 = vpop.f32.mrf.mxu0
    %v345 = vadd.f32 %v268, %v344
    %v346 = vpop.f32.mrf.mxu0
    %v347 = vadd.f32 %v273, %v346
    %348 = vdwg.mxu0
    %349 = vmatpush.bf16.msra.mxu0 0
    %350 = vmatpush.bf16.msra.mxu0 0
    %351 = vmatpush.bf16.msra.mxu0 0
    %352 = vmatpush.bf16.msra.mxu0 0
    %353 = vmatpush.bf16.msra.mxu0 0
    %354 = vmatpush.bf16.msra.mxu0 0
    %355 = vmatpush.bf16.msra.mxu0 %v246
    %356 = vmatpush.bf16.msra.mxu0 %v242
    %357 = vmatmul.bf16.gmra.mxu0 %v287
    %v358 = vpop.f32.mrf.mxu0
    %v359 = vadd.f32 %v258, %v358
    %v360 = vpop.f32.mrf.mxu0
    %v361 = vadd.f32 %v263, %v360
    %362 = vmatmul.bf16.gmra.mxu0 %v290
    %v363 = vpop.f32.mrf.mxu0
    %v364 = vadd.f32 %v268, %v363
    %v365 = vpop.f32.mrf.mxu0
    %v366 = vadd.f32 %v273, %v365
    %367 = vdwg.mxu0
    %v368 = vmax.f32 %v302, 0.0
    %v369 = vmax.f32 %v321, 0.0
    %v370 = vmax.f32 %v340, 0.0
    %v371 = vmax.f32 %v359, 0.0
    %v372 = vmax.f32 %v304, 0.0
    %v373 = vmax.f32 %v323, 0.0
    %v374 = vmax.f32 %v342, 0.0
    %v375 = vmax.f32 %v361, 0.0
    %v376 = vmax.f32 %v307, 0.0
    %v377 = vmax.f32 %v326, 0.0
    %v378 = vmax.f32 %v345, 0.0
    %v379 = vmax.f32 %v364, 0.0
    %v380 = vmax.f32 %v309, 0.0
    %v381 = vmax.f32 %v328, 0.0
    %v382 = vmax.f32 %v347, 0.0
    %v383 = vmax.f32 %v366, 0.0
    %v384 = vpack.c.bf16 %v372, %v368
    %v385 = vpack.c.bf16 %v373, %v369
    %v386 = vpack.c.bf16 %v374, %v370
    %v387 = vpack.c.bf16 %v375, %v371
    %v388 = vpack.c.bf16 %v380, %v376
    %v389 = vpack.c.bf16 %v381, %v377
    %v390 = vpack.c.bf16 %v382, %v378
    %v391 = vpack.c.bf16 %v383, %v379
    %392 = vmax.xlane.f32.xlu0 %v368
    %v393 = vpop.xlane.xlu0 %392
    %394 = vmax.xlane.f32.xlu0 %v372
    %v395 = vpop.xlane.xlu0 %394
    %396 = vmax.xlane.f32.xlu0 %v376
    %v397 = vpop.xlane.xlu0 %396
    %398 = vmax.xlane.f32.xlu0 %v380
    %v399 = vpop.xlane.xlu0 %398
    %400 = vmax.xlane.f32.xlu0 %v369
    %v401 = vpop.xlane.xlu0 %400
    %402 = vmax.xlane.f32.xlu0 %v373
    %v403 = vpop.xlane.xlu0 %402
    %404 = vmax.xlane.f32.xlu0 %v377
    %v405 = vpop.xlane.xlu0 %404
    %406 = vmax.xlane.f32.xlu0 %v381
    %v407 = vpop.xlane.xlu0 %406
    %408 = vmax.xlane.f32.xlu0 %v370
    %v409 = vpop.xlane.xlu0 %408
    %410 = vmax.xlane.f32.xlu0 %v374
    %v411 = vpop.xlane.xlu0 %410
    %412 = vmax.xlane.f32.xlu0 %v378
    %v413 = vpop.xlane.xlu0 %412
    %414 = vmax.xlane.f32.xlu0 %v382
    %v415 = vpop.xlane.xlu0 %414
    %416 = vmax.xlane.f32.xlu0 %v371
    %v417 = vpop.xlane.xlu0 %416
    %418 = vmax.xlane.f32.xlu0 %v375
    %v419 = vpop.xlane.xlu0 %418
    %420 = vmax.xlane.f32.xlu0 %v379
    %v421 = vpop.xlane.xlu0 %420
    %422 = vmax.xlane.f32.xlu0 %v383
    %v423 = vpop.xlane.xlu0 %422
    %vm424 = vcmask 7168
    %v425 = vsel %vm424, %v393, %v401
    %v426 = vsel %vm424, %v395, %v403
    %v427 = vsel %vm424, %v397, %v405
    %v428 = vsel %vm424, %v399, %v407
    %vm429 = vcmask 15360
    %v430 = vsel %vm429, %v425, %v409
    %v431 = vsel %vm429, %v426, %v411
    %v432 = vsel %vm429, %v427, %v413
    %v433 = vsel %vm429, %v428, %v415
    %v434 = vsel %vm81, %v430, %v417
    %v435 = vsel %vm81, %v431, %v419
    %v436 = vsel %vm81, %v432, %v421
    %v437 = vsel %vm81, %v433, %v423
    %v438 = vld [vmem:[%s6] sm:$0xf]
    %v439 = vld [vmem:[%s6 + $0x4] sm:$0xf]
    %v440 = vld [vmem:[%s6 + $0x8] sm:$0xf]
    %v441 = vld [vmem:[%s6 + $0xc] sm:$0xf]
    %v442 = vpack.c.bf16 %v435, %v434
    %v443 = vpack.c.bf16 %v437, %v436
    %v444 = vld [vmem:[%s7] sm:$0xff]
    %v445 = vld [vmem:[%s7 + $0x8] sm:$0xff]
    %v446 = vld [vmem:[%s7 + $0x10] sm:$0xff]
    %v447 = vld [vmem:[%s7 + $0x18] sm:$0xff]
    %449 = vset.pattern.permute.xlu0 0
    %450 = vperm.xlu0 %449, %v444
    %v451 = vpop.permute.xlu0 %450
    %454 = vset.pattern.permute.xlu0 0
    %455 = vperm.xlu0 %454, %v445
    %v456 = vpop.permute.xlu0 %455
    %459 = vset.pattern.permute.xlu0 0
    %460 = vperm.xlu0 %459, %v446
    %v461 = vpop.permute.xlu0 %460
    %464 = vset.pattern.permute.xlu0 0
    %465 = vperm.xlu0 %464, %v447
    %v466 = vpop.permute.xlu0 %465
    %v472 = vunpack.c.l.b16 %v438
    %v473 = vunpack.c.l.b16 %v439
    %v474 = vunpack.c.l.b16 %v440
    %v475 = vunpack.c.l.b16 %v441
    %v476 = vpack.c.b16 %v473, %v472
    %v477 = vpack.c.b16 %v475, %v474
    %v479 = vsel %vm285, %v476, 0
    %v482 = vsel %vm285, %v477, 0
    %484 = vmatpush.bf16.msra.mxu0 0
    %485 = vmatpush.bf16.msra.mxu0 0
    %486 = vmatpush.bf16.msra.mxu0 0
    %487 = vmatpush.bf16.msra.mxu0 0
    %488 = vmatpush.bf16.msra.mxu0 0
    %489 = vmatpush.bf16.msra.mxu0 0
    %490 = vmatpush.bf16.msra.mxu0 %v443
    %491 = vmatpush.bf16.msra.mxu0 %v442
    %492 = vmatmul.bf16.gmra.mxu0 %v479
    %v493 = vpop.f32.mrf.mxu0
    %v494 = vadd.f32 %v451, %v493
    %v495 = vpop.f32.mrf.mxu0
    %v496 = vadd.f32 %v456, %v495
    %497 = vmatmul.bf16.gmra.mxu0 %v482
    %v498 = vpop.f32.mrf.mxu0
    %v499 = vadd.f32 %v461, %v498
    %v500 = vpop.f32.mrf.mxu0
    %v501 = vadd.f32 %v466, %v500
    %502 = vdwg.mxu0
    %504 = vset.pattern.permute.xlu0 0
    %505 = vperm.xlu0 %504, %v494
    %v506 = vpop.permute.xlu0 %505
    %509 = vset.pattern.permute.xlu0 0
    %510 = vperm.xlu0 %509, %v496
    %v511 = vpop.permute.xlu0 %510
    %514 = vset.pattern.permute.xlu0 0
    %515 = vperm.xlu0 %514, %v499
    %v516 = vpop.permute.xlu0 %515
    %519 = vset.pattern.permute.xlu0 0
    %520 = vperm.xlu0 %519, %v501
    %v521 = vpop.permute.xlu0 %520
    %523 = vset.pattern.permute.xlu0 1
    %524 = vperm.xlu0 %523, %v494
    %v525 = vpop.permute.xlu0 %524
    %527 = vset.pattern.permute.xlu0 1
    %528 = vperm.xlu0 %527, %v496
    %v529 = vpop.permute.xlu0 %528
    %531 = vset.pattern.permute.xlu0 1
    %532 = vperm.xlu0 %531, %v499
    %v533 = vpop.permute.xlu0 %532
    %535 = vset.pattern.permute.xlu0 1
    %536 = vperm.xlu0 %535, %v501
    %v537 = vpop.permute.xlu0 %536
    %539 = vset.pattern.permute.xlu0 2
    %540 = vperm.xlu0 %539, %v494
    %v541 = vpop.permute.xlu0 %540
    %543 = vset.pattern.permute.xlu0 2
    %544 = vperm.xlu0 %543, %v496
    %v545 = vpop.permute.xlu0 %544
    %547 = vset.pattern.permute.xlu0 2
    %548 = vperm.xlu0 %547, %v499
    %v549 = vpop.permute.xlu0 %548
    %551 = vset.pattern.permute.xlu0 2
    %552 = vperm.xlu0 %551, %v501
    %v553 = vpop.permute.xlu0 %552
    %555 = vset.pattern.permute.xlu0 3
    %556 = vperm.xlu0 %555, %v494
    %v557 = vpop.permute.xlu0 %556
    %559 = vset.pattern.permute.xlu0 3
    %560 = vperm.xlu0 %559, %v496
    %v561 = vpop.permute.xlu0 %560
    %563 = vset.pattern.permute.xlu0 3
    %564 = vperm.xlu0 %563, %v499
    %v565 = vpop.permute.xlu0 %564
    %567 = vset.pattern.permute.xlu0 3
    %568 = vperm.xlu0 %567, %v501
    %v569 = vpop.permute.xlu0 %568
    %v571 = vld [vmem:[%s5] sm:$0xf]
    %v572 = vld [vmem:[%s5 + $0x4] sm:$0xf]
    %v573 = vld [vmem:[%s5 + $0x8] sm:$0xf]
    %v574 = vld [vmem:[%s5 + $0xc] sm:$0xf]
    %v579 = vunpack.c.l.b16 %v571
    %v580 = vunpack.c.l.b16 %v572
    %v581 = vunpack.c.l.b16 %v573
    %v582 = vunpack.c.l.b16 %v574
    %v583 = vpack.c.b16 %v580, %v579
    %v584 = vpack.c.b16 %v582, %v581
    %v586 = vsel %vm285, %v583, 0
    %v589 = vsel %vm285, %v584, 0
    %591 = vmatpush.bf16.msra.mxu0 0
    %592 = vmatpush.bf16.msra.mxu0 0
    %593 = vmatpush.bf16.msra.mxu0 0
    %594 = vmatpush.bf16.msra.mxu0 0
    %595 = vmatpush.bf16.msra.mxu0 0
    %596 = vmatpush.bf16.msra.mxu0 0
    %597 = vmatpush.bf16.msra.mxu0 %v388
    %598 = vmatpush.bf16.msra.mxu0 %v384
    %599 = vmatmul.bf16.gmra.mxu0 %v586
    %v600 = vpop.f32.mrf.mxu0
    %v601 = vadd.f32 %v506, %v600
    %v602 = vpop.f32.mrf.mxu0
    %v603 = vadd.f32 %v511, %v602
    %604 = vmatmul.bf16.gmra.mxu0 %v589
    %v605 = vpop.f32.mrf.mxu0
    %v606 = vadd.f32 %v516, %v605
    %v607 = vpop.f32.mrf.mxu0
    %v608 = vadd.f32 %v521, %v607
    %609 = vdwg.mxu0
    %610 = vmatpush.bf16.msra.mxu0 0
    %611 = vmatpush.bf16.msra.mxu0 0
    %612 = vmatpush.bf16.msra.mxu0 0
    %613 = vmatpush.bf16.msra.mxu0 0
    %614 = vmatpush.bf16.msra.mxu0 0
    %615 = vmatpush.bf16.msra.mxu0 0
    %616 = vmatpush.bf16.msra.mxu0 %v389
    %617 = vmatpush.bf16.msra.mxu0 %v385
    %618 = vmatmul.bf16.gmra.mxu0 %v586
    %v619 = vpop.f32.mrf.mxu0
    %v620 = vadd.f32 %v525, %v619
    %v621 = vpop.f32.mrf.mxu0
    %v622 = vadd.f32 %v529, %v621
    %623 = vmatmul.bf16.gmra.mxu0 %v589
    %v624 = vpop.f32.mrf.mxu0
    %v625 = vadd.f32 %v533, %v624
    %v626 = vpop.f32.mrf.mxu0
    %v627 = vadd.f32 %v537, %v626
    %628 = vdwg.mxu0
    %629 = vmatpush.bf16.msra.mxu0 0
    %630 = vmatpush.bf16.msra.mxu0 0
    %631 = vmatpush.bf16.msra.mxu0 0
    %632 = vmatpush.bf16.msra.mxu0 0
    %633 = vmatpush.bf16.msra.mxu0 0
    %634 = vmatpush.bf16.msra.mxu0 0
    %635 = vmatpush.bf16.msra.mxu0 %v390
    %636 = vmatpush.bf16.msra.mxu0 %v386
    %637 = vmatmul.bf16.gmra.mxu0 %v586
    %v638 = vpop.f32.mrf.mxu0
    %v639 = vadd.f32 %v541, %v638
    %v640 = vpop.f32.mrf.mxu0
    %v641 = vadd.f32 %v545, %v640
    %642 = vmatmul.bf16.gmra.mxu0 %v589
    %v643 = vpop.f32.mrf.mxu0
    %v644 = vadd.f32 %v549, %v643
    %v645 = vpop.f32.mrf.mxu0
    %v646 = vadd.f32 %v553, %v645
    %647 = vdwg.mxu0
    %648 = vmatpush.bf16.msra.mxu0 0
    %649 = vmatpush.bf16.msra.mxu0 0
    %650 = vmatpush.bf16.msra.mxu0 0
    %651 = vmatpush.bf16.msra.mxu0 0
    %652 = vmatpush.bf16.msra.mxu0 0
    %653 = vmatpush.bf16.msra.mxu0 0
    %654 = vmatpush.bf16.msra.mxu0 %v391
    %655 = vmatpush.bf16.msra.mxu0 %v387
    %656 = vmatmul.bf16.gmra.mxu0 %v586
    %v657 = vpop.f32.mrf.mxu0
    %v658 = vadd.f32 %v557, %v657
    %v659 = vpop.f32.mrf.mxu0
    %v660 = vadd.f32 %v561, %v659
    %661 = vmatmul.bf16.gmra.mxu0 %v589
    %v662 = vpop.f32.mrf.mxu0
    %v663 = vadd.f32 %v565, %v662
    %v664 = vpop.f32.mrf.mxu0
    %v665 = vadd.f32 %v569, %v664
    %666 = vdwg.mxu0
    %v667 = vmax.f32 %v601, 0.0
    %v668 = vmax.f32 %v620, 0.0
    %v669 = vmax.f32 %v639, 0.0
    %v670 = vmax.f32 %v658, 0.0
    %v671 = vmax.f32 %v603, 0.0
    %v672 = vmax.f32 %v622, 0.0
    %v673 = vmax.f32 %v641, 0.0
    %v674 = vmax.f32 %v660, 0.0
    %v675 = vmax.f32 %v606, 0.0
    %v676 = vmax.f32 %v625, 0.0
    %v677 = vmax.f32 %v644, 0.0
    %v678 = vmax.f32 %v663, 0.0
    %v679 = vmax.f32 %v608, 0.0
    %v680 = vmax.f32 %v627, 0.0
    %v681 = vmax.f32 %v646, 0.0
    %v682 = vmax.f32 %v665, 0.0
    %v683 = vpack.c.bf16 %v671, %v667
    %v684 = vpack.c.bf16 %v672, %v668
    %v685 = vpack.c.bf16 %v673, %v669
    %v686 = vpack.c.bf16 %v674, %v670
    %v687 = vpack.c.bf16 %v679, %v675
    %v688 = vpack.c.bf16 %v680, %v676
    %v689 = vpack.c.bf16 %v681, %v677
    %v690 = vpack.c.bf16 %v682, %v678
    %v691 = vld [vmem:[%s8] sm:$0xf]
    %v692 = vld [vmem:[%s8 + $0x4] sm:$0xf]
    %v693 = vld [vmem:[%s8 + $0x8] sm:$0xf]
    %v694 = vld [vmem:[%s8 + $0xc] sm:$0xf]
    %s695 = scalar_lea.vmem %s3, 16
    %v696 = vld [vmem:[%s695] sm:$0xf]
    %v697 = vld [vmem:[%s695 + $0x4] sm:$0xf]
    %v698 = vld [vmem:[%s695 + $0x8] sm:$0xf]
    %v699 = vld [vmem:[%s695 + $0xc] sm:$0xf]
    %s700 = scalar_lea.vmem %s4, 32
    %v701 = vld [vmem:[%s700] sm:$0xff]
    %v702 = vld [vmem:[%s700 + $0x8] sm:$0xff]
    %v703 = vld [vmem:[%s700 + $0x10] sm:$0xff]
    %v704 = vld [vmem:[%s700 + $0x18] sm:$0xff]
    %706 = vset.pattern.permute.xlu0 0
    %707 = vperm.xlu0 %706, %v701
    %v708 = vpop.permute.xlu0 %707
    %711 = vset.pattern.permute.xlu0 0
    %712 = vperm.xlu0 %711, %v702
    %v713 = vpop.permute.xlu0 %712
    %716 = vset.pattern.permute.xlu0 0
    %717 = vperm.xlu0 %716, %v703
    %v718 = vpop.permute.xlu0 %717
    %721 = vset.pattern.permute.xlu0 0
    %722 = vperm.xlu0 %721, %v704
    %v723 = vpop.permute.xlu0 %722
    %v729 = vunpack.c.l.b16 %v696
    %v730 = vunpack.c.l.b16 %v697
    %v731 = vunpack.c.l.b16 %v698
    %v732 = vunpack.c.l.b16 %v699
    %v733 = vpack.c.b16 %v730, %v729
    %v734 = vpack.c.b16 %v732, %v731
    %v736 = vsel %vm285, %v733, 0
    %v739 = vsel %vm285, %v734, 0
    %741 = vmatpush.bf16.msra.mxu0 0
    %742 = vmatpush.bf16.msra.mxu0 0
    %743 = vmatpush.bf16.msra.mxu0 0
    %744 = vmatpush.bf16.msra.mxu0 0
    %745 = vmatpush.bf16.msra.mxu0 0
    %746 = vmatpush.bf16.msra.mxu0 0
    %747 = vmatpush.bf16.msra.mxu0 %v687
    %748 = vmatpush.bf16.msra.mxu0 %v683
    %749 = vmatmul.bf16.gmra.mxu0 %v736
    %v750 = vpop.f32.mrf.mxu0
    %v751 = vadd.f32 %v708, %v750
    %v752 = vpop.f32.mrf.mxu0
    %v753 = vadd.f32 %v713, %v752
    %754 = vmatmul.bf16.gmra.mxu0 %v739
    %v755 = vpop.f32.mrf.mxu0
    %v756 = vadd.f32 %v718, %v755
    %v757 = vpop.f32.mrf.mxu0
    %v758 = vadd.f32 %v723, %v757
    %759 = vdwg.mxu0
    %760 = vmatpush.bf16.msra.mxu0 0
    %761 = vmatpush.bf16.msra.mxu0 0
    %762 = vmatpush.bf16.msra.mxu0 0
    %763 = vmatpush.bf16.msra.mxu0 0
    %764 = vmatpush.bf16.msra.mxu0 0
    %765 = vmatpush.bf16.msra.mxu0 0
    %766 = vmatpush.bf16.msra.mxu0 %v688
    %767 = vmatpush.bf16.msra.mxu0 %v684
    %768 = vmatmul.bf16.gmra.mxu0 %v736
    %v769 = vpop.f32.mrf.mxu0
    %v770 = vadd.f32 %v708, %v769
    %v771 = vpop.f32.mrf.mxu0
    %v772 = vadd.f32 %v713, %v771
    %773 = vmatmul.bf16.gmra.mxu0 %v739
    %v774 = vpop.f32.mrf.mxu0
    %v775 = vadd.f32 %v718, %v774
    %v776 = vpop.f32.mrf.mxu0
    %v777 = vadd.f32 %v723, %v776
    %778 = vdwg.mxu0
    %779 = vmatpush.bf16.msra.mxu0 0
    %780 = vmatpush.bf16.msra.mxu0 0
    %781 = vmatpush.bf16.msra.mxu0 0
    %782 = vmatpush.bf16.msra.mxu0 0
    %783 = vmatpush.bf16.msra.mxu0 0
    %784 = vmatpush.bf16.msra.mxu0 0
    %785 = vmatpush.bf16.msra.mxu0 %v689
    %786 = vmatpush.bf16.msra.mxu0 %v685
    %787 = vmatmul.bf16.gmra.mxu0 %v736
    %v788 = vpop.f32.mrf.mxu0
    %v789 = vadd.f32 %v708, %v788
    %v790 = vpop.f32.mrf.mxu0
    %v791 = vadd.f32 %v713, %v790
    %792 = vmatmul.bf16.gmra.mxu0 %v739
    %v793 = vpop.f32.mrf.mxu0
    %v794 = vadd.f32 %v718, %v793
    %v795 = vpop.f32.mrf.mxu0
    %v796 = vadd.f32 %v723, %v795
    %797 = vdwg.mxu0
    %798 = vmatpush.bf16.msra.mxu0 0
    %799 = vmatpush.bf16.msra.mxu0 0
    %800 = vmatpush.bf16.msra.mxu0 0
    %801 = vmatpush.bf16.msra.mxu0 0
    %802 = vmatpush.bf16.msra.mxu0 0
    %803 = vmatpush.bf16.msra.mxu0 0
    %804 = vmatpush.bf16.msra.mxu0 %v690
    %805 = vmatpush.bf16.msra.mxu0 %v686
    %806 = vmatmul.bf16.gmra.mxu0 %v736
    %v807 = vpop.f32.mrf.mxu0
    %v808 = vadd.f32 %v708, %v807
    %v809 = vpop.f32.mrf.mxu0
    %v810 = vadd.f32 %v713, %v809
    %811 = vmatmul.bf16.gmra.mxu0 %v739
    %v812 = vpop.f32.mrf.mxu0
    %v813 = vadd.f32 %v718, %v812
    %v814 = vpop.f32.mrf.mxu0
    %v815 = vadd.f32 %v723, %v814
    %816 = vdwg.mxu0
    %v817 = vmax.f32 %v751, 0.0
    %v818 = vmax.f32 %v770, 0.0
    %v819 = vmax.f32 %v789, 0.0
    %v820 = vmax.f32 %v808, 0.0
    %v821 = vmax.f32 %v753, 0.0
    %v822 = vmax.f32 %v772, 0.0
    %v823 = vmax.f32 %v791, 0.0
    %v824 = vmax.f32 %v810, 0.0
    %v825 = vmax.f32 %v756, 0.0
    %v826 = vmax.f32 %v775, 0.0
    %v827 = vmax.f32 %v794, 0.0
    %v828 = vmax.f32 %v813, 0.0
    %v829 = vmax.f32 %v758, 0.0
    %v830 = vmax.f32 %v777, 0.0
    %v831 = vmax.f32 %v796, 0.0
    %v832 = vmax.f32 %v815, 0.0
    %v833 = vpack.c.bf16 %v821, %v817
    %v834 = vpack.c.bf16 %v822, %v818
    %v835 = vpack.c.bf16 %v823, %v819
    %v836 = vpack.c.bf16 %v824, %v820
    %v837 = vpack.c.bf16 %v829, %v825
    %v838 = vpack.c.bf16 %v830, %v826
    %v839 = vpack.c.bf16 %v831, %v827
    %v840 = vpack.c.bf16 %v832, %v828
    %841 = vmax.xlane.f32.xlu0 %v817
    %v842 = vpop.xlane.xlu0 %841
    %843 = vmax.xlane.f32.xlu0 %v821
    %v844 = vpop.xlane.xlu0 %843
    %845 = vmax.xlane.f32.xlu0 %v825
    %v846 = vpop.xlane.xlu0 %845
    %847 = vmax.xlane.f32.xlu0 %v829
    %v848 = vpop.xlane.xlu0 %847
    %849 = vmax.xlane.f32.xlu0 %v818
    %v850 = vpop.xlane.xlu0 %849
    %851 = vmax.xlane.f32.xlu0 %v822
    %v852 = vpop.xlane.xlu0 %851
    %853 = vmax.xlane.f32.xlu0 %v826
    %v854 = vpop.xlane.xlu0 %853
    %855 = vmax.xlane.f32.xlu0 %v830
    %v856 = vpop.xlane.xlu0 %855
    %857 = vmax.xlane.f32.xlu0 %v819
    %v858 = vpop.xlane.xlu0 %857
    %859 = vmax.xlane.f32.xlu0 %v823
    %v860 = vpop.xlane.xlu0 %859
    %861 = vmax.xlane.f32.xlu0 %v827
    %v862 = vpop.xlane.xlu0 %861
    %863 = vmax.xlane.f32.xlu0 %v831
    %v864 = vpop.xlane.xlu0 %863
    %865 = vmax.xlane.f32.xlu0 %v820
    %v866 = vpop.xlane.xlu0 %865
    %867 = vmax.xlane.f32.xlu0 %v824
    %v868 = vpop.xlane.xlu0 %867
    %869 = vmax.xlane.f32.xlu0 %v828
    %v870 = vpop.xlane.xlu0 %869
    %871 = vmax.xlane.f32.xlu0 %v832
    %v872 = vpop.xlane.xlu0 %871
    %v873 = vsel %vm424, %v842, %v850
    %v874 = vsel %vm424, %v844, %v852
    %v875 = vsel %vm424, %v846, %v854
    %v876 = vsel %vm424, %v848, %v856
    %v877 = vsel %vm429, %v873, %v858
    %v878 = vsel %vm429, %v874, %v860
    %v879 = vsel %vm429, %v875, %v862
    %v880 = vsel %vm429, %v876, %v864
    %v881 = vsel %vm81, %v877, %v866
    %v882 = vsel %vm81, %v878, %v868
    %v883 = vsel %vm81, %v879, %v870
    %v884 = vsel %vm81, %v880, %v872
    %s885 = scalar_lea.vmem %s6, 16
    %v886 = vld [vmem:[%s885] sm:$0xf]
    %v887 = vld [vmem:[%s885 + $0x4] sm:$0xf]
    %v888 = vld [vmem:[%s885 + $0x8] sm:$0xf]
    %v889 = vld [vmem:[%s885 + $0xc] sm:$0xf]
    %v890 = vpack.c.bf16 %v882, %v881
    %v891 = vpack.c.bf16 %v884, %v883
    %s892 = scalar_lea.vmem %s7, 32
    %v893 = vld [vmem:[%s892] sm:$0xff]
    %v894 = vld [vmem:[%s892 + $0x8] sm:$0xff]
    %v895 = vld [vmem:[%s892 + $0x10] sm:$0xff]
    %v896 = vld [vmem:[%s892 + $0x18] sm:$0xff]
    %898 = vset.pattern.permute.xlu0 0
    %899 = vperm.xlu0 %898, %v893
    %v900 = vpop.permute.xlu0 %899
    %903 = vset.pattern.permute.xlu0 0
    %904 = vperm.xlu0 %903, %v894
    %v905 = vpop.permute.xlu0 %904
    %908 = vset.pattern.permute.xlu0 0
    %909 = vperm.xlu0 %908, %v895
    %v910 = vpop.permute.xlu0 %909
    %913 = vset.pattern.permute.xlu0 0
    %914 = vperm.xlu0 %913, %v896
    %v915 = vpop.permute.xlu0 %914
    %v921 = vunpack.c.l.b16 %v886
    %v922 = vunpack.c.l.b16 %v887
    %v923 = vunpack.c.l.b16 %v888
    %v924 = vunpack.c.l.b16 %v889
    %v925 = vpack.c.b16 %v922, %v921
    %v926 = vpack.c.b16 %v924, %v923
    %v928 = vsel %vm285, %v925, 0
    %v931 = vsel %vm285, %v926, 0
    %933 = vmatpush.bf16.msra.mxu0 0
    %934 = vmatpush.bf16.msra.mxu0 0
    %935 = vmatpush.bf16.msra.mxu0 0
    %936 = vmatpush.bf16.msra.mxu0 0
    %937 = vmatpush.bf16.msra.mxu0 0
    %938 = vmatpush.bf16.msra.mxu0 0
    %939 = vmatpush.bf16.msra.mxu0 %v891
    %940 = vmatpush.bf16.msra.mxu0 %v890
    %941 = vmatmul.bf16.gmra.mxu0 %v928
    %v942 = vpop.f32.mrf.mxu0
    %v943 = vadd.f32 %v900, %v942
    %v944 = vpop.f32.mrf.mxu0
    %v945 = vadd.f32 %v905, %v944
    %946 = vmatmul.bf16.gmra.mxu0 %v931
    %v947 = vpop.f32.mrf.mxu0
    %v948 = vadd.f32 %v910, %v947
    %v949 = vpop.f32.mrf.mxu0
    %v950 = vadd.f32 %v915, %v949
    %951 = vdwg.mxu0
    %953 = vset.pattern.permute.xlu0 0
    %954 = vperm.xlu0 %953, %v943
    %v955 = vpop.permute.xlu0 %954
    %958 = vset.pattern.permute.xlu0 0
    %959 = vperm.xlu0 %958, %v945
    %v960 = vpop.permute.xlu0 %959
    %963 = vset.pattern.permute.xlu0 0
    %964 = vperm.xlu0 %963, %v948
    %v965 = vpop.permute.xlu0 %964
    %968 = vset.pattern.permute.xlu0 0
    %969 = vperm.xlu0 %968, %v950
    %v970 = vpop.permute.xlu0 %969
    %972 = vset.pattern.permute.xlu0 1
    %973 = vperm.xlu0 %972, %v943
    %v974 = vpop.permute.xlu0 %973
    %976 = vset.pattern.permute.xlu0 1
    %977 = vperm.xlu0 %976, %v945
    %v978 = vpop.permute.xlu0 %977
    %980 = vset.pattern.permute.xlu0 1
    %981 = vperm.xlu0 %980, %v948
    %v982 = vpop.permute.xlu0 %981
    %984 = vset.pattern.permute.xlu0 1
    %985 = vperm.xlu0 %984, %v950
    %v986 = vpop.permute.xlu0 %985
    %988 = vset.pattern.permute.xlu0 2
    %989 = vperm.xlu0 %988, %v943
    %v990 = vpop.permute.xlu0 %989
    %992 = vset.pattern.permute.xlu0 2
    %993 = vperm.xlu0 %992, %v945
    %v994 = vpop.permute.xlu0 %993
    %996 = vset.pattern.permute.xlu0 2
    %997 = vperm.xlu0 %996, %v948
    %v998 = vpop.permute.xlu0 %997
    %1000 = vset.pattern.permute.xlu0 2
    %1001 = vperm.xlu0 %1000, %v950
    %v1002 = vpop.permute.xlu0 %1001
    %1004 = vset.pattern.permute.xlu0 3
    %1005 = vperm.xlu0 %1004, %v943
    %v1006 = vpop.permute.xlu0 %1005
    %1008 = vset.pattern.permute.xlu0 3
    %1009 = vperm.xlu0 %1008, %v945
    %v1010 = vpop.permute.xlu0 %1009
    %1012 = vset.pattern.permute.xlu0 3
    %1013 = vperm.xlu0 %1012, %v948
    %v1014 = vpop.permute.xlu0 %1013
    %1016 = vset.pattern.permute.xlu0 3
    %1017 = vperm.xlu0 %1016, %v950
    %v1018 = vpop.permute.xlu0 %1017
    %s1020 = scalar_lea.vmem %s5, 16
    %v1021 = vld [vmem:[%s1020] sm:$0xf]
    %v1022 = vld [vmem:[%s1020 + $0x4] sm:$0xf]
    %v1023 = vld [vmem:[%s1020 + $0x8] sm:$0xf]
    %v1024 = vld [vmem:[%s1020 + $0xc] sm:$0xf]
    %v1029 = vunpack.c.l.b16 %v1021
    %v1030 = vunpack.c.l.b16 %v1022
    %v1031 = vunpack.c.l.b16 %v1023
    %v1032 = vunpack.c.l.b16 %v1024
    %v1033 = vpack.c.b16 %v1030, %v1029
    %v1034 = vpack.c.b16 %v1032, %v1031
    %v1036 = vsel %vm285, %v1033, 0
    %v1039 = vsel %vm285, %v1034, 0
    %1041 = vmatpush.bf16.msra.mxu0 0
    %1042 = vmatpush.bf16.msra.mxu0 0
    %1043 = vmatpush.bf16.msra.mxu0 0
    %1044 = vmatpush.bf16.msra.mxu0 0
    %1045 = vmatpush.bf16.msra.mxu0 0
    %1046 = vmatpush.bf16.msra.mxu0 0
    %1047 = vmatpush.bf16.msra.mxu0 %v837
    %1048 = vmatpush.bf16.msra.mxu0 %v833
    %1049 = vmatmul.bf16.gmra.mxu0 %v1036
    %v1050 = vpop.f32.mrf.mxu0
    %v1051 = vadd.f32 %v955, %v1050
    %v1052 = vpop.f32.mrf.mxu0
    %v1053 = vadd.f32 %v960, %v1052
    %1054 = vmatmul.bf16.gmra.mxu0 %v1039
    %v1055 = vpop.f32.mrf.mxu0
    %v1056 = vadd.f32 %v965, %v1055
    %v1057 = vpop.f32.mrf.mxu0
    %v1058 = vadd.f32 %v970, %v1057
    %1059 = vdwg.mxu0
    %1060 = vmatpush.bf16.msra.mxu0 0
    %1061 = vmatpush.bf16.msra.mxu0 0
    %1062 = vmatpush.bf16.msra.mxu0 0
    %1063 = vmatpush.bf16.msra.mxu0 0
    %1064 = vmatpush.bf16.msra.mxu0 0
    %1065 = vmatpush.bf16.msra.mxu0 0
    %1066 = vmatpush.bf16.msra.mxu0 %v838
    %1067 = vmatpush.bf16.msra.mxu0 %v834
    %1068 = vmatmul.bf16.gmra.mxu0 %v1036
    %v1069 = vpop.f32.mrf.mxu0
    %v1070 = vadd.f32 %v974, %v1069
    %v1071 = vpop.f32.mrf.mxu0
    %v1072 = vadd.f32 %v978, %v1071
    %1073 = vmatmul.bf16.gmra.mxu0 %v1039
    %v1074 = vpop.f32.mrf.mxu0
    %v1075 = vadd.f32 %v982, %v1074
    %v1076 = vpop.f32.mrf.mxu0
    %v1077 = vadd.f32 %v986, %v1076
    %1078 = vdwg.mxu0
    %1079 = vmatpush.bf16.msra.mxu0 0
    %1080 = vmatpush.bf16.msra.mxu0 0
    %1081 = vmatpush.bf16.msra.mxu0 0
    %1082 = vmatpush.bf16.msra.mxu0 0
    %1083 = vmatpush.bf16.msra.mxu0 0
    %1084 = vmatpush.bf16.msra.mxu0 0
    %1085 = vmatpush.bf16.msra.mxu0 %v839
    %1086 = vmatpush.bf16.msra.mxu0 %v835
    %1087 = vmatmul.bf16.gmra.mxu0 %v1036
    %v1088 = vpop.f32.mrf.mxu0
    %v1089 = vadd.f32 %v990, %v1088
    %v1090 = vpop.f32.mrf.mxu0
    %v1091 = vadd.f32 %v994, %v1090
    %1092 = vmatmul.bf16.gmra.mxu0 %v1039
    %v1093 = vpop.f32.mrf.mxu0
    %v1094 = vadd.f32 %v998, %v1093
    %v1095 = vpop.f32.mrf.mxu0
    %v1096 = vadd.f32 %v1002, %v1095
    %1097 = vdwg.mxu0
    %1098 = vmatpush.bf16.msra.mxu0 0
    %1099 = vmatpush.bf16.msra.mxu0 0
    %1100 = vmatpush.bf16.msra.mxu0 0
    %1101 = vmatpush.bf16.msra.mxu0 0
    %1102 = vmatpush.bf16.msra.mxu0 0
    %1103 = vmatpush.bf16.msra.mxu0 0
    %1104 = vmatpush.bf16.msra.mxu0 %v840
    %1105 = vmatpush.bf16.msra.mxu0 %v836
    %1106 = vmatmul.bf16.gmra.mxu0 %v1036
    %v1107 = vpop.f32.mrf.mxu0
    %v1108 = vadd.f32 %v1006, %v1107
    %v1109 = vpop.f32.mrf.mxu0
    %v1110 = vadd.f32 %v1010, %v1109
    %1111 = vmatmul.bf16.gmra.mxu0 %v1039
    %v1112 = vpop.f32.mrf.mxu0
    %v1113 = vadd.f32 %v1014, %v1112
    %v1114 = vpop.f32.mrf.mxu0
    %v1115 = vadd.f32 %v1018, %v1114
    %1116 = vdwg.mxu0
    %v1117 = vmax.f32 %v1051, 0.0
    %v1118 = vmax.f32 %v1070, 0.0
    %v1119 = vmax.f32 %v1089, 0.0
    %v1120 = vmax.f32 %v1108, 0.0
    %v1121 = vmax.f32 %v1053, 0.0
    %v1122 = vmax.f32 %v1072, 0.0
    %v1123 = vmax.f32 %v1091, 0.0
    %v1124 = vmax.f32 %v1110, 0.0
    %v1125 = vmax.f32 %v1056, 0.0
    %v1126 = vmax.f32 %v1075, 0.0
    %v1127 = vmax.f32 %v1094, 0.0
    %v1128 = vmax.f32 %v1113, 0.0
    %v1129 = vmax.f32 %v1058, 0.0
    %v1130 = vmax.f32 %v1077, 0.0
    %v1131 = vmax.f32 %v1096, 0.0
    %v1132 = vmax.f32 %v1115, 0.0
    %v1133 = vpack.c.bf16 %v1121, %v1117
    %v1134 = vpack.c.bf16 %v1122, %v1118
    %v1135 = vpack.c.bf16 %v1123, %v1119
    %v1136 = vpack.c.bf16 %v1124, %v1120
    %v1137 = vpack.c.bf16 %v1129, %v1125
    %v1138 = vpack.c.bf16 %v1130, %v1126
    %v1139 = vpack.c.bf16 %v1131, %v1127
    %v1140 = vpack.c.bf16 %v1132, %v1128
    %s1141 = scalar_lea.vmem %s8, 16
    %v1142 = vld [vmem:[%s1141] sm:$0xf]
    %v1143 = vld [vmem:[%s1141 + $0x4] sm:$0xf]
    %v1144 = vld [vmem:[%s1141 + $0x8] sm:$0xf]
    %v1145 = vld [vmem:[%s1141 + $0xc] sm:$0xf]
    %v1150 = vunpack.c.l.b16 %v1142
    %v1151 = vunpack.c.l.b16 %v1143
    %v1152 = vunpack.c.l.b16 %v1144
    %v1153 = vunpack.c.l.b16 %v1145
    %v1154 = vpack.c.b16 %v1151, %v1150
    %v1155 = vpack.c.b16 %v1153, %v1152
    %v1157 = vsel %vm285, %v1154, 0
    %v1160 = vsel %vm285, %v1155, 0
    %1162 = vmatpush.bf16.msra.mxu0 0
    %1163 = vmatpush.bf16.msra.mxu0 0
    %1164 = vmatpush.bf16.msra.mxu0 0
    %1165 = vmatpush.bf16.msra.mxu0 0
    %1166 = vmatpush.bf16.msra.mxu0 0
    %1167 = vmatpush.bf16.msra.mxu0 0
    %1168 = vmatpush.bf16.msra.mxu0 %v1137
    %1169 = vmatpush.bf16.msra.mxu0 %v1133
    %1170 = vmatmul.bf16.gmra.mxu0 %v1157
    %v1171 = vpop.f32.mrf.mxu0
    %v1172 = vadd.f32 0.0, %v1171
    %v1173 = vpop.f32.mrf.mxu0
    %v1174 = vadd.f32 0.0, %v1173
    %1175 = vmatmul.bf16.gmra.mxu0 %v1160
    %v1176 = vpop.f32.mrf.mxu0
    %v1177 = vadd.f32 0.0, %v1176
    %v1178 = vpop.f32.mrf.mxu0
    %v1179 = vadd.f32 0.0, %v1178
    %1180 = vdwg.mxu0
    %1181 = vmatpush.bf16.msra.mxu0 0
    %1182 = vmatpush.bf16.msra.mxu0 0
    %1183 = vmatpush.bf16.msra.mxu0 0
    %1184 = vmatpush.bf16.msra.mxu0 0
    %1185 = vmatpush.bf16.msra.mxu0 0
    %1186 = vmatpush.bf16.msra.mxu0 0
    %1187 = vmatpush.bf16.msra.mxu0 %v1138
    %1188 = vmatpush.bf16.msra.mxu0 %v1134
    %1189 = vmatmul.bf16.gmra.mxu0 %v1157
    %v1190 = vpop.f32.mrf.mxu0
    %v1191 = vadd.f32 0.0, %v1190
    %v1192 = vpop.f32.mrf.mxu0
    %v1193 = vadd.f32 0.0, %v1192
    %1194 = vmatmul.bf16.gmra.mxu0 %v1160
    %v1195 = vpop.f32.mrf.mxu0
    %v1196 = vadd.f32 0.0, %v1195
    %v1197 = vpop.f32.mrf.mxu0
    %v1198 = vadd.f32 0.0, %v1197
    %1199 = vdwg.mxu0
    %1200 = vmatpush.bf16.msra.mxu0 0
    %1201 = vmatpush.bf16.msra.mxu0 0
    %1202 = vmatpush.bf16.msra.mxu0 0
    %1203 = vmatpush.bf16.msra.mxu0 0
    %1204 = vmatpush.bf16.msra.mxu0 0
    %1205 = vmatpush.bf16.msra.mxu0 0
    %1206 = vmatpush.bf16.msra.mxu0 %v1139
    %1207 = vmatpush.bf16.msra.mxu0 %v1135
    %1208 = vmatmul.bf16.gmra.mxu0 %v1157
    %v1209 = vpop.f32.mrf.mxu0
    %v1210 = vadd.f32 0.0, %v1209
    %v1211 = vpop.f32.mrf.mxu0
    %v1212 = vadd.f32 0.0, %v1211
    %1213 = vmatmul.bf16.gmra.mxu0 %v1160
    %v1214 = vpop.f32.mrf.mxu0
    %v1215 = vadd.f32 0.0, %v1214
    %v1216 = vpop.f32.mrf.mxu0
    %v1217 = vadd.f32 0.0, %v1216
    %1218 = vdwg.mxu0
    %1219 = vmatpush.bf16.msra.mxu0 0
    %1220 = vmatpush.bf16.msra.mxu0 0
    %1221 = vmatpush.bf16.msra.mxu0 0
    %1222 = vmatpush.bf16.msra.mxu0 0
    %1223 = vmatpush.bf16.msra.mxu0 0
    %1224 = vmatpush.bf16.msra.mxu0 0
    %1225 = vmatpush.bf16.msra.mxu0 %v1140
    %1226 = vmatpush.bf16.msra.mxu0 %v1136
    %1227 = vmatmul.bf16.gmra.mxu0 %v1157
    %v1228 = vpop.f32.mrf.mxu0
    %v1229 = vadd.f32 0.0, %v1228
    %v1230 = vpop.f32.mrf.mxu0
    %v1231 = vadd.f32 0.0, %v1230
    %1232 = vmatmul.bf16.gmra.mxu0 %v1160
    %v1233 = vpop.f32.mrf.mxu0
    %v1234 = vadd.f32 0.0, %v1233
    %v1235 = vpop.f32.mrf.mxu0
    %v1236 = vadd.f32 0.0, %v1235
    %1237 = vdwg.mxu0
    %v1242 = vunpack.c.l.b16 %v691
    %v1243 = vunpack.c.l.b16 %v692
    %v1244 = vunpack.c.l.b16 %v693
    %v1245 = vunpack.c.l.b16 %v694
    %v1246 = vpack.c.b16 %v1243, %v1242
    %v1247 = vpack.c.b16 %v1245, %v1244
    %v1249 = vsel %vm285, %v1246, 0
    %v1252 = vsel %vm285, %v1247, 0
    %1254 = vmatpush.bf16.msra.mxu0 0
    %1255 = vmatpush.bf16.msra.mxu0 0
    %1256 = vmatpush.bf16.msra.mxu0 0
    %1257 = vmatpush.bf16.msra.mxu0 0
    %1258 = vmatpush.bf16.msra.mxu0 0
    %1259 = vmatpush.bf16.msra.mxu0 0
    %1260 = vmatpush.bf16.msra.mxu0 %v687
    %1261 = vmatpush.bf16.msra.mxu0 %v683
    %1262 = vmatmul.bf16.gmra.mxu0 %v1249
    %v1263 = vpop.f32.mrf.mxu0
    %v1264 = vadd.f32 %v1172, %v1263
    %v1265 = vpop.f32.mrf.mxu0
    %v1266 = vadd.f32 %v1174, %v1265
    %1267 = vmatmul.bf16.gmra.mxu0 %v1252
    %v1268 = vpop.f32.mrf.mxu0
    %v1269 = vadd.f32 %v1177, %v1268
    %v1270 = vpop.f32.mrf.mxu0
    %v1271 = vadd.f32 %v1179, %v1270
    %1272 = vdwg.mxu0
    %1273 = vmatpush.bf16.msra.mxu0 0
    %1274 = vmatpush.bf16.msra.mxu0 0
    %1275 = vmatpush.bf16.msra.mxu0 0
    %1276 = vmatpush.bf16.msra.mxu0 0
    %1277 = vmatpush.bf16.msra.mxu0 0
    %1278 = vmatpush.bf16.msra.mxu0 0
    %1279 = vmatpush.bf16.msra.mxu0 %v688
    %1280 = vmatpush.bf16.msra.mxu0 %v684
    %1281 = vmatmul.bf16.gmra.mxu0 %v1249
    %v1282 = vpop.f32.mrf.mxu0
    %v1283 = vadd.f32 %v1191, %v1282
    %v1284 = vpop.f32.mrf.mxu0
    %v1285 = vadd.f32 %v1193, %v1284
    %1286 = vmatmul.bf16.gmra.mxu0 %v1252
    %v1287 = vpop.f32.mrf.mxu0
    %v1288 = vadd.f32 %v1196, %v1287
    %v1289 = vpop.f32.mrf.mxu0
    %v1290 = vadd.f32 %v1198, %v1289
    %1291 = vdwg.mxu0
    %1292 = vmatpush.bf16.msra.mxu0 0
    %1293 = vmatpush.bf16.msra.mxu0 0
    %1294 = vmatpush.bf16.msra.mxu0 0
    %1295 = vmatpush.bf16.msra.mxu0 0
    %1296 = vmatpush.bf16.msra.mxu0 0
    %1297 = vmatpush.bf16.msra.mxu0 0
    %1298 = vmatpush.bf16.msra.mxu0 %v689
    %1299 = vmatpush.bf16.msra.mxu0 %v685
    %1300 = vmatmul.bf16.gmra.mxu0 %v1249
    %v1301 = vpop.f32.mrf.mxu0
    %v1302 = vadd.f32 %v1210, %v1301
    %v1303 = vpop.f32.mrf.mxu0
    %v1304 = vadd.f32 %v1212, %v1303
    %1305 = vmatmul.bf16.gmra.mxu0 %v1252
    %v1306 = vpop.f32.mrf.mxu0
    %v1307 = vadd.f32 %v1215, %v1306
    %v1308 = vpop.f32.mrf.mxu0
    %v1309 = vadd.f32 %v1217, %v1308
    %1310 = vdwg.mxu0
    %1311 = vmatpush.bf16.msra.mxu0 0
    %1312 = vmatpush.bf16.msra.mxu0 0
    %1313 = vmatpush.bf16.msra.mxu0 0
    %1314 = vmatpush.bf16.msra.mxu0 0
    %1315 = vmatpush.bf16.msra.mxu0 0
    %1316 = vmatpush.bf16.msra.mxu0 0
    %1317 = vmatpush.bf16.msra.mxu0 %v690
    %1318 = vmatpush.bf16.msra.mxu0 %v686
    %1319 = vmatmul.bf16.gmra.mxu0 %v1249
    %v1320 = vpop.f32.mrf.mxu0
    %v1321 = vadd.f32 %v1229, %v1320
    %v1322 = vpop.f32.mrf.mxu0
    %v1323 = vadd.f32 %v1231, %v1322
    %1324 = vmatmul.bf16.gmra.mxu0 %v1252
    %v1325 = vpop.f32.mrf.mxu0
    %v1326 = vadd.f32 %v1234, %v1325
    %v1327 = vpop.f32.mrf.mxu0
    %v1328 = vadd.f32 %v1236, %v1327
    %1329 = vdwg.mxu0
    %s1330 = scalar_lea.vmem %s3, 32
    %v1331 = vld [vmem:[%s1330] sm:$0xf]
    %v1332 = vld [vmem:[%s1330 + $0x4] sm:$0xf]
    %v1333 = vld [vmem:[%s1330 + $0x8] sm:$0xf]
    %v1334 = vld [vmem:[%s1330 + $0xc] sm:$0xf]
    %s1335 = scalar_lea.vmem %s4, 64
    %v1336 = vld [vmem:[%s1335] sm:$0xff]
    %v1337 = vld [vmem:[%s1335 + $0x8] sm:$0xff]
    %v1338 = vld [vmem:[%s1335 + $0x10] sm:$0xff]
    %v1339 = vld [vmem:[%s1335 + $0x18] sm:$0xff]
    %1341 = vset.pattern.permute.xlu0 0
    %1342 = vperm.xlu0 %1341, %v1336
    %v1343 = vpop.permute.xlu0 %1342
    %1346 = vset.pattern.permute.xlu0 0
    %1347 = vperm.xlu0 %1346, %v1337
    %v1348 = vpop.permute.xlu0 %1347
    %1351 = vset.pattern.permute.xlu0 0
    %1352 = vperm.xlu0 %1351, %v1338
    %v1353 = vpop.permute.xlu0 %1352
    %1356 = vset.pattern.permute.xlu0 0
    %1357 = vperm.xlu0 %1356, %v1339
    %v1358 = vpop.permute.xlu0 %1357
    %v1364 = vunpack.c.l.b16 %v1331
    %v1365 = vunpack.c.l.b16 %v1332
    %v1366 = vunpack.c.l.b16 %v1333
    %v1367 = vunpack.c.l.b16 %v1334
    %v1368 = vpack.c.b16 %v1365, %v1364
    %v1369 = vpack.c.b16 %v1367, %v1366
    %v1371 = vsel %vm285, %v1368, 0
    %v1374 = vsel %vm285, %v1369, 0
    %1376 = vmatpush.bf16.msra.mxu0 0
    %1377 = vmatpush.bf16.msra.mxu0 0
    %1378 = vmatpush.bf16.msra.mxu0 0
    %1379 = vmatpush.bf16.msra.mxu0 0
    %1380 = vmatpush.bf16.msra.mxu0 0
    %1381 = vmatpush.bf16.msra.mxu0 0
    %1382 = vmatpush.bf16.msra.mxu0 %v1137
    %1383 = vmatpush.bf16.msra.mxu0 %v1133
    %1384 = vmatmul.bf16.gmra.mxu0 %v1371
    %v1385 = vpop.f32.mrf.mxu0
    %v1386 = vadd.f32 %v1343, %v1385
    %v1387 = vpop.f32.mrf.mxu0
    %v1388 = vadd.f32 %v1348, %v1387
    %1389 = vmatmul.bf16.gmra.mxu0 %v1374
    %v1390 = vpop.f32.mrf.mxu0
    %v1391 = vadd.f32 %v1353, %v1390
    %v1392 = vpop.f32.mrf.mxu0
    %v1393 = vadd.f32 %v1358, %v1392
    %1394 = vdwg.mxu0
    %1395 = vmatpush.bf16.msra.mxu0 0
    %1396 = vmatpush.bf16.msra.mxu0 0
    %1397 = vmatpush.bf16.msra.mxu0 0
    %1398 = vmatpush.bf16.msra.mxu0 0
    %1399 = vmatpush.bf16.msra.mxu0 0
    %1400 = vmatpush.bf16.msra.mxu0 0
    %1401 = vmatpush.bf16.msra.mxu0 %v1138
    %1402 = vmatpush.bf16.msra.mxu0 %v1134
    %1403 = vmatmul.bf16.gmra.mxu0 %v1371
    %v1404 = vpop.f32.mrf.mxu0
    %v1405 = vadd.f32 %v1343, %v1404
    %v1406 = vpop.f32.mrf.mxu0
    %v1407 = vadd.f32 %v1348, %v1406
    %1408 = vmatmul.bf16.gmra.mxu0 %v1374
    %v1409 = vpop.f32.mrf.mxu0
    %v1410 = vadd.f32 %v1353, %v1409
    %v1411 = vpop.f32.mrf.mxu0
    %v1412 = vadd.f32 %v1358, %v1411
    %1413 = vdwg.mxu0
    %1414 = vmatpush.bf16.msra.mxu0 0
    %1415 = vmatpush.bf16.msra.mxu0 0
    %1416 = vmatpush.bf16.msra.mxu0 0
    %1417 = vmatpush.bf16.msra.mxu0 0
    %1418 = vmatpush.bf16.msra.mxu0 0
    %1419 = vmatpush.bf16.msra.mxu0 0
    %1420 = vmatpush.bf16.msra.mxu0 %v1139
    %1421 = vmatpush.bf16.msra.mxu0 %v1135
    %1422 = vmatmul.bf16.gmra.mxu0 %v1371
    %v1423 = vpop.f32.mrf.mxu0
    %v1424 = vadd.f32 %v1343, %v1423
    %v1425 = vpop.f32.mrf.mxu0
    %v1426 = vadd.f32 %v1348, %v1425
    %1427 = vmatmul.bf16.gmra.mxu0 %v1374
    %v1428 = vpop.f32.mrf.mxu0
    %v1429 = vadd.f32 %v1353, %v1428
    %v1430 = vpop.f32.mrf.mxu0
    %v1431 = vadd.f32 %v1358, %v1430
    %1432 = vdwg.mxu0
    %1433 = vmatpush.bf16.msra.mxu0 0
    %1434 = vmatpush.bf16.msra.mxu0 0
    %1435 = vmatpush.bf16.msra.mxu0 0
    %1436 = vmatpush.bf16.msra.mxu0 0
    %1437 = vmatpush.bf16.msra.mxu0 0
    %1438 = vmatpush.bf16.msra.mxu0 0
    %1439 = vmatpush.bf16.msra.mxu0 %v1140
    %1440 = vmatpush.bf16.msra.mxu0 %v1136
    %1441 = vmatmul.bf16.gmra.mxu0 %v1371
    %v1442 = vpop.f32.mrf.mxu0
    %v1443 = vadd.f32 %v1343, %v1442
    %v1444 = vpop.f32.mrf.mxu0
    %v1445 = vadd.f32 %v1348, %v1444
    %1446 = vmatmul.bf16.gmra.mxu0 %v1374
    %v1447 = vpop.f32.mrf.mxu0
    %v1448 = vadd.f32 %v1353, %v1447
    %v1449 = vpop.f32.mrf.mxu0
    %v1450 = vadd.f32 %v1358, %v1449
    %1451 = vdwg.mxu0
    %v1452 = vmax.f32 %v1386, 0.0
    %v1453 = vmax.f32 %v1405, 0.0
    %v1454 = vmax.f32 %v1424, 0.0
    %v1455 = vmax.f32 %v1443, 0.0
    %v1456 = vmax.f32 %v1388, 0.0
    %v1457 = vmax.f32 %v1407, 0.0
    %v1458 = vmax.f32 %v1426, 0.0
    %v1459 = vmax.f32 %v1445, 0.0
    %v1460 = vmax.f32 %v1391, 0.0
    %v1461 = vmax.f32 %v1410, 0.0
    %v1462 = vmax.f32 %v1429, 0.0
    %v1463 = vmax.f32 %v1448, 0.0
    %v1464 = vmax.f32 %v1393, 0.0
    %v1465 = vmax.f32 %v1412, 0.0
    %v1466 = vmax.f32 %v1431, 0.0
    %v1467 = vmax.f32 %v1450, 0.0
    %v1468 = vpack.c.bf16 %v1456, %v1452
    %v1469 = vpack.c.bf16 %v1457, %v1453
    %v1470 = vpack.c.bf16 %v1458, %v1454
    %v1471 = vpack.c.bf16 %v1459, %v1455
    %v1472 = vpack.c.bf16 %v1464, %v1460
    %v1473 = vpack.c.bf16 %v1465, %v1461
    %v1474 = vpack.c.bf16 %v1466, %v1462
    %v1475 = vpack.c.bf16 %v1467, %v1463
    %1476 = vmax.xlane.f32.xlu0 %v1452
    %v1477 = vpop.xlane.xlu0 %1476
    %1478 = vmax.xlane.f32.xlu0 %v1456
    %v1479 = vpop.xlane.xlu0 %1478
    %1480 = vmax.xlane.f32.xlu0 %v1460
    %v1481 = vpop.xlane.xlu0 %1480
    %1482 = vmax.xlane.f32.xlu0 %v1464
    %v1483 = vpop.xlane.xlu0 %1482
    %1484 = vmax.xlane.f32.xlu0 %v1453
    %v1485 = vpop.xlane.xlu0 %1484
    %1486 = vmax.xlane.f32.xlu0 %v1457
    %v1487 = vpop.xlane.xlu0 %1486
    %1488 = vmax.xlane.f32.xlu0 %v1461
    %v1489 = vpop.xlane.xlu0 %1488
    %1490 = vmax.xlane.f32.xlu0 %v1465
    %v1491 = vpop.xlane.xlu0 %1490
    %1492 = vmax.xlane.f32.xlu0 %v1454
    %v1493 = vpop.xlane.xlu0 %1492
    %1494 = vmax.xlane.f32.xlu0 %v1458
    %v1495 = vpop.xlane.xlu0 %1494
    %1496 = vmax.xlane.f32.xlu0 %v1462
    %v1497 = vpop.xlane.xlu0 %1496
    %1498 = vmax.xlane.f32.xlu0 %v1466
    %v1499 = vpop.xlane.xlu0 %1498
    %1500 = vmax.xlane.f32.xlu0 %v1455
    %v1501 = vpop.xlane.xlu0 %1500
    %1502 = vmax.xlane.f32.xlu0 %v1459
    %v1503 = vpop.xlane.xlu0 %1502
    %1504 = vmax.xlane.f32.xlu0 %v1463
    %v1505 = vpop.xlane.xlu0 %1504
    %1506 = vmax.xlane.f32.xlu0 %v1467
    %v1507 = vpop.xlane.xlu0 %1506
    %v1508 = vsel %vm424, %v1477, %v1485
    %v1509 = vsel %vm424, %v1479, %v1487
    %v1510 = vsel %vm424, %v1481, %v1489
    %v1511 = vsel %vm424, %v1483, %v1491
    %v1512 = vsel %vm429, %v1508, %v1493
    %v1513 = vsel %vm429, %v1509, %v1495
    %v1514 = vsel %vm429, %v1510, %v1497
    %v1515 = vsel %vm429, %v1511, %v1499
    %v1516 = vsel %vm81, %v1512, %v1501
    %v1517 = vsel %vm81, %v1513, %v1503
    %v1518 = vsel %vm81, %v1514, %v1505
    %v1519 = vsel %vm81, %v1515, %v1507
    %s1520 = scalar_lea.vmem %s6, 32
    %v1521 = vld [vmem:[%s1520] sm:$0xf]
    %v1522 = vld [vmem:[%s1520 + $0x4] sm:$0xf]
    %v1523 = vld [vmem:[%s1520 + $0x8] sm:$0xf]
    %v1524 = vld [vmem:[%s1520 + $0xc] sm:$0xf]
    %v1525 = vpack.c.bf16 %v1517, %v1516
    %v1526 = vpack.c.bf16 %v1519, %v1518
    %s1527 = scalar_lea.vmem %s7, 64
    %v1528 = vld [vmem:[%s1527] sm:$0xff]
    %v1529 = vld [vmem:[%s1527 + $0x8] sm:$0xff]
    %v1530 = vld [vmem:[%s1527 + $0x10] sm:$0xff]
    %v1531 = vld [vmem:[%s1527 + $0x18] sm:$0xff]
    %1533 = vset.pattern.permute.xlu0 0
    %1534 = vperm.xlu0 %1533, %v1528
    %v1535 = vpop.permute.xlu0 %1534
    %1538 = vset.pattern.permute.xlu0 0
    %1539 = vperm.xlu0 %1538, %v1529
    %v1540 = vpop.permute.xlu0 %1539
    %1543 = vset.pattern.permute.xlu0 0
    %1544 = vperm.xlu0 %1543, %v1530
    %v1545 = vpop.permute.xlu0 %1544
    %1548 = vset.pattern.permute.xlu0 0
    %1549 = vperm.xlu0 %1548, %v1531
    %v1550 = vpop.permute.xlu0 %1549
    %v1556 = vunpack.c.l.b16 %v1521
    %v1557 = vunpack.c.l.b16 %v1522
    %v1558 = vunpack.c.l.b16 %v1523
    %v1559 = vunpack.c.l.b16 %v1524
    %v1560 = vpack.c.b16 %v1557, %v1556
    %v1561 = vpack.c.b16 %v1559, %v1558
    %v1563 = vsel %vm285, %v1560, 0
    %v1566 = vsel %vm285, %v1561, 0
    %1568 = vmatpush.bf16.msra.mxu0 0
    %1569 = vmatpush.bf16.msra.mxu0 0
    %1570 = vmatpush.bf16.msra.mxu0 0
    %1571 = vmatpush.bf16.msra.mxu0 0
    %1572 = vmatpush.bf16.msra.mxu0 0
    %1573 = vmatpush.bf16.msra.mxu0 0
    %1574 = vmatpush.bf16.msra.mxu0 %v1526
    %1575 = vmatpush.bf16.msra.mxu0 %v1525
    %1576 = vmatmul.bf16.gmra.mxu0 %v1563
    %v1577 = vpop.f32.mrf.mxu0
    %v1578 = vadd.f32 %v1535, %v1577
    %v1579 = vpop.f32.mrf.mxu0
    %v1580 = vadd.f32 %v1540, %v1579
    %1581 = vmatmul.bf16.gmra.mxu0 %v1566
    %v1582 = vpop.f32.mrf.mxu0
    %v1583 = vadd.f32 %v1545, %v1582
    %v1584 = vpop.f32.mrf.mxu0
    %v1585 = vadd.f32 %v1550, %v1584
    %1586 = vdwg.mxu0
    %1588 = vset.pattern.permute.xlu0 0
    %1589 = vperm.xlu0 %1588, %v1578
    %v1590 = vpop.permute.xlu0 %1589
    %1593 = vset.pattern.permute.xlu0 0
    %1594 = vperm.xlu0 %1593, %v1580
    %v1595 = vpop.permute.xlu0 %1594
    %1598 = vset.pattern.permute.xlu0 0
    %1599 = vperm.xlu0 %1598, %v1583
    %v1600 = vpop.permute.xlu0 %1599
    %1603 = vset.pattern.permute.xlu0 0
    %1604 = vperm.xlu0 %1603, %v1585
    %v1605 = vpop.permute.xlu0 %1604
    %1607 = vset.pattern.permute.xlu0 1
    %1608 = vperm.xlu0 %1607, %v1578
    %v1609 = vpop.permute.xlu0 %1608
    %1611 = vset.pattern.permute.xlu0 1
    %1612 = vperm.xlu0 %1611, %v1580
    %v1613 = vpop.permute.xlu0 %1612
    %1615 = vset.pattern.permute.xlu0 1
    %1616 = vperm.xlu0 %1615, %v1583
    %v1617 = vpop.permute.xlu0 %1616
    %1619 = vset.pattern.permute.xlu0 1
    %1620 = vperm.xlu0 %1619, %v1585
    %v1621 = vpop.permute.xlu0 %1620
    %1623 = vset.pattern.permute.xlu0 2
    %1624 = vperm.xlu0 %1623, %v1578
    %v1625 = vpop.permute.xlu0 %1624
    %1627 = vset.pattern.permute.xlu0 2
    %1628 = vperm.xlu0 %1627, %v1580
    %v1629 = vpop.permute.xlu0 %1628
    %1631 = vset.pattern.permute.xlu0 2
    %1632 = vperm.xlu0 %1631, %v1583
    %v1633 = vpop.permute.xlu0 %1632
    %1635 = vset.pattern.permute.xlu0 2
    %1636 = vperm.xlu0 %1635, %v1585
    %v1637 = vpop.permute.xlu0 %1636
    %1639 = vset.pattern.permute.xlu0 3
    %1640 = vperm.xlu0 %1639, %v1578
    %v1641 = vpop.permute.xlu0 %1640
    %1643 = vset.pattern.permute.xlu0 3
    %1644 = vperm.xlu0 %1643, %v1580
    %v1645 = vpop.permute.xlu0 %1644
    %1647 = vset.pattern.permute.xlu0 3
    %1648 = vperm.xlu0 %1647, %v1583
    %v1649 = vpop.permute.xlu0 %1648
    %1651 = vset.pattern.permute.xlu0 3
    %1652 = vperm.xlu0 %1651, %v1585
    %v1653 = vpop.permute.xlu0 %1652
    %s1655 = scalar_lea.vmem %s5, 32
    %v1656 = vld [vmem:[%s1655] sm:$0xf]
    %v1657 = vld [vmem:[%s1655 + $0x4] sm:$0xf]
    %v1658 = vld [vmem:[%s1655 + $0x8] sm:$0xf]
    %v1659 = vld [vmem:[%s1655 + $0xc] sm:$0xf]
    %v1664 = vunpack.c.l.b16 %v1656
    %v1665 = vunpack.c.l.b16 %v1657
    %v1666 = vunpack.c.l.b16 %v1658
    %v1667 = vunpack.c.l.b16 %v1659
    %v1668 = vpack.c.b16 %v1665, %v1664
    %v1669 = vpack.c.b16 %v1667, %v1666
    %v1671 = vsel %vm285, %v1668, 0
    %v1674 = vsel %vm285, %v1669, 0
    %1676 = vmatpush.bf16.msra.mxu0 0
    %1677 = vmatpush.bf16.msra.mxu0 0
    %1678 = vmatpush.bf16.msra.mxu0 0
    %1679 = vmatpush.bf16.msra.mxu0 0
    %1680 = vmatpush.bf16.msra.mxu0 0
    %1681 = vmatpush.bf16.msra.mxu0 0
    %1682 = vmatpush.bf16.msra.mxu0 %v1472
    %1683 = vmatpush.bf16.msra.mxu0 %v1468
    %1684 = vmatmul.bf16.gmra.mxu0 %v1671
    %v1685 = vpop.f32.mrf.mxu0
    %v1686 = vadd.f32 %v1590, %v1685
    %v1687 = vpop.f32.mrf.mxu0
    %v1688 = vadd.f32 %v1595, %v1687
    %1689 = vmatmul.bf16.gmra.mxu0 %v1674
    %v1690 = vpop.f32.mrf.mxu0
    %v1691 = vadd.f32 %v1600, %v1690
    %v1692 = vpop.f32.mrf.mxu0
    %v1693 = vadd.f32 %v1605, %v1692
    %1694 = vdwg.mxu0
    %1695 = vmatpush.bf16.msra.mxu0 0
    %1696 = vmatpush.bf16.msra.mxu0 0
    %1697 = vmatpush.bf16.msra.mxu0 0
    %1698 = vmatpush.bf16.msra.mxu0 0
    %1699 = vmatpush.bf16.msra.mxu0 0
    %1700 = vmatpush.bf16.msra.mxu0 0
    %1701 = vmatpush.bf16.msra.mxu0 %v1473
    %1702 = vmatpush.bf16.msra.mxu0 %v1469
    %1703 = vmatmul.bf16.gmra.mxu0 %v1671
    %v1704 = vpop.f32.mrf.mxu0
    %v1705 = vadd.f32 %v1609, %v1704
    %v1706 = vpop.f32.mrf.mxu0
    %v1707 = vadd.f32 %v1613, %v1706
    %1708 = vmatmul.bf16.gmra.mxu0 %v1674
    %v1709 = vpop.f32.mrf.mxu0
    %v1710 = vadd.f32 %v1617, %v1709
    %v1711 = vpop.f32.mrf.mxu0
    %v1712 = vadd.f32 %v1621, %v1711
    %1713 = vdwg.mxu0
    %1714 = vmatpush.bf16.msra.mxu0 0
    %1715 = vmatpush.bf16.msra.mxu0 0
    %1716 = vmatpush.bf16.msra.mxu0 0
    %1717 = vmatpush.bf16.msra.mxu0 0
    %1718 = vmatpush.bf16.msra.mxu0 0
    %1719 = vmatpush.bf16.msra.mxu0 0
    %1720 = vmatpush.bf16.msra.mxu0 %v1474
    %1721 = vmatpush.bf16.msra.mxu0 %v1470
    %1722 = vmatmul.bf16.gmra.mxu0 %v1671
    %v1723 = vpop.f32.mrf.mxu0
    %v1724 = vadd.f32 %v1625, %v1723
    %v1725 = vpop.f32.mrf.mxu0
    %v1726 = vadd.f32 %v1629, %v1725
    %1727 = vmatmul.bf16.gmra.mxu0 %v1674
    %v1728 = vpop.f32.mrf.mxu0
    %v1729 = vadd.f32 %v1633, %v1728
    %v1730 = vpop.f32.mrf.mxu0
    %v1731 = vadd.f32 %v1637, %v1730
    %1732 = vdwg.mxu0
    %1733 = vmatpush.bf16.msra.mxu0 0
    %1734 = vmatpush.bf16.msra.mxu0 0
    %1735 = vmatpush.bf16.msra.mxu0 0
    %1736 = vmatpush.bf16.msra.mxu0 0
    %1737 = vmatpush.bf16.msra.mxu0 0
    %1738 = vmatpush.bf16.msra.mxu0 0
    %1739 = vmatpush.bf16.msra.mxu0 %v1475
    %1740 = vmatpush.bf16.msra.mxu0 %v1471
    %1741 = vmatmul.bf16.gmra.mxu0 %v1671
    %v1742 = vpop.f32.mrf.mxu0
    %v1743 = vadd.f32 %v1641, %v1742
    %v1744 = vpop.f32.mrf.mxu0
    %v1745 = vadd.f32 %v1645, %v1744
    %1746 = vmatmul.bf16.gmra.mxu0 %v1674
    %v1747 = vpop.f32.mrf.mxu0
    %v1748 = vadd.f32 %v1649, %v1747
    %v1749 = vpop.f32.mrf.mxu0
    %v1750 = vadd.f32 %v1653, %v1749
    %1751 = vdwg.mxu0
    %v1752 = vmax.f32 %v1686, 0.0
    %v1753 = vmax.f32 %v1705, 0.0
    %v1754 = vmax.f32 %v1724, 0.0
    %v1755 = vmax.f32 %v1743, 0.0
    %v1756 = vmax.f32 %v1688, 0.0
    %v1757 = vmax.f32 %v1707, 0.0
    %v1758 = vmax.f32 %v1726, 0.0
    %v1759 = vmax.f32 %v1745, 0.0
    %v1760 = vmax.f32 %v1691, 0.0
    %v1761 = vmax.f32 %v1710, 0.0
    %v1762 = vmax.f32 %v1729, 0.0
    %v1763 = vmax.f32 %v1748, 0.0
    %v1764 = vmax.f32 %v1693, 0.0
    %v1765 = vmax.f32 %v1712, 0.0
    %v1766 = vmax.f32 %v1731, 0.0
    %v1767 = vmax.f32 %v1750, 0.0
    %v1768 = vpack.c.bf16 %v1756, %v1752
    %v1769 = vpack.c.bf16 %v1757, %v1753
    %v1770 = vpack.c.bf16 %v1758, %v1754
    %v1771 = vpack.c.bf16 %v1759, %v1755
    %v1772 = vpack.c.bf16 %v1764, %v1760
    %v1773 = vpack.c.bf16 %v1765, %v1761
    %v1774 = vpack.c.bf16 %v1766, %v1762
    %v1775 = vpack.c.bf16 %v1767, %v1763
    %s1776 = scalar_lea.vmem %s8, 32
    %v1777 = vld [vmem:[%s1776] sm:$0xf]
    %v1778 = vld [vmem:[%s1776 + $0x4] sm:$0xf]
    %v1779 = vld [vmem:[%s1776 + $0x8] sm:$0xf]
    %v1780 = vld [vmem:[%s1776 + $0xc] sm:$0xf]
    %v1785 = vunpack.c.l.b16 %v1777
    %v1786 = vunpack.c.l.b16 %v1778
    %v1787 = vunpack.c.l.b16 %v1779
    %v1788 = vunpack.c.l.b16 %v1780
    %v1789 = vpack.c.b16 %v1786, %v1785
    %v1790 = vpack.c.b16 %v1788, %v1787
    %v1792 = vsel %vm285, %v1789, 0
    %v1795 = vsel %vm285, %v1790, 0
    %1797 = vmatpush.bf16.msra.mxu0 0
    %1798 = vmatpush.bf16.msra.mxu0 0
    %1799 = vmatpush.bf16.msra.mxu0 0
    %1800 = vmatpush.bf16.msra.mxu0 0
    %1801 = vmatpush.bf16.msra.mxu0 0
    %1802 = vmatpush.bf16.msra.mxu0 0
    %1803 = vmatpush.bf16.msra.mxu0 %v1772
    %1804 = vmatpush.bf16.msra.mxu0 %v1768
    %1805 = vmatmul.bf16.gmra.mxu0 %v1792
    %v1806 = vpop.f32.mrf.mxu0
    %v1807 = vadd.f32 0.0, %v1806
    %v1808 = vpop.f32.mrf.mxu0
    %v1809 = vadd.f32 0.0, %v1808
    %1810 = vmatmul.bf16.gmra.mxu0 %v1795
    %v1811 = vpop.f32.mrf.mxu0
    %v1812 = vadd.f32 0.0, %v1811
    %v1813 = vpop.f32.mrf.mxu0
    %v1814 = vadd.f32 0.0, %v1813
    %1815 = vdwg.mxu0
    %1816 = vmatpush.bf16.msra.mxu0 0
    %1817 = vmatpush.bf16.msra.mxu0 0
    %1818 = vmatpush.bf16.msra.mxu0 0
    %1819 = vmatpush.bf16.msra.mxu0 0
    %1820 = vmatpush.bf16.msra.mxu0 0
    %1821 = vmatpush.bf16.msra.mxu0 0
    %1822 = vmatpush.bf16.msra.mxu0 %v1773
    %1823 = vmatpush.bf16.msra.mxu0 %v1769
    %1824 = vmatmul.bf16.gmra.mxu0 %v1792
    %v1825 = vpop.f32.mrf.mxu0
    %v1826 = vadd.f32 0.0, %v1825
    %v1827 = vpop.f32.mrf.mxu0
    %v1828 = vadd.f32 0.0, %v1827
    %1829 = vmatmul.bf16.gmra.mxu0 %v1795
    %v1830 = vpop.f32.mrf.mxu0
    %v1831 = vadd.f32 0.0, %v1830
    %v1832 = vpop.f32.mrf.mxu0
    %v1833 = vadd.f32 0.0, %v1832
    %1834 = vdwg.mxu0
    %1835 = vmatpush.bf16.msra.mxu0 0
    %1836 = vmatpush.bf16.msra.mxu0 0
    %1837 = vmatpush.bf16.msra.mxu0 0
    %1838 = vmatpush.bf16.msra.mxu0 0
    %1839 = vmatpush.bf16.msra.mxu0 0
    %1840 = vmatpush.bf16.msra.mxu0 0
    %1841 = vmatpush.bf16.msra.mxu0 %v1774
    %1842 = vmatpush.bf16.msra.mxu0 %v1770
    %1843 = vmatmul.bf16.gmra.mxu0 %v1792
    %v1844 = vpop.f32.mrf.mxu0
    %v1845 = vadd.f32 0.0, %v1844
    %v1846 = vpop.f32.mrf.mxu0
    %v1847 = vadd.f32 0.0, %v1846
    %1848 = vmatmul.bf16.gmra.mxu0 %v1795
    %v1849 = vpop.f32.mrf.mxu0
    %v1850 = vadd.f32 0.0, %v1849
    %v1851 = vpop.f32.mrf.mxu0
    %v1852 = vadd.f32 0.0, %v1851
    %1853 = vdwg.mxu0
    %1854 = vmatpush.bf16.msra.mxu0 0
    %1855 = vmatpush.bf16.msra.mxu0 0
    %1856 = vmatpush.bf16.msra.mxu0 0
    %1857 = vmatpush.bf16.msra.mxu0 0
    %1858 = vmatpush.bf16.msra.mxu0 0
    %1859 = vmatpush.bf16.msra.mxu0 0
    %1860 = vmatpush.bf16.msra.mxu0 %v1775
    %1861 = vmatpush.bf16.msra.mxu0 %v1771
    %1862 = vmatmul.bf16.gmra.mxu0 %v1792
    %v1863 = vpop.f32.mrf.mxu0
    %v1864 = vadd.f32 0.0, %v1863
    %v1865 = vpop.f32.mrf.mxu0
    %v1866 = vadd.f32 0.0, %v1865
    %1867 = vmatmul.bf16.gmra.mxu0 %v1795
    %v1868 = vpop.f32.mrf.mxu0
    %v1869 = vadd.f32 0.0, %v1868
    %v1870 = vpop.f32.mrf.mxu0
    %v1871 = vadd.f32 0.0, %v1870
    %1872 = vdwg.mxu0
    %v1873 = vadd.f32 %v1264, %v1807
    %v1874 = vadd.f32 %v1283, %v1826
    %v1875 = vadd.f32 %v1302, %v1845
    %v1876 = vadd.f32 %v1321, %v1864
    %v1877 = vadd.f32 %v1266, %v1809
    %v1878 = vadd.f32 %v1285, %v1828
    %v1879 = vadd.f32 %v1304, %v1847
    %v1880 = vadd.f32 %v1323, %v1866
    %v1881 = vadd.f32 %v1269, %v1812
    %v1882 = vadd.f32 %v1288, %v1831
    %v1883 = vadd.f32 %v1307, %v1850
    %v1884 = vadd.f32 %v1326, %v1869
    %v1885 = vadd.f32 %v1271, %v1814
    %v1886 = vadd.f32 %v1290, %v1833
    %v1887 = vadd.f32 %v1309, %v1852
    %v1888 = vadd.f32 %v1328, %v1871
    %s1889 = scalar_lea.vmem %s3, 48
    %v1890 = vld [vmem:[%s1889] sm:$0xf]
    %v1891 = vld [vmem:[%s1889 + $0x4] sm:$0xf]
    %v1892 = vld [vmem:[%s1889 + $0x8] sm:$0xf]
    %v1893 = vld [vmem:[%s1889 + $0xc] sm:$0xf]
    %s1894 = scalar_lea.vmem %s4, 96
    %v1895 = vld [vmem:[%s1894] sm:$0xff]
    %v1896 = vld [vmem:[%s1894 + $0x8] sm:$0xff]
    %v1897 = vld [vmem:[%s1894 + $0x10] sm:$0xff]
    %v1898 = vld [vmem:[%s1894 + $0x18] sm:$0xff]
    %1900 = vset.pattern.permute.xlu0 0
    %1901 = vperm.xlu0 %1900, %v1895
    %v1902 = vpop.permute.xlu0 %1901
    %1905 = vset.pattern.permute.xlu0 0
    %1906 = vperm.xlu0 %1905, %v1896
    %v1907 = vpop.permute.xlu0 %1906
    %1910 = vset.pattern.permute.xlu0 0
    %1911 = vperm.xlu0 %1910, %v1897
    %v1912 = vpop.permute.xlu0 %1911
    %1915 = vset.pattern.permute.xlu0 0
    %1916 = vperm.xlu0 %1915, %v1898
    %v1917 = vpop.permute.xlu0 %1916
    %v1923 = vunpack.c.l.b16 %v1890
    %v1924 = vunpack.c.l.b16 %v1891
    %v1925 = vunpack.c.l.b16 %v1892
    %v1926 = vunpack.c.l.b16 %v1893
    %v1927 = vpack.c.b16 %v1924, %v1923
    %v1928 = vpack.c.b16 %v1926, %v1925
    %v1930 = vsel %vm285, %v1927, 0
    %v1933 = vsel %vm285, %v1928, 0
    %1935 = vmatpush.bf16.msra.mxu0 0
    %1936 = vmatpush.bf16.msra.mxu0 0
    %1937 = vmatpush.bf16.msra.mxu0 0
    %1938 = vmatpush.bf16.msra.mxu0 0
    %1939 = vmatpush.bf16.msra.mxu0 0
    %1940 = vmatpush.bf16.msra.mxu0 0
    %1941 = vmatpush.bf16.msra.mxu0 %v1772
    %1942 = vmatpush.bf16.msra.mxu0 %v1768
    %1943 = vmatmul.bf16.gmra.mxu0 %v1930
    %v1944 = vpop.f32.mrf.mxu0
    %v1945 = vadd.f32 %v1902, %v1944
    %v1946 = vpop.f32.mrf.mxu0
    %v1947 = vadd.f32 %v1907, %v1946
    %1948 = vmatmul.bf16.gmra.mxu0 %v1933
    %v1949 = vpop.f32.mrf.mxu0
    %v1950 = vadd.f32 %v1912, %v1949
    %v1951 = vpop.f32.mrf.mxu0
    %v1952 = vadd.f32 %v1917, %v1951
    %1953 = vdwg.mxu0
    %1954 = vmatpush.bf16.msra.mxu0 0
    %1955 = vmatpush.bf16.msra.mxu0 0
    %1956 = vmatpush.bf16.msra.mxu0 0
    %1957 = vmatpush.bf16.msra.mxu0 0
    %1958 = vmatpush.bf16.msra.mxu0 0
    %1959 = vmatpush.bf16.msra.mxu0 0
    %1960 = vmatpush.bf16.msra.mxu0 %v1773
    %1961 = vmatpush.bf16.msra.mxu0 %v1769
    %1962 = vmatmul.bf16.gmra.mxu0 %v1930
    %v1963 = vpop.f32.mrf.mxu0
    %v1964 = vadd.f32 %v1902, %v1963
    %v1965 = vpop.f32.mrf.mxu0
    %v1966 = vadd.f32 %v1907, %v1965
    %1967 = vmatmul.bf16.gmra.mxu0 %v1933
    %v1968 = vpop.f32.mrf.mxu0
    %v1969 = vadd.f32 %v1912, %v1968
    %v1970 = vpop.f32.mrf.mxu0
    %v1971 = vadd.f32 %v1917, %v1970
    %1972 = vdwg.mxu0
    %1973 = vmatpush.bf16.msra.mxu0 0
    %1974 = vmatpush.bf16.msra.mxu0 0
    %1975 = vmatpush.bf16.msra.mxu0 0
    %1976 = vmatpush.bf16.msra.mxu0 0
    %1977 = vmatpush.bf16.msra.mxu0 0
    %1978 = vmatpush.bf16.msra.mxu0 0
    %1979 = vmatpush.bf16.msra.mxu0 %v1774
    %1980 = vmatpush.bf16.msra.mxu0 %v1770
    %1981 = vmatmul.bf16.gmra.mxu0 %v1930
    %v1982 = vpop.f32.mrf.mxu0
    %v1983 = vadd.f32 %v1902, %v1982
    %v1984 = vpop.f32.mrf.mxu0
    %v1985 = vadd.f32 %v1907, %v1984
    %1986 = vmatmul.bf16.gmra.mxu0 %v1933
    %v1987 = vpop.f32.mrf.mxu0
    %v1988 = vadd.f32 %v1912, %v1987
    %v1989 = vpop.f32.mrf.mxu0
    %v1990 = vadd.f32 %v1917, %v1989
    %1991 = vdwg.mxu0
    %1992 = vmatpush.bf16.msra.mxu0 0
    %1993 = vmatpush.bf16.msra.mxu0 0
    %1994 = vmatpush.bf16.msra.mxu0 0
    %1995 = vmatpush.bf16.msra.mxu0 0
    %1996 = vmatpush.bf16.msra.mxu0 0
    %1997 = vmatpush.bf16.msra.mxu0 0
    %1998 = vmatpush.bf16.msra.mxu0 %v1775
    %1999 = vmatpush.bf16.msra.mxu0 %v1771
    %2000 = vmatmul.bf16.gmra.mxu0 %v1930
    %v2001 = vpop.f32.mrf.mxu0
    %v2002 = vadd.f32 %v1902, %v2001
    %v2003 = vpop.f32.mrf.mxu0
    %v2004 = vadd.f32 %v1907, %v2003
    %2005 = vmatmul.bf16.gmra.mxu0 %v1933
    %v2006 = vpop.f32.mrf.mxu0
    %v2007 = vadd.f32 %v1912, %v2006
    %v2008 = vpop.f32.mrf.mxu0
    %v2009 = vadd.f32 %v1917, %v2008
    %2010 = vdwg.mxu0
    %v2011 = vmax.f32 %v1945, 0.0
    %v2012 = vmax.f32 %v1964, 0.0
    %v2013 = vmax.f32 %v1983, 0.0
    %v2014 = vmax.f32 %v2002, 0.0
    %v2015 = vmax.f32 %v1947, 0.0
    %v2016 = vmax.f32 %v1966, 0.0
    %v2017 = vmax.f32 %v1985, 0.0
    %v2018 = vmax.f32 %v2004, 0.0
    %v2019 = vmax.f32 %v1950, 0.0
    %v2020 = vmax.f32 %v1969, 0.0
    %v2021 = vmax.f32 %v1988, 0.0
    %v2022 = vmax.f32 %v2007, 0.0
    %v2023 = vmax.f32 %v1952, 0.0
    %v2024 = vmax.f32 %v1971, 0.0
    %v2025 = vmax.f32 %v1990, 0.0
    %v2026 = vmax.f32 %v2009, 0.0
    %v2027 = vpack.c.bf16 %v2015, %v2011
    %v2028 = vpack.c.bf16 %v2016, %v2012
    %v2029 = vpack.c.bf16 %v2017, %v2013
    %v2030 = vpack.c.bf16 %v2018, %v2014
    %v2031 = vpack.c.bf16 %v2023, %v2019
    %v2032 = vpack.c.bf16 %v2024, %v2020
    %v2033 = vpack.c.bf16 %v2025, %v2021
    %v2034 = vpack.c.bf16 %v2026, %v2022
    %2035 = vmax.xlane.f32.xlu0 %v2011
    %v2036 = vpop.xlane.xlu0 %2035
    %2037 = vmax.xlane.f32.xlu0 %v2015
    %v2038 = vpop.xlane.xlu0 %2037
    %2039 = vmax.xlane.f32.xlu0 %v2019
    %v2040 = vpop.xlane.xlu0 %2039
    %2041 = vmax.xlane.f32.xlu0 %v2023
    %v2042 = vpop.xlane.xlu0 %2041
    %2043 = vmax.xlane.f32.xlu0 %v2012
    %v2044 = vpop.xlane.xlu0 %2043
    %2045 = vmax.xlane.f32.xlu0 %v2016
    %v2046 = vpop.xlane.xlu0 %2045
    %2047 = vmax.xlane.f32.xlu0 %v2020
    %v2048 = vpop.xlane.xlu0 %2047
    %2049 = vmax.xlane.f32.xlu0 %v2024
    %v2050 = vpop.xlane.xlu0 %2049
    %2051 = vmax.xlane.f32.xlu0 %v2013
    %v2052 = vpop.xlane.xlu0 %2051
    %2053 = vmax.xlane.f32.xlu0 %v2017
    %v2054 = vpop.xlane.xlu0 %2053
    %2055 = vmax.xlane.f32.xlu0 %v2021
    %v2056 = vpop.xlane.xlu0 %2055
    %2057 = vmax.xlane.f32.xlu0 %v2025
    %v2058 = vpop.xlane.xlu0 %2057
    %2059 = vmax.xlane.f32.xlu0 %v2014
    %v2060 = vpop.xlane.xlu0 %2059
    %2061 = vmax.xlane.f32.xlu0 %v2018
    %v2062 = vpop.xlane.xlu0 %2061
    %2063 = vmax.xlane.f32.xlu0 %v2022
    %v2064 = vpop.xlane.xlu0 %2063
    %2065 = vmax.xlane.f32.xlu0 %v2026
    %v2066 = vpop.xlane.xlu0 %2065
    %v2067 = vsel %vm424, %v2036, %v2044
    %v2068 = vsel %vm424, %v2038, %v2046
    %v2069 = vsel %vm424, %v2040, %v2048
    %v2070 = vsel %vm424, %v2042, %v2050
    %v2071 = vsel %vm429, %v2067, %v2052
    %v2072 = vsel %vm429, %v2068, %v2054
    %v2073 = vsel %vm429, %v2069, %v2056
    %v2074 = vsel %vm429, %v2070, %v2058
    %v2075 = vsel %vm81, %v2071, %v2060
    %v2076 = vsel %vm81, %v2072, %v2062
    %v2077 = vsel %vm81, %v2073, %v2064
    %v2078 = vsel %vm81, %v2074, %v2066
    %s2079 = scalar_lea.vmem %s6, 48
    %v2080 = vld [vmem:[%s2079] sm:$0xf]
    %v2081 = vld [vmem:[%s2079 + $0x4] sm:$0xf]
    %v2082 = vld [vmem:[%s2079 + $0x8] sm:$0xf]
    %v2083 = vld [vmem:[%s2079 + $0xc] sm:$0xf]
    %v2084 = vpack.c.bf16 %v2076, %v2075
    %v2085 = vpack.c.bf16 %v2078, %v2077
    %s2086 = scalar_lea.vmem %s7, 96
    %v2087 = vld [vmem:[%s2086] sm:$0xff]
    %v2088 = vld [vmem:[%s2086 + $0x8] sm:$0xff]
    %v2089 = vld [vmem:[%s2086 + $0x10] sm:$0xff]
    %v2090 = vld [vmem:[%s2086 + $0x18] sm:$0xff]
    %2092 = vset.pattern.permute.xlu0 0
    %2093 = vperm.xlu0 %2092, %v2087
    %v2094 = vpop.permute.xlu0 %2093
    %2097 = vset.pattern.permute.xlu0 0
    %2098 = vperm.xlu0 %2097, %v2088
    %v2099 = vpop.permute.xlu0 %2098
    %2102 = vset.pattern.permute.xlu0 0
    %2103 = vperm.xlu0 %2102, %v2089
    %v2104 = vpop.permute.xlu0 %2103
    %2107 = vset.pattern.permute.xlu0 0
    %2108 = vperm.xlu0 %2107, %v2090
    %v2109 = vpop.permute.xlu0 %2108
    %v2115 = vunpack.c.l.b16 %v2080
    %v2116 = vunpack.c.l.b16 %v2081
    %v2117 = vunpack.c.l.b16 %v2082
    %v2118 = vunpack.c.l.b16 %v2083
    %v2119 = vpack.c.b16 %v2116, %v2115
    %v2120 = vpack.c.b16 %v2118, %v2117
    %v2122 = vsel %vm285, %v2119, 0
    %v2125 = vsel %vm285, %v2120, 0
    %2127 = vmatpush.bf16.msra.mxu0 0
    %2128 = vmatpush.bf16.msra.mxu0 0
    %2129 = vmatpush.bf16.msra.mxu0 0
    %2130 = vmatpush.bf16.msra.mxu0 0
    %2131 = vmatpush.bf16.msra.mxu0 0
    %2132 = vmatpush.bf16.msra.mxu0 0
    %2133 = vmatpush.bf16.msra.mxu0 %v2085
    %2134 = vmatpush.bf16.msra.mxu0 %v2084
    %2135 = vmatmul.bf16.gmra.mxu0 %v2122
    %v2136 = vpop.f32.mrf.mxu0
    %v2137 = vadd.f32 %v2094, %v2136
    %v2138 = vpop.f32.mrf.mxu0
    %v2139 = vadd.f32 %v2099, %v2138
    %2140 = vmatmul.bf16.gmra.mxu0 %v2125
    %v2141 = vpop.f32.mrf.mxu0
    %v2142 = vadd.f32 %v2104, %v2141
    %v2143 = vpop.f32.mrf.mxu0
    %v2144 = vadd.f32 %v2109, %v2143
    %2145 = vdwg.mxu0
    %2147 = vset.pattern.permute.xlu0 0
    %2148 = vperm.xlu0 %2147, %v2137
    %v2149 = vpop.permute.xlu0 %2148
    %2152 = vset.pattern.permute.xlu0 0
    %2153 = vperm.xlu0 %2152, %v2139
    %v2154 = vpop.permute.xlu0 %2153
    %2157 = vset.pattern.permute.xlu0 0
    %2158 = vperm.xlu0 %2157, %v2142
    %v2159 = vpop.permute.xlu0 %2158
    %2162 = vset.pattern.permute.xlu0 0
    %2163 = vperm.xlu0 %2162, %v2144
    %v2164 = vpop.permute.xlu0 %2163
    %2166 = vset.pattern.permute.xlu0 1
    %2167 = vperm.xlu0 %2166, %v2137
    %v2168 = vpop.permute.xlu0 %2167
    %2170 = vset.pattern.permute.xlu0 1
    %2171 = vperm.xlu0 %2170, %v2139
    %v2172 = vpop.permute.xlu0 %2171
    %2174 = vset.pattern.permute.xlu0 1
    %2175 = vperm.xlu0 %2174, %v2142
    %v2176 = vpop.permute.xlu0 %2175
    %2178 = vset.pattern.permute.xlu0 1
    %2179 = vperm.xlu0 %2178, %v2144
    %v2180 = vpop.permute.xlu0 %2179
    %2182 = vset.pattern.permute.xlu0 2
    %2183 = vperm.xlu0 %2182, %v2137
    %v2184 = vpop.permute.xlu0 %2183
    %2186 = vset.pattern.permute.xlu0 2
    %2187 = vperm.xlu0 %2186, %v2139
    %v2188 = vpop.permute.xlu0 %2187
    %2190 = vset.pattern.permute.xlu0 2
    %2191 = vperm.xlu0 %2190, %v2142
    %v2192 = vpop.permute.xlu0 %2191
    %2194 = vset.pattern.permute.xlu0 2
    %2195 = vperm.xlu0 %2194, %v2144
    %v2196 = vpop.permute.xlu0 %2195
    %2198 = vset.pattern.permute.xlu0 3
    %2199 = vperm.xlu0 %2198, %v2137
    %v2200 = vpop.permute.xlu0 %2199
    %2202 = vset.pattern.permute.xlu0 3
    %2203 = vperm.xlu0 %2202, %v2139
    %v2204 = vpop.permute.xlu0 %2203
    %2206 = vset.pattern.permute.xlu0 3
    %2207 = vperm.xlu0 %2206, %v2142
    %v2208 = vpop.permute.xlu0 %2207
    %2210 = vset.pattern.permute.xlu0 3
    %2211 = vperm.xlu0 %2210, %v2144
    %v2212 = vpop.permute.xlu0 %2211
    %s2214 = scalar_lea.vmem %s5, 48
    %v2215 = vld [vmem:[%s2214] sm:$0xf]
    %v2216 = vld [vmem:[%s2214 + $0x4] sm:$0xf]
    %v2217 = vld [vmem:[%s2214 + $0x8] sm:$0xf]
    %v2218 = vld [vmem:[%s2214 + $0xc] sm:$0xf]
    %v2223 = vunpack.c.l.b16 %v2215
    %v2224 = vunpack.c.l.b16 %v2216
    %v2225 = vunpack.c.l.b16 %v2217
    %v2226 = vunpack.c.l.b16 %v2218
    %v2227 = vpack.c.b16 %v2224, %v2223
    %v2228 = vpack.c.b16 %v2226, %v2225
    %v2230 = vsel %vm285, %v2227, 0
    %v2233 = vsel %vm285, %v2228, 0
    %2235 = vmatpush.bf16.msra.mxu0 0
    %2236 = vmatpush.bf16.msra.mxu0 0
    %2237 = vmatpush.bf16.msra.mxu0 0
    %2238 = vmatpush.bf16.msra.mxu0 0
    %2239 = vmatpush.bf16.msra.mxu0 0
    %2240 = vmatpush.bf16.msra.mxu0 0
    %2241 = vmatpush.bf16.msra.mxu0 %v2031
    %2242 = vmatpush.bf16.msra.mxu0 %v2027
    %2243 = vmatmul.bf16.gmra.mxu0 %v2230
    %v2244 = vpop.f32.mrf.mxu0
    %v2245 = vadd.f32 %v2149, %v2244
    %v2246 = vpop.f32.mrf.mxu0
    %v2247 = vadd.f32 %v2154, %v2246
    %2248 = vmatmul.bf16.gmra.mxu0 %v2233
    %v2249 = vpop.f32.mrf.mxu0
    %v2250 = vadd.f32 %v2159, %v2249
    %v2251 = vpop.f32.mrf.mxu0
    %v2252 = vadd.f32 %v2164, %v2251
    %2253 = vdwg.mxu0
    %2254 = vmatpush.bf16.msra.mxu0 0
    %2255 = vmatpush.bf16.msra.mxu0 0
    %2256 = vmatpush.bf16.msra.mxu0 0
    %2257 = vmatpush.bf16.msra.mxu0 0
    %2258 = vmatpush.bf16.msra.mxu0 0
    %2259 = vmatpush.bf16.msra.mxu0 0
    %2260 = vmatpush.bf16.msra.mxu0 %v2032
    %2261 = vmatpush.bf16.msra.mxu0 %v2028
    %2262 = vmatmul.bf16.gmra.mxu0 %v2230
    %v2263 = vpop.f32.mrf.mxu0
    %v2264 = vadd.f32 %v2168, %v2263
    %v2265 = vpop.f32.mrf.mxu0
    %v2266 = vadd.f32 %v2172, %v2265
    %2267 = vmatmul.bf16.gmra.mxu0 %v2233
    %v2268 = vpop.f32.mrf.mxu0
    %v2269 = vadd.f32 %v2176, %v2268
    %v2270 = vpop.f32.mrf.mxu0
    %v2271 = vadd.f32 %v2180, %v2270
    %2272 = vdwg.mxu0
    %2273 = vmatpush.bf16.msra.mxu0 0
    %2274 = vmatpush.bf16.msra.mxu0 0
    %2275 = vmatpush.bf16.msra.mxu0 0
    %2276 = vmatpush.bf16.msra.mxu0 0
    %2277 = vmatpush.bf16.msra.mxu0 0
    %2278 = vmatpush.bf16.msra.mxu0 0
    %2279 = vmatpush.bf16.msra.mxu0 %v2033
    %2280 = vmatpush.bf16.msra.mxu0 %v2029
    %2281 = vmatmul.bf16.gmra.mxu0 %v2230
    %v2282 = vpop.f32.mrf.mxu0
    %v2283 = vadd.f32 %v2184, %v2282
    %v2284 = vpop.f32.mrf.mxu0
    %v2285 = vadd.f32 %v2188, %v2284
    %2286 = vmatmul.bf16.gmra.mxu0 %v2233
    %v2287 = vpop.f32.mrf.mxu0
    %v2288 = vadd.f32 %v2192, %v2287
    %v2289 = vpop.f32.mrf.mxu0
    %v2290 = vadd.f32 %v2196, %v2289
    %2291 = vdwg.mxu0
    %2292 = vmatpush.bf16.msra.mxu0 0
    %2293 = vmatpush.bf16.msra.mxu0 0
    %2294 = vmatpush.bf16.msra.mxu0 0
    %2295 = vmatpush.bf16.msra.mxu0 0
    %2296 = vmatpush.bf16.msra.mxu0 0
    %2297 = vmatpush.bf16.msra.mxu0 0
    %2298 = vmatpush.bf16.msra.mxu0 %v2034
    %2299 = vmatpush.bf16.msra.mxu0 %v2030
    %2300 = vmatmul.bf16.gmra.mxu0 %v2230
    %v2301 = vpop.f32.mrf.mxu0
    %v2302 = vadd.f32 %v2200, %v2301
    %v2303 = vpop.f32.mrf.mxu0
    %v2304 = vadd.f32 %v2204, %v2303
    %2305 = vmatmul.bf16.gmra.mxu0 %v2233
    %v2306 = vpop.f32.mrf.mxu0
    %v2307 = vadd.f32 %v2208, %v2306
    %v2308 = vpop.f32.mrf.mxu0
    %v2309 = vadd.f32 %v2212, %v2308
    %2310 = vdwg.mxu0
    %v2311 = vmax.f32 %v2245, 0.0
    %v2312 = vmax.f32 %v2264, 0.0
    %v2313 = vmax.f32 %v2283, 0.0
    %v2314 = vmax.f32 %v2302, 0.0
    %v2315 = vmax.f32 %v2247, 0.0
    %v2316 = vmax.f32 %v2266, 0.0
    %v2317 = vmax.f32 %v2285, 0.0
    %v2318 = vmax.f32 %v2304, 0.0
    %v2319 = vmax.f32 %v2250, 0.0
    %v2320 = vmax.f32 %v2269, 0.0
    %v2321 = vmax.f32 %v2288, 0.0
    %v2322 = vmax.f32 %v2307, 0.0
    %v2323 = vmax.f32 %v2252, 0.0
    %v2324 = vmax.f32 %v2271, 0.0
    %v2325 = vmax.f32 %v2290, 0.0
    %v2326 = vmax.f32 %v2309, 0.0
    %v2327 = vpack.c.bf16 %v2315, %v2311
    %v2328 = vpack.c.bf16 %v2316, %v2312
    %v2329 = vpack.c.bf16 %v2317, %v2313
    %v2330 = vpack.c.bf16 %v2318, %v2314
    %v2331 = vpack.c.bf16 %v2323, %v2319
    %v2332 = vpack.c.bf16 %v2324, %v2320
    %v2333 = vpack.c.bf16 %v2325, %v2321
    %v2334 = vpack.c.bf16 %v2326, %v2322
    %s2335 = scalar_lea.vmem %s8, 48
    %v2336 = vld [vmem:[%s2335] sm:$0xf]
    %v2337 = vld [vmem:[%s2335 + $0x4] sm:$0xf]
    %v2338 = vld [vmem:[%s2335 + $0x8] sm:$0xf]
    %v2339 = vld [vmem:[%s2335 + $0xc] sm:$0xf]
    %v2344 = vunpack.c.l.b16 %v2336
    %v2345 = vunpack.c.l.b16 %v2337
    %v2346 = vunpack.c.l.b16 %v2338
    %v2347 = vunpack.c.l.b16 %v2339
    %v2348 = vpack.c.b16 %v2345, %v2344
    %v2349 = vpack.c.b16 %v2347, %v2346
    %v2351 = vsel %vm285, %v2348, 0
    %v2354 = vsel %vm285, %v2349, 0
    %2356 = vmatpush.bf16.msra.mxu0 0
    %2357 = vmatpush.bf16.msra.mxu0 0
    %2358 = vmatpush.bf16.msra.mxu0 0
    %2359 = vmatpush.bf16.msra.mxu0 0
    %2360 = vmatpush.bf16.msra.mxu0 0
    %2361 = vmatpush.bf16.msra.mxu0 0
    %2362 = vmatpush.bf16.msra.mxu0 %v2331
    %2363 = vmatpush.bf16.msra.mxu0 %v2327
    %2364 = vmatmul.bf16.gmra.mxu0 %v2351
    %v2365 = vpop.f32.mrf.mxu0
    %v2366 = vadd.f32 0.0, %v2365
    %v2367 = vpop.f32.mrf.mxu0
    %v2368 = vadd.f32 0.0, %v2367
    %2369 = vmatmul.bf16.gmra.mxu0 %v2354
    %v2370 = vpop.f32.mrf.mxu0
    %v2371 = vadd.f32 0.0, %v2370
    %v2372 = vpop.f32.mrf.mxu0
    %v2373 = vadd.f32 0.0, %v2372
    %2374 = vdwg.mxu0
    %2375 = vmatpush.bf16.msra.mxu0 0
    %2376 = vmatpush.bf16.msra.mxu0 0
    %2377 = vmatpush.bf16.msra.mxu0 0
    %2378 = vmatpush.bf16.msra.mxu0 0
    %2379 = vmatpush.bf16.msra.mxu0 0
    %2380 = vmatpush.bf16.msra.mxu0 0
    %2381 = vmatpush.bf16.msra.mxu0 %v2332
    %2382 = vmatpush.bf16.msra.mxu0 %v2328
    %2383 = vmatmul.bf16.gmra.mxu0 %v2351
    %v2384 = vpop.f32.mrf.mxu0
    %v2385 = vadd.f32 0.0, %v2384
    %v2386 = vpop.f32.mrf.mxu0
    %v2387 = vadd.f32 0.0, %v2386
    %2388 = vmatmul.bf16.gmra.mxu0 %v2354
    %v2389 = vpop.f32.mrf.mxu0
    %v2390 = vadd.f32 0.0, %v2389
    %v2391 = vpop.f32.mrf.mxu0
    %v2392 = vadd.f32 0.0, %v2391
    %2393 = vdwg.mxu0
    %2394 = vmatpush.bf16.msra.mxu0 0
    %2395 = vmatpush.bf16.msra.mxu0 0
    %2396 = vmatpush.bf16.msra.mxu0 0
    %2397 = vmatpush.bf16.msra.mxu0 0
    %2398 = vmatpush.bf16.msra.mxu0 0
    %2399 = vmatpush.bf16.msra.mxu0 0
    %2400 = vmatpush.bf16.msra.mxu0 %v2333
    %2401 = vmatpush.bf16.msra.mxu0 %v2329
    %2402 = vmatmul.bf16.gmra.mxu0 %v2351
    %v2403 = vpop.f32.mrf.mxu0
    %v2404 = vadd.f32 0.0, %v2403
    %v2405 = vpop.f32.mrf.mxu0
    %v2406 = vadd.f32 0.0, %v2405
    %2407 = vmatmul.bf16.gmra.mxu0 %v2354
    %v2408 = vpop.f32.mrf.mxu0
    %v2409 = vadd.f32 0.0, %v2408
    %v2410 = vpop.f32.mrf.mxu0
    %v2411 = vadd.f32 0.0, %v2410
    %2412 = vdwg.mxu0
    %2413 = vmatpush.bf16.msra.mxu0 0
    %2414 = vmatpush.bf16.msra.mxu0 0
    %2415 = vmatpush.bf16.msra.mxu0 0
    %2416 = vmatpush.bf16.msra.mxu0 0
    %2417 = vmatpush.bf16.msra.mxu0 0
    %2418 = vmatpush.bf16.msra.mxu0 0
    %2419 = vmatpush.bf16.msra.mxu0 %v2334
    %2420 = vmatpush.bf16.msra.mxu0 %v2330
    %2421 = vmatmul.bf16.gmra.mxu0 %v2351
    %v2422 = vpop.f32.mrf.mxu0
    %v2423 = vadd.f32 0.0, %v2422
    %v2424 = vpop.f32.mrf.mxu0
    %v2425 = vadd.f32 0.0, %v2424
    %2426 = vmatmul.bf16.gmra.mxu0 %v2354
    %v2427 = vpop.f32.mrf.mxu0
    %v2428 = vadd.f32 0.0, %v2427
    %v2429 = vpop.f32.mrf.mxu0
    %v2430 = vadd.f32 0.0, %v2429
    %2431 = vdwg.mxu0
    %v2432 = vadd.f32 %v1873, %v2366
    %v2433 = vadd.f32 %v1874, %v2385
    %v2434 = vadd.f32 %v1875, %v2404
    %v2435 = vadd.f32 %v1876, %v2423
    %v2436 = vadd.f32 %v1877, %v2368
    %v2437 = vadd.f32 %v1878, %v2387
    %v2438 = vadd.f32 %v1879, %v2406
    %v2439 = vadd.f32 %v1880, %v2425
    %v2440 = vadd.f32 %v1881, %v2371
    %v2441 = vadd.f32 %v1882, %v2390
    %v2442 = vadd.f32 %v1883, %v2409
    %v2443 = vadd.f32 %v1884, %v2428
    %v2444 = vadd.f32 %v1885, %v2373
    %v2445 = vadd.f32 %v1886, %v2392
    %v2446 = vadd.f32 %v1887, %v2411
    %v2447 = vadd.f32 %v1888, %v2430
    %v2448 = vld [vmem:[%s9] sm:$0xff]
    %v2449 = vld [vmem:[%s9 + $0x8] sm:$0xff]
    %v2450 = vld [vmem:[%s9 + $0x10] sm:$0xff]
    %v2451 = vld [vmem:[%s9 + $0x18] sm:$0xff]
    %2453 = vset.pattern.permute.xlu0 0
    %2454 = vperm.xlu0 %2453, %v2448
    %v2455 = vpop.permute.xlu0 %2454
    %2458 = vset.pattern.permute.xlu0 0
    %2459 = vperm.xlu0 %2458, %v2449
    %v2460 = vpop.permute.xlu0 %2459
    %2463 = vset.pattern.permute.xlu0 0
    %2464 = vperm.xlu0 %2463, %v2450
    %v2465 = vpop.permute.xlu0 %2464
    %2468 = vset.pattern.permute.xlu0 0
    %2469 = vperm.xlu0 %2468, %v2451
    %v2470 = vpop.permute.xlu0 %2469
    %v2472 = vadd.f32 %v2432, %v2455
    %v2473 = vadd.f32 %v2433, %v2455
    %v2474 = vadd.f32 %v2434, %v2455
    %v2475 = vadd.f32 %v2435, %v2455
    %v2476 = vadd.f32 %v2436, %v2460
    %v2477 = vadd.f32 %v2437, %v2460
    %v2478 = vadd.f32 %v2438, %v2460
    %v2479 = vadd.f32 %v2439, %v2460
    %v2480 = vadd.f32 %v2440, %v2465
    %v2481 = vadd.f32 %v2441, %v2465
    %v2482 = vadd.f32 %v2442, %v2465
    %v2483 = vadd.f32 %v2443, %v2465
    %v2484 = vadd.f32 %v2444, %v2470
    %v2485 = vadd.f32 %v2445, %v2470
    %v2486 = vadd.f32 %v2446, %v2470
    %v2487 = vadd.f32 %v2447, %v2470
    %2488 = vmax.xlane.f32.xlu0 %v2472
    %v2489 = vpop.xlane.xlu0 %2488
    %2490 = vmax.xlane.f32.xlu0 %v2476
    %v2491 = vpop.xlane.xlu0 %2490
    %2492 = vmax.xlane.f32.xlu0 %v2480
    %v2493 = vpop.xlane.xlu0 %2492
    %2494 = vmax.xlane.f32.xlu0 %v2484
    %v2495 = vpop.xlane.xlu0 %2494
    %2496 = vmax.xlane.f32.xlu0 %v2473
    %v2497 = vpop.xlane.xlu0 %2496
    %2498 = vmax.xlane.f32.xlu0 %v2477
    %v2499 = vpop.xlane.xlu0 %2498
    %2500 = vmax.xlane.f32.xlu0 %v2481
    %v2501 = vpop.xlane.xlu0 %2500
    %2502 = vmax.xlane.f32.xlu0 %v2485
    %v2503 = vpop.xlane.xlu0 %2502
    %2504 = vmax.xlane.f32.xlu0 %v2474
    %v2505 = vpop.xlane.xlu0 %2504
    %2506 = vmax.xlane.f32.xlu0 %v2478
    %v2507 = vpop.xlane.xlu0 %2506
    %2508 = vmax.xlane.f32.xlu0 %v2482
    %v2509 = vpop.xlane.xlu0 %2508
    %2510 = vmax.xlane.f32.xlu0 %v2486
    %v2511 = vpop.xlane.xlu0 %2510
    %2512 = vmax.xlane.f32.xlu0 %v2475
    %v2513 = vpop.xlane.xlu0 %2512
    %2514 = vmax.xlane.f32.xlu0 %v2479
    %v2515 = vpop.xlane.xlu0 %2514
    %2516 = vmax.xlane.f32.xlu0 %v2483
    %v2517 = vpop.xlane.xlu0 %2516
    %2518 = vmax.xlane.f32.xlu0 %v2487
    %v2519 = vpop.xlane.xlu0 %2518
    %v2520 = vsel %vm424, %v2489, %v2497
    %v2521 = vsel %vm424, %v2491, %v2499
    %v2522 = vsel %vm424, %v2493, %v2501
    %v2523 = vsel %vm424, %v2495, %v2503
    %v2524 = vsel %vm429, %v2520, %v2505
    %v2525 = vsel %vm429, %v2521, %v2507
    %v2526 = vsel %vm429, %v2522, %v2509
    %v2527 = vsel %vm429, %v2523, %v2511
    %v2528 = vsel %vm81, %v2524, %v2513
    %v2529 = vsel %vm81, %v2525, %v2515
    %v2530 = vsel %vm81, %v2526, %v2517
    %v2531 = vsel %vm81, %v2527, %v2519
    %2532 = vxpose.xlu0.b32.start [1/16] %v2528, 128
    %2533 = vxpose.xlu0.b32.cont [2/16] %v2529, 128
    %2534 = vxpose.xlu0.b32.cont [3/16] %v2530, 128
    %2535 = vxpose.xlu0.b32.cont [4/16] %v2531, 128
    %2536 = vxpose.xlu0.b32.cont [5/16] 0.0, 128
    %2537 = vxpose.xlu0.b32.cont [6/16] 0.0, 128
    %2538 = vxpose.xlu0.b32.cont [7/16] 0.0, 128
    %2539 = vxpose.xlu0.b32.cont [8/16] 0.0, 128
    %2540 = vxpose.xlu0.b32.cont [9/16] 0.0, 128
    %2541 = vxpose.xlu0.b32.cont [10/16] 0.0, 128
    %2542 = vxpose.xlu0.b32.cont [11/16] 0.0, 128
    %2543 = vxpose.xlu0.b32.cont [12/16] 0.0, 128
    %2544 = vxpose.xlu0.b32.cont [13/16] 0.0, 128
    %2545 = vxpose.xlu0.b32.cont [14/16] 0.0, 128
    %2546 = vxpose.xlu0.b32.cont [15/16] 0.0, 128
    %2547 = vxpose.xlu0.b32.end [16/16] 0.0, 128
    %v2548 = vpop.trf.xlu0
    %v2549 = vpop.trf.xlu0
    %v2550 = vpop.trf.xlu0
    %v2551 = vpop.trf.xlu0
    %v2552 = vpop.trf.xlu0
    %v2553 = vpop.trf.xlu0
    %v2554 = vpop.trf.xlu0
    %v2555 = vpop.trf.xlu0
    %v2556 = vpop.trf.xlu0
    %v2557 = vpop.trf.xlu0
    %v2558 = vpop.trf.xlu0
    %v2559 = vpop.trf.xlu0
    %v2560 = vpop.trf.xlu0
    %v2561 = vpop.trf.xlu0
    %v2562 = vpop.trf.xlu0
    %v2563 = vpop.trf.xlu0
    %vm2564 = vcmask 257024
    %2565 = vst.msk [vmem:[#allocation2] sm:$0xf] %vm2564, %v2548
    %v2566 = vpack.c.bf16 %v2476, %v2472
    %v2567 = vpack.c.bf16 %v2484, %v2480
    %v2568 = vpack.c.bf16 %v2477, %v2473
    %v2569 = vpack.c.bf16 %v2485, %v2481
    %v2570 = vpack.c.bf16 %v2478, %v2474
    %v2571 = vpack.c.bf16 %v2486, %v2482
    %v2572 = vpack.c.bf16 %v2479, %v2475
    %v2573 = vpack.c.bf16 %v2487, %v2483
    %v2574 = vld [vmem:[%s10] sm:$0xf]
    %v2575 = vld [vmem:[%s10 + $0x4] sm:$0xf]
    %v2576 = vld [vmem:[%s10 + $0x8] sm:$0xf]
    %v2577 = vld [vmem:[%s10 + $0xc] sm:$0xf]
    %v2578 = vld [vmem:[%s10 + $0x10] sm:$0xf]
    %v2579 = vld [vmem:[%s10 + $0x14] sm:$0xf]
    %v2580 = vld [vmem:[%s10 + $0x18] sm:$0xf]
    %v2581 = vld [vmem:[%s10 + $0x1c] sm:$0xf]
    %v2582 = vld [vmem:[%s10 + $0x20] sm:$0xf]
    %v2583 = vld [vmem:[%s10 + $0x24] sm:$0xf]
    %v2584 = vld [vmem:[%s10 + $0x28] sm:$0xf]
    %v2585 = vld [vmem:[%s10 + $0x2c] sm:$0xf]
    %v2586 = vld [vmem:[%s10 + $0x30] sm:$0xf]
    %v2587 = vld [vmem:[%s10 + $0x34] sm:$0xf]
    %v2588 = vld [vmem:[%s10 + $0x38] sm:$0xf]
    %v2589 = vld [vmem:[%s10 + $0x3c] sm:$0xf]
    %v2590 = vld [vmem:[%s11] sm:$0x1]
    %v2592 = vperm.slane %v2590, 0
    %v2610 = vunpack.c.l.b16 %v2574
    %v2611 = vunpack.c.l.b16 %v2575
    %v2612 = vunpack.c.l.b16 %v2576
    %v2613 = vunpack.c.l.b16 %v2577
    %v2614 = vunpack.c.l.b16 %v2578
    %v2615 = vunpack.c.l.b16 %v2579
    %v2616 = vunpack.c.l.b16 %v2580
    %v2617 = vunpack.c.l.b16 %v2581
    %v2618 = vunpack.c.l.b16 %v2582
    %v2619 = vunpack.c.l.b16 %v2583
    %v2620 = vunpack.c.l.b16 %v2584
    %v2621 = vunpack.c.l.b16 %v2585
    %v2622 = vunpack.c.l.b16 %v2586
    %v2623 = vunpack.c.l.b16 %v2587
    %v2624 = vunpack.c.l.b16 %v2588
    %v2625 = vunpack.c.l.b16 %v2589
    %v2626 = vpack.c.b16 %v2611, %v2610
    %v2627 = vpack.c.b16 %v2613, %v2612
    %v2628 = vpack.c.b16 %v2615, %v2614
    %v2629 = vpack.c.b16 %v2617, %v2616
    %v2630 = vpack.c.b16 %v2619, %v2618
    %v2631 = vpack.c.b16 %v2621, %v2620
    %v2632 = vpack.c.b16 %v2623, %v2622
    %v2633 = vpack.c.b16 %v2625, %v2624
    %2642 = vmatpush.bf16.msra.mxu0 %v2633
    %2643 = vmatpush.bf16.msra.mxu0 %v2632
    %2644 = vmatpush.bf16.msra.mxu0 %v2631
    %2645 = vmatpush.bf16.msra.mxu0 %v2630
    %2646 = vmatpush.bf16.msra.mxu0 %v2629
    %2647 = vmatpush.bf16.msra.mxu0 %v2628
    %2648 = vmatpush.bf16.msra.mxu0 %v2627
    %2649 = vmatpush.bf16.msra.mxu0 %v2626
    %2650 = vmatmul.bf16.gmra.mxu0 %v2566
    %v2651 = vpop.f32.mrf.mxu0
    %v2652 = vadd.f32 %v2592, %v2651
    %v2653 = vpop.f32.mrf.mxu0
    %v2654 = vadd.f32 %v2592, %v2653
    %2655 = vmatmul.bf16.gmra.mxu0 %v2567
    %v2656 = vpop.f32.mrf.mxu0
    %v2657 = vadd.f32 %v2592, %v2656
    %v2658 = vpop.f32.mrf.mxu0
    %v2659 = vadd.f32 %v2592, %v2658
    %2660 = vmatmul.bf16.gmra.mxu0 %v2568
    %v2661 = vpop.f32.mrf.mxu0
    %v2662 = vadd.f32 %v2592, %v2661
    %v2663 = vpop.f32.mrf.mxu0
    %v2664 = vadd.f32 %v2592, %v2663
    %2665 = vmatmul.bf16.gmra.mxu0 %v2569
    %v2666 = vpop.f32.mrf.mxu0
    %v2667 = vadd.f32 %v2592, %v2666
    %v2668 = vpop.f32.mrf.mxu0
    %v2669 = vadd.f32 %v2592, %v2668
    %2670 = vmatmul.bf16.gmra.mxu0 %v2570
    %v2671 = vpop.f32.mrf.mxu0
    %v2672 = vadd.f32 %v2592, %v2671
    %v2673 = vpop.f32.mrf.mxu0
    %v2674 = vadd.f32 %v2592, %v2673
    %2675 = vmatmul.bf16.gmra.mxu0 %v2571
    %v2676 = vpop.f32.mrf.mxu0
    %v2677 = vadd.f32 %v2592, %v2676
    %v2678 = vpop.f32.mrf.mxu0
    %v2679 = vadd.f32 %v2592, %v2678
    %2680 = vmatmul.bf16.gmra.mxu0 %v2572
    %v2681 = vpop.f32.mrf.mxu0
    %v2682 = vadd.f32 %v2592, %v2681
    %v2683 = vpop.f32.mrf.mxu0
    %v2684 = vadd.f32 %v2592, %v2683
    %2685 = vmatmul.bf16.gmra.mxu0 %v2573
    %v2686 = vpop.f32.mrf.mxu0
    %v2687 = vadd.f32 %v2592, %v2686
    %v2688 = vpop.f32.mrf.mxu0
    %v2689 = vadd.f32 %v2592, %v2688
    %2690 = vdwg.mxu0
    %2691 = vst [vmem:[#allocation4] sm:$0xff] %v2652
    %2692 = vst [vmem:[#allocation4 + $0x8] sm:$0xff] %v2654
    %2693 = vst [vmem:[#allocation4 + $0x10] sm:$0xff] %v2657
    %2694 = vst [vmem:[#allocation4 + $0x18] sm:$0xff] %v2659
    %s2695 = scalar_lea.vmem [#allocation4], 32
    %2696 = vst [vmem:[%s2695] sm:$0xff] %v2662
    %2697 = vst [vmem:[%s2695 + $0x8] sm:$0xff] %v2664
    %2698 = vst [vmem:[%s2695 + $0x10] sm:$0xff] %v2667
    %2699 = vst [vmem:[%s2695 + $0x18] sm:$0xff] %v2669
    %s2700 = scalar_lea.vmem [#allocation4], 64
    %2701 = vst [vmem:[%s2700] sm:$0xff] %v2672
    %2702 = vst [vmem:[%s2700 + $0x8] sm:$0xff] %v2674
    %2703 = vst [vmem:[%s2700 + $0x10] sm:$0xff] %v2677
    %2704 = vst [vmem:[%s2700 + $0x18] sm:$0xff] %v2679
    %s2705 = scalar_lea.vmem [#allocation4], 96
    %2706 = vst [vmem:[%s2705] sm:$0xff] %v2682
    %2707 = vst [vmem:[%s2705 + $0x8] sm:$0xff] %v2684
    %2708 = vst [vmem:[%s2705 + $0x10] sm:$0xff] %v2687
    %2709 = vst [vmem:[%s2705 + $0x18] sm:$0xff] %v2689
    // Predicated region
    $region50: #{tpu_custom_call.1} parent=1 // pred_check
      _
    $region51: #{tpu_custom_call.1} parent=1 // pred_check_branch
      %2711 = sbr.rel (0) target = $region53
    $region52: #{tpu_custom_call.1} parent=1 // pred_region
      %2713 = vsyncadd [#allocation3], 0
      %s2715 = sshll.u32 [#allocation2], 4
      %s2716 = int_to_ptr.vmem [resolvable:$true] %s2715
      %s2717 = sshll.u32 %s12, 4
      %s2718 = int_to_ptr.hbm [resolvable:$true] %s2717
      %2720 = dma.vmem_to_hbm [thread:$0]  %s2716, 64, %s2718, [#allocation3]
    $region53: #{tpu_custom_call.1} parent=1 // pred_fallthru
      _
    // Predicated region
    $region54: #{tpu_custom_call.1} parent=1 // pred_check
      _
    $region55: #{tpu_custom_call.1} parent=1 // pred_check_branch
      %2722 = sbr.rel (0) target = $region57
    $region56: #{tpu_custom_call.1} parent=1 // pred_region
      %2724 = vsyncadd [#allocation5], 0
      %s2725 = sshll.u32 [#allocation4], 4
      %s2726 = int_to_ptr.vmem [resolvable:$true] %s2725
      %s2727 = sshll.u32 %s13, 4
      %s2728 = int_to_ptr.hbm [resolvable:$true] %s2727
      %2733 = dma.vmem_to_hbm [thread:$0]  %s2726, 2048, %s2728, [#allocation5], 128, 128, 8
    $region57: #{tpu_custom_call.1} parent=1 // pred_fallthru
      _
    // Predicated region
    $region58: #{tpu_custom_call.1} parent=1 // pred_check
      _
    $region59: #{tpu_custom_call.1} parent=1 // pred_check_branch
      %2735 = sbr.rel (0) target = $region61
    $region60: #{tpu_custom_call.1} parent=1 // pred_region
      %2737 = dma.done [#allocation3], 64
    $region61: #{tpu_custom_call.1} parent=1 // pred_fallthru
      _
    // Predicated region
    $region62: #{tpu_custom_call.1} parent=1 // pred_check
      _
    $region63: #{tpu_custom_call.1} parent=1 // pred_check_branch
      %2739 = sbr.rel (0) target = $region65
    $region64: #{tpu_custom_call.1} parent=1 // pred_region
      %2741 = dma.done [#allocation5], 2048
    $region65: #{tpu_custom_call.1} parent=1 // pred_fallthru
      _
    %2742 = vsyncpa [#allocation3], 1
    %2743 = vsyncpa [#allocation5], 1

</llo_original>
